<compile_context>
chip_gen: v7x
topology: tpu7x:2x2x1
jax: 0.10.0
libtpu: 0.0.40
codegen_flags: <defaults>
</compile_context>

<pallas_src>
import functools

import jax
import jax.numpy as jnp
import numpy as np
from jax import lax
from jax.experimental import pallas as pl
from jax.experimental.pallas import tpu as pltpu

_BIG = 3.0e38  # < f32 max; marks removed / padded distance entries.


# --------------------------------------------------------------------------
# Stage 1 kernel: per-point mean k-NN distance ("value")
# --------------------------------------------------------------------------
def _knn_value_kernel(q_ref, k_ref, o_ref, *, k: int, tk: int, exact_ties: bool):
    """Mean distance from each query point to its k nearest (non-self) points.

    q_ref: (Bb, TQ, D) query tile       (slice of the point cloud)
    k_ref: (Bb, N,  D) full key set     (whole cloud for these Bb batches)
    o_ref: (Bb, 1, TQ) lane-dense per-query output rows
    """
    qi = pl.program_id(1)
    bb, tq, d_dim = q_ref.shape
    n = k_ref.shape[1]
    n_chunks = n // tk
    kp_pad = ((k + 7) // 8) * 8          # sublane-aligned running-best buffer

    rows = lax.broadcasted_iota(jnp.int32, (kp_pad + tk, 1), 0)       # (KP+TK,1)
    q_ids = qi * tq + lax.broadcasted_iota(jnp.int32, (1, tq), 1)     # (1, TQ)
    ones_row = jnp.ones((1, d_dim), jnp.float32)

    for bi in range(bb):                 # static small unroll (batch folding)
        q = q_ref[bi].astype(jnp.float32)                             # (TQ, D)
        # (1, TQ) query norms via a tiny MXU mat-vec: keeps queries on lanes,
        # avoids an explicit transpose.
        sq_q = lax.dot_general(ones_row, q * q, (((1,), (1,)), ((), ())),
                               preferred_element_type=jnp.float32)    # (1, TQ)

        def merge_chunk(c, best):
            # ---- distances for one TK-key chunk (keys on sublanes) ----
            start = pl.multiple_of(c * tk, tk)
            kp = k_ref[bi, pl.ds(start, tk), :].astype(jnp.float32)   # (TK, D)
            gram = lax.dot_general(kp, q, (((1,), (1,)), ((), ())),
                                   preferred_element_type=jnp.float32)  # (TK,TQ)
            sq_k = jnp.sum(kp * kp, axis=-1, keepdims=True)           # (TK, 1)
            dist = sq_k - 2.0 * gram + sq_q                           # (TK, TQ)
            # Mask the self-distance (global diagonal) so selection needs only
            # k passes (no "drop the smallest" extra pass).
            key_ids = c * tk + lax.broadcasted_iota(jnp.int32, (tk, 1), 0)
            d = jnp.where(key_ids == q_ids, _BIG, dist)
            # ---- merge into the running k-best (streaming top-k) ----
            cat = jnp.concatenate([best, d], axis=0)                  # (KP+TK,TQ)
            new_rows = []
            for t in range(k):
                mn = jnp.min(cat, axis=0, keepdims=True)              # (1, TQ)
                new_rows.append(mn)
                if t + 1 < k:
                    if exact_ties:
                        # torch.topk multiset semantics: remove exactly one
                        # (lowest-index) occurrence; one shared compare.
                        eq = cat == mn
                        first = jnp.min(jnp.where(eq, rows, kp_pad + tk),
                                        axis=0, keepdims=True)
                        cat = jnp.where(eq & (rows == first), _BIG, cat)
                    else:
                        # Fast path: one reduce + one compare/select per pass.
                        # Exact duplicate points are counted once.
                        cat = jnp.where(cat == mn, _BIG, cat)
            if kp_pad > k:
                new_rows.append(jnp.full((kp_pad - k, tq), _BIG, jnp.float32))
            return jnp.concatenate(new_rows, axis=0)                  # (KP, TQ)

        best0 = jnp.full((kp_pad, tq), _BIG, jnp.float32)
        if n_chunks == 1:
            best = merge_chunk(0, best0)
        else:
            best = lax.fori_loop(0, n_chunks, merge_chunk, best0,
                                 unroll=(n_chunks <= 8))
        value = jnp.sum(best[:k, :], axis=0, keepdims=True) * (1.0 / k)  # (1,TQ)
        o_ref[bi] = value.astype(o_ref.dtype)


# --------------------------------------------------------------------------
# Tile / budget heuristics
# --------------------------------------------------------------------------
def _round_up(x, m):
    return ((x + m - 1) // m) * m


def _vmem_capacity_bytes():
    try:
        info = pltpu.get_tpu_info()
        cap = getattr(info, "vmem_capacity_bytes", None)
        if cap:
            return int(cap)
    except Exception:
        pass
    return 64 * 1024 * 1024  # conservative (v7x per-TensorCore)


def _pick_tq(n, cap):
    """Largest lane-dense (multiple-of-128) divisor of n that is <= cap."""
    if n <= cap:
        return n
    t = (min(n, cap) // 128) * 128
    while t >= 128:
        if n % t == 0:
            return t
        t -= 128
    return n  # no lane-dense divisor: fall back to whole rows


def _pick_tk(n, cap):
    """Largest sublane-aligned (multiple-of-8) divisor of n that is <= cap."""
    if n <= cap:
        return n
    t = (min(n, cap) // 8) * 8
    while t >= 8:
        if n % t == 0:
            return t
        t -= 8
    return n  # keep a single chunk if no aligned divisor exists


def _pick_bb(b, n):
    """Fold several batch elements per step when clouds are small."""
    if n > 512:
        return 1
    cap = max(1, min(b, 16, 4096 // max(n, 1)))
    for t in range(cap, 0, -1):
        if b % t == 0:
            return t
    return 1


def _vmem_budget_bytes(bb, n, tq, tk, k, key_bufs):
    """Corrected per-step VMEM budget (D=3 last dim is lane-padded to 128)."""
    lane = 128
    kp_pad = ((k + 7) // 8) * 8
    key_bytes = key_bufs * bb * _round_up(n, 8) * lane * 4
    q_bytes = 2 * bb * _round_up(tq, 8) * lane * 4
    out_bytes = 2 * bb * 8 * _round_up(tq, 128) * 4
    work_bytes = (4 * (kp_pad + tk) + 2 * kp_pad) * _round_up(tq, 128) * 4
    return key_bytes + q_bytes + out_bytes + work_bytes


def _key_block_spec(shape, index_map, single_buffer):
    """Key-set BlockSpec; single-buffered when supported (constant index_map)."""
    if single_buffer and hasattr(pl, "Buffered"):
        try:
            return pl.BlockSpec(shape, index_map, pipeline_mode=pl.Buffered(1))
        except TypeError:
            pass
    return pl.BlockSpec(shape, index_map)


# --------------------------------------------------------------------------
# Stage 1 wrapper
# --------------------------------------------------------------------------
def knn_value(pc, *, k: int = 5, tq=None, tk=None, bb=None,
              exact_ties: bool = False, single_buffer_keys: bool = True):
    """(B, N, D) point cloud -> (B, N) mean k-NN distance per point."""
    B, N, D = pc.shape
    if not (1 <= k <= N - 1):
        raise ValueError(f"k={k} must satisfy 1 <= k <= N-1 (N={N})")

    vmem_cap = _vmem_capacity_bytes()
    cap_q = 256 if vmem_cap <= (64 << 20) else 512  # v7x (64 MiB) vs v5e/v6e
    if tq is None:
        tq = _pick_tq(N, cap_q)
    if tk is None:
        tk = _pick_tk(N, 512)
    if bb is None:
        bb = _pick_bb(B, N)
    if N % tq != 0:
        raise ValueError(f"N={N} must be divisible by the query tile tq={tq}")
    if N % tk != 0:
        raise ValueError(f"N={N} must be divisible by the key chunk tk={tk}")
    if B % bb != 0:
        raise ValueError(f"B={B} must be divisible by the batch fold bb={bb}")
    # TODO(synk): pad/mask ragged N (non-divisible tiles) with _BIG, not zeros.

    key_bufs = 1 if single_buffer_keys else 2
    budget = _vmem_budget_bytes(bb, N, tq, tk, k, key_bufs)
    vmem_limit = int(min(max(2 * budget, 32 << 20), int(0.9 * vmem_cap)))
    vmem_limit = max(vmem_limit, budget + (4 << 20))

    kernel = functools.partial(_knn_value_kernel, k=k, tk=tk,
                               exact_ties=exact_ties)

    def _run(single_buffer):
        call = pl.pallas_call(
            kernel,
            out_shape=jax.ShapeDtypeStruct((B, 1, N), jnp.float32),
            grid=(B // bb, N // tq),
            in_specs=[
                pl.BlockSpec((bb, tq, D), lambda b, qi: (b, qi, 0)),    # queries
                _key_block_spec((bb, N, D), lambda b, qi: (b, 0, 0),
                                single_buffer),                          # keys
            ],
            out_specs=pl.BlockSpec((bb, 1, tq), lambda b, qi: (b, 0, qi)),
            compiler_params=pltpu.CompilerParams(
                dimension_semantics=("parallel", "parallel"),
                vmem_limit_bytes=vmem_limit,
            ),
        )
        return call(pc, pc)

    if single_buffer_keys:
        try:
            value = _run(True)
        except Exception:
            # Older/newer JAX may not accept Buffered(1); plain double buffer.
            value = _run(False)
    else:
        value = _run(False)
    return value[:, 0, :]  # (B, N)


# --------------------------------------------------------------------------
# Full KNNDist.forward
# --------------------------------------------------------------------------
def knn_dist(pc, weights=None, batch_avg=True, *, k: int = 5, alpha: float = 1.05,
             tq=None, tk=None, bb=None, exact_ties: bool = False):
    """Pallas implementation of KNNDist.forward (pc is (B, N, 3), pre-transpose)."""
    B, N, _ = pc.shape
    value = knn_value(pc, k=k, tq=tq, tk=tk, bb=bb, exact_ties=exact_ties)  # (B, N)
    # Tiny second pass over (B, N): threshold needs all N values per batch.
    mean = jnp.mean(value, axis=-1)
    std = jnp.std(value, axis=-1, ddof=1)      # torch.std default is unbiased
    threshold = mean + jnp.float32(alpha) * std
    weight_mask = (value > threshold[:, None]).astype(jnp.float32)
    loss = jnp.mean(value * weight_mask, axis=1)                            # (B,)
    if weights is None:
        weights = jnp.ones((B,), jnp.float32)
    loss = loss * weights.astype(jnp.float32)
    if batch_avg:
        return jnp.mean(loss)
    return loss


def knn_dist_ref(pc, weights=None, batch_avg=True, *, k: int = 5, alpha: float = 1.05):
    """Pure-JAX reference mirroring the PyTorch code."""
    pc = pc.astype(jnp.float32)
    B, N, _ = pc.shape
    inner = -2.0 * jnp.einsum("bnd,bmd->bnm", pc, pc)
    xx = jnp.sum(pc ** 2, axis=-1)                          # (B, N)
    dist = xx[:, :, None] + inner + xx[:, None, :]          # (B, N, N)
    sorted_d = jnp.sort(dist, axis=-1)                      # ascending
    value = jnp.mean(sorted_d[..., 1:k + 1], axis=-1)       # (B, N)
    mean = jnp.mean(value, axis=-1)
    std = jnp.std(value, axis=-1, ddof=1)
    threshold = mean + alpha * std
    mask = (value > threshold[:, None]).astype(jnp.float32)
    loss = jnp.mean(value * mask, axis=1)
    if weights is None:
        weights = jnp.ones((B,), jnp.float32)
    loss = loss * weights.astype(jnp.float32)
    if batch_avg:
        return jnp.mean(loss)
    return loss


if __name__ == "__main__":
    key = jax.random.PRNGKey(0)

    # Case 1: small cloud — batch-folded, single key chunk, whole-cloud tile.
    B, N, D = 2, 128, 3
    pc = jax.random.normal(key, (B, N, D), dtype=jnp.float32)
    w = jnp.array([0.5, 2.0], jnp.float32)

    ref_scalar = np.asarray(knn_dist_ref(pc))
    ref_vec = np.asarray(knn_dist_ref(pc, weights=w, batch_avg=False))

    out = jax.block_until_ready(knn_dist(pc))
    np.testing.assert_allclose(np.asarray(out), ref_scalar, rtol=1e-4, atol=1e-5)

    # Chunked key axis (tk < N) + exact torch.topk tie semantics.
    out_chunked = jax.block_until_ready(knn_dist(pc, tk=32, exact_ties=True))
    np.testing.assert_allclose(np.asarray(out_chunked), ref_scalar,
                               rtol=1e-4, atol=1e-5)

    # Per-batch losses with weights, no batch averaging.
    out_vec = jax.block_until_ready(knn_dist(pc, weights=w, batch_avg=False))
    np.testing.assert_allclose(np.asarray(out_vec), ref_vec, rtol=1e-4, atol=1e-5)

    # Case 2: larger cloud — exercises query tiling (qi > 0 diagonal masking)
    # and the fori_loop key-chunk merge.
    B2, N2 = 2, 256
    pc2 = jax.random.normal(jax.random.PRNGKey(1), (B2, N2, D), dtype=jnp.float32)
    ref2 = np.asarray(knn_dist_ref(pc2))
    out2 = jax.block_until_ready(knn_dist(pc2, tq=128, tk=64))
    np.testing.assert_allclose(np.asarray(out2), ref2, rtol=1e-4, atol=1e-5)

    print("KERNEL_OK")
</pallas_src>

<mosaic_0001>
module attributes {stable_mosaic.version = 11 : i64} {
  func.func @_knn_value_kernel(%arg0: i32, %arg1: i32, %arg2: memref<2x128x3xf32, #tpu.memory_space<vmem>>, %arg3: memref<2x128x3xf32, #tpu.memory_space<vmem>>, %arg4: memref<2x1x128xf32, #tpu.memory_space<vmem>>) attributes {dimension_semantics = [#tpu.dimension_semantics<parallel>, #tpu.dimension_semantics<parallel>], iteration_bounds = array<i64: 1, 1>, scalar_prefetch = 0 : i64, scratch_operands = 0 : i64, tpu.core_type = #tpu.core_type<tc>, window_params = [{transform_indices = @transform_0, window_bounds = array<i64: 2, 128, 3>}, {pipeline_mode = #tpu.pipeline_mode<synchronous>, transform_indices = @transform_1, window_bounds = array<i64: 2, 128, 3>}, {transform_indices = @transform_2, window_bounds = array<i64: 2, 1, 128>}]} {
    %c128_i32 = arith.constant 128 : i32
    %0 = arith.muli %arg1, %c128_i32 : i32
    %1 = tpu.iota {dimensions = array<i32: 1>} : vector<1x128xi32>
    %2 = vector.broadcast %0 : i32 to vector<1x128xi32>
    %3 = arith.addi %2, %1 : vector<1x128xi32>
    %cst = arith.constant 1.000000e+00 : f32
    %4 = vector.broadcast %cst : f32 to vector<1x3xf32>
    %c0 = arith.constant 0 : index
    %c0_0 = arith.constant 0 : index
    %c0_1 = arith.constant 0 : index
    %5 = vector.load %arg2[%c0, %c0_0, %c0_1] : memref<2x128x3xf32, #tpu.memory_space<vmem>>, vector<1x128x3xf32>
    %6 = vector.shape_cast %5 : vector<1x128x3xf32> to vector<128x3xf32>
    %7 = arith.mulf %6, %6 : vector<128x3xf32>
    %cst_2 = arith.constant dense<0.000000e+00> : vector<1x128xf32>
    %8 = tpu.matmul %4, %7, %cst_2 {dimension_numbers = #tpu.dot_dimension_numbers<[1], [1], [0], [0], [0, 0, 1, 0], [], []>} : vector<1x3xf32>, vector<128x3xf32>, vector<1x128xf32> -> vector<1x128xf32>
    %cst_3 = arith.constant 3.000000e+38 : f32
    %9 = vector.broadcast %cst_3 : f32 to vector<8x128xf32>
    %c0_i32 = arith.constant 0 : i32
    %10 = tpu.assume_multiple %c0_i32, 128 : i32
    %c0_4 = arith.constant 0 : index
    %11 = arith.index_cast %10 : i32 to index
    %c0_5 = arith.constant 0 : index
    %12 = vector.load %arg3[%c0_4, %11, %c0_5] : memref<2x128x3xf32, #tpu.memory_space<vmem>>, vector<1x128x3xf32>
    %13 = vector.shape_cast %12 : vector<1x128x3xf32> to vector<128x3xf32>
    %cst_6 = arith.constant dense<0.000000e+00> : vector<128x128xf32>
    %14 = tpu.matmul %13, %6, %cst_6 {dimension_numbers = #tpu.dot_dimension_numbers<[1], [1], [0], [0], [0, 0, 1, 0], [], []>} : vector<128x3xf32>, vector<128x3xf32>, vector<128x128xf32> -> vector<128x128xf32>
    %15 = arith.mulf %13, %13 : vector<128x3xf32>
    %cst_7 = arith.constant dense<0.000000e+00> : vector<128xf32>
    %16 = vector.multi_reduction <add>, %15, %cst_7 [1] : vector<128x3xf32> to vector<128xf32>
    %17 = vector.shape_cast %16 : vector<128xf32> to vector<128x1xf32>
    %cst_8 = arith.constant 2.000000e+00 : f32
    %18 = vector.broadcast %cst_8 : f32 to vector<128x128xf32>
    %19 = arith.mulf %18, %14 : vector<128x128xf32>
    %20 = vector.broadcast %17 : vector<128x1xf32> to vector<128x128xf32>
    %21 = arith.subf %20, %19 : vector<128x128xf32>
    %22 = vector.broadcast %8 : vector<1x128xf32> to vector<128x128xf32>
    %23 = arith.addf %21, %22 : vector<128x128xf32>
    %24 = tpu.iota {dimensions = array<i32: 0>} : vector<128x1xi32>
    %c0_i32_9 = arith.constant 0 : i32
    %25 = vector.broadcast %c0_i32_9 : i32 to vector<128x1xi32>
    %26 = arith.addi %25, %24 : vector<128x1xi32>
    %27 = vector.broadcast %26 : vector<128x1xi32> to vector<128x128xi32>
    %28 = vector.broadcast %3 : vector<1x128xi32> to vector<128x128xi32>
    %29 = arith.cmpi eq, %27, %28 : vector<128x128xi32>
    %cst_10 = arith.constant 3.000000e+38 : f32
    %30 = vector.broadcast %cst_10 : f32 to vector<128x128xf32>
    %31 = arith.select %29, %30, %23 : vector<128x128xi1>, vector<128x128xf32>
    %32 = tpu.concatenate %9, %31 in 0 : vector<8x128xf32>, vector<128x128xf32> -> vector<136x128xf32>
    %cst_11 = arith.constant dense<0x7F800000> : vector<128xf32>
    %33 = vector.multi_reduction <minimumf>, %32, %cst_11 [0] : vector<136x128xf32> to vector<128xf32>
    %34 = vector.shape_cast %33 : vector<128xf32> to vector<1x128xf32>
    %35 = vector.broadcast %34 : vector<1x128xf32> to vector<136x128xf32>
    %36 = arith.cmpf oeq, %32, %35 : vector<136x128xf32>
    %cst_12 = arith.constant 3.000000e+38 : f32
    %37 = vector.broadcast %cst_12 : f32 to vector<136x128xf32>
    %38 = arith.select %36, %37, %32 : vector<136x128xi1>, vector<136x128xf32>
    %cst_13 = arith.constant dense<0x7F800000> : vector<128xf32>
    %39 = vector.multi_reduction <minimumf>, %38, %cst_13 [0] : vector<136x128xf32> to vector<128xf32>
    %40 = vector.shape_cast %39 : vector<128xf32> to vector<1x128xf32>
    %41 = vector.broadcast %40 : vector<1x128xf32> to vector<136x128xf32>
    %42 = arith.cmpf oeq, %38, %41 : vector<136x128xf32>
    %cst_14 = arith.constant 3.000000e+38 : f32
    %43 = vector.broadcast %cst_14 : f32 to vector<136x128xf32>
    %44 = arith.select %42, %43, %38 : vector<136x128xi1>, vector<136x128xf32>
    %cst_15 = arith.constant dense<0x7F800000> : vector<128xf32>
    %45 = vector.multi_reduction <minimumf>, %44, %cst_15 [0] : vector<136x128xf32> to vector<128xf32>
    %46 = vector.shape_cast %45 : vector<128xf32> to vector<1x128xf32>
    %47 = vector.broadcast %46 : vector<1x128xf32> to vector<136x128xf32>
    %48 = arith.cmpf oeq, %44, %47 : vector<136x128xf32>
    %cst_16 = arith.constant 3.000000e+38 : f32
    %49 = vector.broadcast %cst_16 : f32 to vector<136x128xf32>
    %50 = arith.select %48, %49, %44 : vector<136x128xi1>, vector<136x128xf32>
    %cst_17 = arith.constant dense<0x7F800000> : vector<128xf32>
    %51 = vector.multi_reduction <minimumf>, %50, %cst_17 [0] : vector<136x128xf32> to vector<128xf32>
    %52 = vector.shape_cast %51 : vector<128xf32> to vector<1x128xf32>
    %53 = vector.broadcast %52 : vector<1x128xf32> to vector<136x128xf32>
    %54 = arith.cmpf oeq, %50, %53 : vector<136x128xf32>
    %cst_18 = arith.constant 3.000000e+38 : f32
    %55 = vector.broadcast %cst_18 : f32 to vector<136x128xf32>
    %56 = arith.select %54, %55, %50 : vector<136x128xi1>, vector<136x128xf32>
    %cst_19 = arith.constant dense<0x7F800000> : vector<128xf32>
    %57 = vector.multi_reduction <minimumf>, %56, %cst_19 [0] : vector<136x128xf32> to vector<128xf32>
    %58 = vector.shape_cast %57 : vector<128xf32> to vector<1x128xf32>
    %cst_20 = arith.constant 3.000000e+38 : f32
    %59 = vector.broadcast %cst_20 : f32 to vector<3x128xf32>
    %60 = tpu.concatenate %34, %40, %46, %52, %58, %59 in 0 : vector<1x128xf32>, vector<1x128xf32>, vector<1x128xf32>, vector<1x128xf32>, vector<1x128xf32>, vector<3x128xf32> -> vector<8x128xf32>
    %61 = vector.extract_strided_slice %60 {offsets = [0, 0], sizes = [5, 128], strides = [1, 1]} : vector<8x128xf32> to vector<5x128xf32>
    %cst_21 = arith.constant dense<0.000000e+00> : vector<128xf32>
    %62 = vector.multi_reduction <add>, %61, %cst_21 [0] : vector<5x128xf32> to vector<128xf32>
    %63 = vector.shape_cast %62 : vector<128xf32> to vector<1x128xf32>
    %cst_22 = arith.constant 2.000000e-01 : f32
    %64 = vector.broadcast %cst_22 : f32 to vector<1x128xf32>
    %65 = arith.mulf %63, %64 : vector<1x128xf32>
    %c0_23 = arith.constant 0 : index
    %c0_24 = arith.constant 0 : index
    %c0_25 = arith.constant 0 : index
    %66 = vector.load %arg4[%c0_23, %c0_24, %c0_25] : memref<2x1x128xf32, #tpu.memory_space<vmem>>, vector<1x1x128xf32>
    %67 = vector.shape_cast %66 : vector<1x1x128xf32> to vector<1x128xf32>
    %68 = vector.shape_cast %65 : vector<1x128xf32> to vector<1x1x128xf32>
    tpu.vector_store %arg4[%c0_23, %c0_24, %c0_25], %68 {strides = array<i32>} : memref<2x1x128xf32, #tpu.memory_space<vmem>>, vector<1x1x128xf32>,
    %c1 = arith.constant 1 : index
    %c0_26 = arith.constant 0 : index
    %c0_27 = arith.constant 0 : index
    %69 = vector.load %arg2[%c1, %c0_26, %c0_27] : memref<2x128x3xf32, #tpu.memory_space<vmem>>, vector<1x128x3xf32>
    %70 = vector.shape_cast %69 : vector<1x128x3xf32> to vector<128x3xf32>
    %71 = arith.mulf %70, %70 : vector<128x3xf32>
    %cst_28 = arith.constant dense<0.000000e+00> : vector<1x128xf32>
    %72 = tpu.matmul %4, %71, %cst_28 {dimension_numbers = #tpu.dot_dimension_numbers<[1], [1], [0], [0], [0, 0, 1, 0], [], []>} : vector<1x3xf32>, vector<128x3xf32>, vector<1x128xf32> -> vector<1x128xf32>
    %cst_29 = arith.constant 3.000000e+38 : f32
    %73 = vector.broadcast %cst_29 : f32 to vector<8x128xf32>
    %c0_i32_30 = arith.constant 0 : i32
    %74 = tpu.assume_multiple %c0_i32_30, 128 : i32
    %c1_31 = arith.constant 1 : index
    %75 = arith.index_cast %74 : i32 to index
    %c0_32 = arith.constant 0 : index
    %76 = vector.load %arg3[%c1_31, %75, %c0_32] : memref<2x128x3xf32, #tpu.memory_space<vmem>>, vector<1x128x3xf32>
    %77 = vector.shape_cast %76 : vector<1x128x3xf32> to vector<128x3xf32>
    %cst_33 = arith.constant dense<0.000000e+00> : vector<128x128xf32>
    %78 = tpu.matmul %77, %70, %cst_33 {dimension_numbers = #tpu.dot_dimension_numbers<[1], [1], [0], [0], [0, 0, 1, 0], [], []>} : vector<128x3xf32>, vector<128x3xf32>, vector<128x128xf32> -> vector<128x128xf32>
    %79 = arith.mulf %77, %77 : vector<128x3xf32>
    %cst_34 = arith.constant dense<0.000000e+00> : vector<128xf32>
    %80 = vector.multi_reduction <add>, %79, %cst_34 [1] : vector<128x3xf32> to vector<128xf32>
    %81 = vector.shape_cast %80 : vector<128xf32> to vector<128x1xf32>
    %cst_35 = arith.constant 2.000000e+00 : f32
    %82 = vector.broadcast %cst_35 : f32 to vector<128x128xf32>
    %83 = arith.mulf %82, %78 : vector<128x128xf32>
    %84 = vector.broadcast %81 : vector<128x1xf32> to vector<128x128xf32>
    %85 = arith.subf %84, %83 : vector<128x128xf32>
    %86 = vector.broadcast %72 : vector<1x128xf32> to vector<128x128xf32>
    %87 = arith.addf %85, %86 : vector<128x128xf32>
    %88 = tpu.iota {dimensions = array<i32: 0>} : vector<128x1xi32>
    %c0_i32_36 = arith.constant 0 : i32
    %89 = vector.broadcast %c0_i32_36 : i32 to vector<128x1xi32>
    %90 = arith.addi %89, %88 : vector<128x1xi32>
    %91 = vector.broadcast %90 : vector<128x1xi32> to vector<128x128xi32>
    %92 = vector.broadcast %3 : vector<1x128xi32> to vector<128x128xi32>
    %93 = arith.cmpi eq, %91, %92 : vector<128x128xi32>
    %cst_37 = arith.constant 3.000000e+38 : f32
    %94 = vector.broadcast %cst_37 : f32 to vector<128x128xf32>
    %95 = arith.select %93, %94, %87 : vector<128x128xi1>, vector<128x128xf32>
    %96 = tpu.concatenate %73, %95 in 0 : vector<8x128xf32>, vector<128x128xf32> -> vector<136x128xf32>
    %cst_38 = arith.constant dense<0x7F800000> : vector<128xf32>
    %97 = vector.multi_reduction <minimumf>, %96, %cst_38 [0] : vector<136x128xf32> to vector<128xf32>
    %98 = vector.shape_cast %97 : vector<128xf32> to vector<1x128xf32>
    %99 = vector.broadcast %98 : vector<1x128xf32> to vector<136x128xf32>
    %100 = arith.cmpf oeq, %96, %99 : vector<136x128xf32>
    %cst_39 = arith.constant 3.000000e+38 : f32
    %101 = vector.broadcast %cst_39 : f32 to vector<136x128xf32>
    %102 = arith.select %100, %101, %96 : vector<136x128xi1>, vector<136x128xf32>
    %cst_40 = arith.constant dense<0x7F800000> : vector<128xf32>
    %103 = vector.multi_reduction <minimumf>, %102, %cst_40 [0] : vector<136x128xf32> to vector<128xf32>
    %104 = vector.shape_cast %103 : vector<128xf32> to vector<1x128xf32>
    %105 = vector.broadcast %104 : vector<1x128xf32> to vector<136x128xf32>
    %106 = arith.cmpf oeq, %102, %105 : vector<136x128xf32>
    %cst_41 = arith.constant 3.000000e+38 : f32
    %107 = vector.broadcast %cst_41 : f32 to vector<136x128xf32>
    %108 = arith.select %106, %107, %102 : vector<136x128xi1>, vector<136x128xf32>
    %cst_42 = arith.constant dense<0x7F800000> : vector<128xf32>
    %109 = vector.multi_reduction <minimumf>, %108, %cst_42 [0] : vector<136x128xf32> to vector<128xf32>
    %110 = vector.shape_cast %109 : vector<128xf32> to vector<1x128xf32>
    %111 = vector.broadcast %110 : vector<1x128xf32> to vector<136x128xf32>
    %112 = arith.cmpf oeq, %108, %111 : vector<136x128xf32>
    %cst_43 = arith.constant 3.000000e+38 : f32
    %113 = vector.broadcast %cst_43 : f32 to vector<136x128xf32>
    %114 = arith.select %112, %113, %108 : vector<136x128xi1>, vector<136x128xf32>
    %cst_44 = arith.constant dense<0x7F800000> : vector<128xf32>
    %115 = vector.multi_reduction <minimumf>, %114, %cst_44 [0] : vector<136x128xf32> to vector<128xf32>
    %116 = vector.shape_cast %115 : vector<128xf32> to vector<1x128xf32>
    %117 = vector.broadcast %116 : vector<1x128xf32> to vector<136x128xf32>
    %118 = arith.cmpf oeq, %114, %117 : vector<136x128xf32>
    %cst_45 = arith.constant 3.000000e+38 : f32
    %119 = vector.broadcast %cst_45 : f32 to vector<136x128xf32>
    %120 = arith.select %118, %119, %114 : vector<136x128xi1>, vector<136x128xf32>
    %cst_46 = arith.constant dense<0x7F800000> : vector<128xf32>
    %121 = vector.multi_reduction <minimumf>, %120, %cst_46 [0] : vector<136x128xf32> to vector<128xf32>
    %122 = vector.shape_cast %121 : vector<128xf32> to vector<1x128xf32>
    %cst_47 = arith.constant 3.000000e+38 : f32
    %123 = vector.broadcast %cst_47 : f32 to vector<3x128xf32>
    %124 = tpu.concatenate %98, %104, %110, %116, %122, %123 in 0 : vector<1x128xf32>, vector<1x128xf32>, vector<1x128xf32>, vector<1x128xf32>, vector<1x128xf32>, vector<3x128xf32> -> vector<8x128xf32>
    %125 = vector.extract_strided_slice %124 {offsets = [0, 0], sizes = [5, 128], strides = [1, 1]} : vector<8x128xf32> to vector<5x128xf32>
    %cst_48 = arith.constant dense<0.000000e+00> : vector<128xf32>
    %126 = vector.multi_reduction <add>, %125, %cst_48 [0] : vector<5x128xf32> to vector<128xf32>
    %127 = vector.shape_cast %126 : vector<128xf32> to vector<1x128xf32>
    %cst_49 = arith.constant 2.000000e-01 : f32
    %128 = vector.broadcast %cst_49 : f32 to vector<1x128xf32>
    %129 = arith.mulf %127, %128 : vector<1x128xf32>
    %c1_50 = arith.constant 1 : index
    %c0_51 = arith.constant 0 : index
    %c0_52 = arith.constant 0 : index
    %130 = vector.load %arg4[%c1_50, %c0_51, %c0_52] : memref<2x1x128xf32, #tpu.memory_space<vmem>>, vector<1x1x128xf32>
    %131 = vector.shape_cast %130 : vector<1x1x128xf32> to vector<1x128xf32>
    %132 = vector.shape_cast %129 : vector<1x128xf32> to vector<1x1x128xf32>
    tpu.vector_store %arg4[%c1_50, %c0_51, %c0_52], %132 {strides = array<i32>} : memref<2x1x128xf32, #tpu.memory_space<vmem>>, vector<1x1x128xf32>,
    return
  }
  func.func @transform_0(%arg0: i32, %arg1: i32) -> (i32, i32, i32) {
    %c0_i32 = arith.constant 0 : i32
    %c0_i32_0 = arith.constant 0 : i32
    return %arg0, %arg1, %c0_i32 : i32, i32, i32
  }
  func.func @transform_1(%arg0: i32, %arg1: i32) -> (i32, i32, i32) {
    %c0_i32 = arith.constant 0 : i32
    %c0_i32_0 = arith.constant 0 : i32
    %c0_i32_1 = arith.constant 0 : i32
    return %arg0, %c0_i32, %c0_i32_0 : i32, i32, i32
  }
  func.func @transform_2(%arg0: i32, %arg1: i32) -> (i32, i32, i32) {
    %c0_i32 = arith.constant 0 : i32
    %c0_i32_0 = arith.constant 0 : i32
    return %arg0, %c0_i32, %arg1 : i32, i32, i32
  }
}

module attributes {stable_mosaic.version = 11 : i64} {
  func.func @_knn_value_kernel(%arg0: i32, %arg1: i32, %arg2: memref<2x128x3xf32, #tpu.memory_space<vmem>>, %arg3: memref<2x128x3xf32, #tpu.memory_space<vmem>>, %arg4: memref<2x1x128xf32, #tpu.memory_space<vmem>>) attributes {dimension_semantics = [#tpu.dimension_semantics<parallel>, #tpu.dimension_semantics<parallel>], iteration_bounds = array<i64: 1, 1>, scalar_prefetch = 0 : i64, scratch_operands = 0 : i64, tpu.core_type = #tpu.core_type<tc>, window_params = [{transform_indices = @transform_0, window_bounds = array<i64: 2, 128, 3>}, {transform_indices = @transform_1, window_bounds = array<i64: 2, 128, 3>}, {transform_indices = @transform_2, window_bounds = array<i64: 2, 1, 128>}]} {
    %c128_i32 = arith.constant 128 : i32
    %0 = arith.muli %arg1, %c128_i32 : i32
    %1 = tpu.iota {dimensions = array<i32: 1>} : vector<1x128xi32>
    %2 = vector.broadcast %0 : i32 to vector<1x128xi32>
    %3 = arith.addi %2, %1 : vector<1x128xi32>
    %cst = arith.constant 1.000000e+00 : f32
    %4 = vector.broadcast %cst : f32 to vector<1x3xf32>
    %c0 = arith.constant 0 : index
    %c0_0 = arith.constant 0 : index
    %c0_1 = arith.constant 0 : index
    %5 = vector.load %arg2[%c0, %c0_0, %c0_1] : memref<2x128x3xf32, #tpu.memory_space<vmem>>, vector<1x128x3xf32>
    %6 = vector.shape_cast %5 : vector<1x128x3xf32> to vector<128x3xf32>
    %7 = arith.mulf %6, %6 : vector<128x3xf32>
    %cst_2 = arith.constant dense<0.000000e+00> : vector<1x128xf32>
    %8 = tpu.matmul %4, %7, %cst_2 {dimension_numbers = #tpu.dot_dimension_numbers<[1], [1], [0], [0], [0, 0, 1, 0], [], []>} : vector<1x3xf32>, vector<128x3xf32>, vector<1x128xf32> -> vector<1x128xf32>
    %cst_3 = arith.constant 3.000000e+38 : f32
    %9 = vector.broadcast %cst_3 : f32 to vector<8x128xf32>
    %c0_i32 = arith.constant 0 : i32
    %10 = tpu.assume_multiple %c0_i32, 128 : i32
    %c0_4 = arith.constant 0 : index
    %11 = arith.index_cast %10 : i32 to index
    %c0_5 = arith.constant 0 : index
    %12 = vector.load %arg3[%c0_4, %11, %c0_5] : memref<2x128x3xf32, #tpu.memory_space<vmem>>, vector<1x128x3xf32>
    %13 = vector.shape_cast %12 : vector<1x128x3xf32> to vector<128x3xf32>
    %cst_6 = arith.constant dense<0.000000e+00> : vector<128x128xf32>
    %14 = tpu.matmul %13, %6, %cst_6 {dimension_numbers = #tpu.dot_dimension_numbers<[1], [1], [0], [0], [0, 0, 1, 0], [], []>} : vector<128x3xf32>, vector<128x3xf32>, vector<128x128xf32> -> vector<128x128xf32>
    %15 = arith.mulf %13, %13 : vector<128x3xf32>
    %cst_7 = arith.constant dense<0.000000e+00> : vector<128xf32>
    %16 = vector.multi_reduction <add>, %15, %cst_7 [1] : vector<128x3xf32> to vector<128xf32>
    %17 = vector.shape_cast %16 : vector<128xf32> to vector<128x1xf32>
    %cst_8 = arith.constant 2.000000e+00 : f32
    %18 = vector.broadcast %cst_8 : f32 to vector<128x128xf32>
    %19 = arith.mulf %18, %14 : vector<128x128xf32>
    %20 = vector.broadcast %17 : vector<128x1xf32> to vector<128x128xf32>
    %21 = arith.subf %20, %19 : vector<128x128xf32>
    %22 = vector.broadcast %8 : vector<1x128xf32> to vector<128x128xf32>
    %23 = arith.addf %21, %22 : vector<128x128xf32>
    %24 = tpu.iota {dimensions = array<i32: 0>} : vector<128x1xi32>
    %c0_i32_9 = arith.constant 0 : i32
    %25 = vector.broadcast %c0_i32_9 : i32 to vector<128x1xi32>
    %26 = arith.addi %25, %24 : vector<128x1xi32>
    %27 = vector.broadcast %26 : vector<128x1xi32> to vector<128x128xi32>
    %28 = vector.broadcast %3 : vector<1x128xi32> to vector<128x128xi32>
    %29 = arith.cmpi eq, %27, %28 : vector<128x128xi32>
    %cst_10 = arith.constant 3.000000e+38 : f32
    %30 = vector.broadcast %cst_10 : f32 to vector<128x128xf32>
    %31 = arith.select %29, %30, %23 : vector<128x128xi1>, vector<128x128xf32>
    %32 = tpu.concatenate %9, %31 in 0 : vector<8x128xf32>, vector<128x128xf32> -> vector<136x128xf32>
    %cst_11 = arith.constant dense<0x7F800000> : vector<128xf32>
    %33 = vector.multi_reduction <minimumf>, %32, %cst_11 [0] : vector<136x128xf32> to vector<128xf32>
    %34 = vector.shape_cast %33 : vector<128xf32> to vector<1x128xf32>
    %35 = vector.broadcast %34 : vector<1x128xf32> to vector<136x128xf32>
    %36 = arith.cmpf oeq, %32, %35 : vector<136x128xf32>
    %cst_12 = arith.constant 3.000000e+38 : f32
    %37 = vector.broadcast %cst_12 : f32 to vector<136x128xf32>
    %38 = arith.select %36, %37, %32 : vector<136x128xi1>, vector<136x128xf32>
    %cst_13 = arith.constant dense<0x7F800000> : vector<128xf32>
    %39 = vector.multi_reduction <minimumf>, %38, %cst_13 [0] : vector<136x128xf32> to vector<128xf32>
    %40 = vector.shape_cast %39 : vector<128xf32> to vector<1x128xf32>
    %41 = vector.broadcast %40 : vector<1x128xf32> to vector<136x128xf32>
    %42 = arith.cmpf oeq, %38, %41 : vector<136x128xf32>
    %cst_14 = arith.constant 3.000000e+38 : f32
    %43 = vector.broadcast %cst_14 : f32 to vector<136x128xf32>
    %44 = arith.select %42, %43, %38 : vector<136x128xi1>, vector<136x128xf32>
    %cst_15 = arith.constant dense<0x7F800000> : vector<128xf32>
    %45 = vector.multi_reduction <minimumf>, %44, %cst_15 [0] : vector<136x128xf32> to vector<128xf32>
    %46 = vector.shape_cast %45 : vector<128xf32> to vector<1x128xf32>
    %47 = vector.broadcast %46 : vector<1x128xf32> to vector<136x128xf32>
    %48 = arith.cmpf oeq, %44, %47 : vector<136x128xf32>
    %cst_16 = arith.constant 3.000000e+38 : f32
    %49 = vector.broadcast %cst_16 : f32 to vector<136x128xf32>
    %50 = arith.select %48, %49, %44 : vector<136x128xi1>, vector<136x128xf32>
    %cst_17 = arith.constant dense<0x7F800000> : vector<128xf32>
    %51 = vector.multi_reduction <minimumf>, %50, %cst_17 [0] : vector<136x128xf32> to vector<128xf32>
    %52 = vector.shape_cast %51 : vector<128xf32> to vector<1x128xf32>
    %53 = vector.broadcast %52 : vector<1x128xf32> to vector<136x128xf32>
    %54 = arith.cmpf oeq, %50, %53 : vector<136x128xf32>
    %cst_18 = arith.constant 3.000000e+38 : f32
    %55 = vector.broadcast %cst_18 : f32 to vector<136x128xf32>
    %56 = arith.select %54, %55, %50 : vector<136x128xi1>, vector<136x128xf32>
    %cst_19 = arith.constant dense<0x7F800000> : vector<128xf32>
    %57 = vector.multi_reduction <minimumf>, %56, %cst_19 [0] : vector<136x128xf32> to vector<128xf32>
    %58 = vector.shape_cast %57 : vector<128xf32> to vector<1x128xf32>
    %cst_20 = arith.constant 3.000000e+38 : f32
    %59 = vector.broadcast %cst_20 : f32 to vector<3x128xf32>
    %60 = tpu.concatenate %34, %40, %46, %52, %58, %59 in 0 : vector<1x128xf32>, vector<1x128xf32>, vector<1x128xf32>, vector<1x128xf32>, vector<1x128xf32>, vector<3x128xf32> -> vector<8x128xf32>
    %61 = vector.extract_strided_slice %60 {offsets = [0, 0], sizes = [5, 128], strides = [1, 1]} : vector<8x128xf32> to vector<5x128xf32>
    %cst_21 = arith.constant dense<0.000000e+00> : vector<128xf32>
    %62 = vector.multi_reduction <add>, %61, %cst_21 [0] : vector<5x128xf32> to vector<128xf32>
    %63 = vector.shape_cast %62 : vector<128xf32> to vector<1x128xf32>
    %cst_22 = arith.constant 2.000000e-01 : f32
    %64 = vector.broadcast %cst_22 : f32 to vector<1x128xf32>
    %65 = arith.mulf %63, %64 : vector<1x128xf32>
    %c0_23 = arith.constant 0 : index
    %c0_24 = arith.constant 0 : index
    %c0_25 = arith.constant 0 : index
    %66 = vector.load %arg4[%c0_23, %c0_24, %c0_25] : memref<2x1x128xf32, #tpu.memory_space<vmem>>, vector<1x1x128xf32>
    %67 = vector.shape_cast %66 : vector<1x1x128xf32> to vector<1x128xf32>
    %68 = vector.shape_cast %65 : vector<1x128xf32> to vector<1x1x128xf32>
    tpu.vector_store %arg4[%c0_23, %c0_24, %c0_25], %68 {strides = array<i32>} : memref<2x1x128xf32, #tpu.memory_space<vmem>>, vector<1x1x128xf32>,
    %c1 = arith.constant 1 : index
    %c0_26 = arith.constant 0 : index
    %c0_27 = arith.constant 0 : index
    %69 = vector.load %arg2[%c1, %c0_26, %c0_27] : memref<2x128x3xf32, #tpu.memory_space<vmem>>, vector<1x128x3xf32>
    %70 = vector.shape_cast %69 : vector<1x128x3xf32> to vector<128x3xf32>
    %71 = arith.mulf %70, %70 : vector<128x3xf32>
    %cst_28 = arith.constant dense<0.000000e+00> : vector<1x128xf32>
    %72 = tpu.matmul %4, %71, %cst_28 {dimension_numbers = #tpu.dot_dimension_numbers<[1], [1], [0], [0], [0, 0, 1, 0], [], []>} : vector<1x3xf32>, vector<128x3xf32>, vector<1x128xf32> -> vector<1x128xf32>
    %cst_29 = arith.constant 3.000000e+38 : f32
    %73 = vector.broadcast %cst_29 : f32 to vector<8x128xf32>
    %c0_i32_30 = arith.constant 0 : i32
    %74 = tpu.assume_multiple %c0_i32_30, 128 : i32
    %c1_31 = arith.constant 1 : index
    %75 = arith.index_cast %74 : i32 to index
    %c0_32 = arith.constant 0 : index
    %76 = vector.load %arg3[%c1_31, %75, %c0_32] : memref<2x128x3xf32, #tpu.memory_space<vmem>>, vector<1x128x3xf32>
    %77 = vector.shape_cast %76 : vector<1x128x3xf32> to vector<128x3xf32>
    %cst_33 = arith.constant dense<0.000000e+00> : vector<128x128xf32>
    %78 = tpu.matmul %77, %70, %cst_33 {dimension_numbers = #tpu.dot_dimension_numbers<[1], [1], [0], [0], [0, 0, 1, 0], [], []>} : vector<128x3xf32>, vector<128x3xf32>, vector<128x128xf32> -> vector<128x128xf32>
    %79 = arith.mulf %77, %77 : vector<128x3xf32>
    %cst_34 = arith.constant dense<0.000000e+00> : vector<128xf32>
    %80 = vector.multi_reduction <add>, %79, %cst_34 [1] : vector<128x3xf32> to vector<128xf32>
    %81 = vector.shape_cast %80 : vector<128xf32> to vector<128x1xf32>
    %cst_35 = arith.constant 2.000000e+00 : f32
    %82 = vector.broadcast %cst_35 : f32 to vector<128x128xf32>
    %83 = arith.mulf %82, %78 : vector<128x128xf32>
    %84 = vector.broadcast %81 : vector<128x1xf32> to vector<128x128xf32>
    %85 = arith.subf %84, %83 : vector<128x128xf32>
    %86 = vector.broadcast %72 : vector<1x128xf32> to vector<128x128xf32>
    %87 = arith.addf %85, %86 : vector<128x128xf32>
    %88 = tpu.iota {dimensions = array<i32: 0>} : vector<128x1xi32>
    %c0_i32_36 = arith.constant 0 : i32
    %89 = vector.broadcast %c0_i32_36 : i32 to vector<128x1xi32>
    %90 = arith.addi %89, %88 : vector<128x1xi32>
    %91 = vector.broadcast %90 : vector<128x1xi32> to vector<128x128xi32>
    %92 = vector.broadcast %3 : vector<1x128xi32> to vector<128x128xi32>
    %93 = arith.cmpi eq, %91, %92 : vector<128x128xi32>
    %cst_37 = arith.constant 3.000000e+38 : f32
    %94 = vector.broadcast %cst_37 : f32 to vector<128x128xf32>
    %95 = arith.select %93, %94, %87 : vector<128x128xi1>, vector<128x128xf32>
    %96 = tpu.concatenate %73, %95 in 0 : vector<8x128xf32>, vector<128x128xf32> -> vector<136x128xf32>
    %cst_38 = arith.constant dense<0x7F800000> : vector<128xf32>
    %97 = vector.multi_reduction <minimumf>, %96, %cst_38 [0] : vector<136x128xf32> to vector<128xf32>
    %98 = vector.shape_cast %97 : vector<128xf32> to vector<1x128xf32>
    %99 = vector.broadcast %98 : vector<1x128xf32> to vector<136x128xf32>
    %100 = arith.cmpf oeq, %96, %99 : vector<136x128xf32>
    %cst_39 = arith.constant 3.000000e+38 : f32
    %101 = vector.broadcast %cst_39 : f32 to vector<136x128xf32>
    %102 = arith.select %100, %101, %96 : vector<136x128xi1>, vector<136x128xf32>
    %cst_40 = arith.constant dense<0x7F800000> : vector<128xf32>
    %103 = vector.multi_reduction <minimumf>, %102, %cst_40 [0] : vector<136x128xf32> to vector<128xf32>
    %104 = vector.shape_cast %103 : vector<128xf32> to vector<1x128xf32>
    %105 = vector.broadcast %104 : vector<1x128xf32> to vector<136x128xf32>
    %106 = arith.cmpf oeq, %102, %105 : vector<136x128xf32>
    %cst_41 = arith.constant 3.000000e+38 : f32
    %107 = vector.broadcast %cst_41 : f32 to vector<136x128xf32>
    %108 = arith.select %106, %107, %102 : vector<136x128xi1>, vector<136x128xf32>
    %cst_42 = arith.constant dense<0x7F800000> : vector<128xf32>
    %109 = vector.multi_reduction <minimumf>, %108, %cst_42 [0] : vector<136x128xf32> to vector<128xf32>
    %110 = vector.shape_cast %109 : vector<128xf32> to vector<1x128xf32>
    %111 = vector.broadcast %110 : vector<1x128xf32> to vector<136x128xf32>
    %112 = arith.cmpf oeq, %108, %111 : vector<136x128xf32>
    %cst_43 = arith.constant 3.000000e+38 : f32
    %113 = vector.broadcast %cst_43 : f32 to vector<136x128xf32>
    %114 = arith.select %112, %113, %108 : vector<136x128xi1>, vector<136x128xf32>
    %cst_44 = arith.constant dense<0x7F800000> : vector<128xf32>
    %115 = vector.multi_reduction <minimumf>, %114, %cst_44 [0] : vector<136x128xf32> to vector<128xf32>
    %116 = vector.shape_cast %115 : vector<128xf32> to vector<1x128xf32>
    %117 = vector.broadcast %116 : vector<1x128xf32> to vector<136x128xf32>
    %118 = arith.cmpf oeq, %114, %117 : vector<136x128xf32>
    %cst_45 = arith.constant 3.000000e+38 : f32
    %119 = vector.broadcast %cst_45 : f32 to vector<136x128xf32>
    %120 = arith.select %118, %119, %114 : vector<136x128xi1>, vector<136x128xf32>
    %cst_46 = arith.constant dense<0x7F800000> : vector<128xf32>
    %121 = vector.multi_reduction <minimumf>, %120, %cst_46 [0] : vector<136x128xf32> to vector<128xf32>
    %122 = vector.shape_cast %121 : vector<128xf32> to vector<1x128xf32>
    %cst_47 = arith.constant 3.000000e+38 : f32
    %123 = vector.broadcast %cst_47 : f32 to vector<3x128xf32>
    %124 = tpu.concatenate %98, %104, %110, %116, %122, %123 in 0 : vector<1x128xf32>, vector<1x128xf32>, vector<1x128xf32>, vector<1x128xf32>, vector<1x128xf32>, vector<3x128xf32> -> vector<8x128xf32>
    %125 = vector.extract_strided_slice %124 {offsets = [0, 0], sizes = [5, 128], strides = [1, 1]} : vector<8x128xf32> to vector<5x128xf32>
    %cst_48 = arith.constant dense<0.000000e+00> : vector<128xf32>
    %126 = vector.multi_reduction <add>, %125, %cst_48 [0] : vector<5x128xf32> to vector<128xf32>
    %127 = vector.shape_cast %126 : vector<128xf32> to vector<1x128xf32>
    %cst_49 = arith.constant 2.000000e-01 : f32
    %128 = vector.broadcast %cst_49 : f32 to vector<1x128xf32>
    %129 = arith.mulf %127, %128 : vector<1x128xf32>
    %c1_50 = arith.constant 1 : index
    %c0_51 = arith.constant 0 : index
    %c0_52 = arith.constant 0 : index
    %130 = vector.load %arg4[%c1_50, %c0_51, %c0_52] : memref<2x1x128xf32, #tpu.memory_space<vmem>>, vector<1x1x128xf32>
    %131 = vector.shape_cast %130 : vector<1x1x128xf32> to vector<1x128xf32>
    %132 = vector.shape_cast %129 : vector<1x128xf32> to vector<1x1x128xf32>
    tpu.vector_store %arg4[%c1_50, %c0_51, %c0_52], %132 {strides = array<i32>} : memref<2x1x128xf32, #tpu.memory_space<vmem>>, vector<1x1x128xf32>,
    return
  }
  func.func @transform_0(%arg0: i32, %arg1: i32) -> (i32, i32, i32) {
    %c0_i32 = arith.constant 0 : i32
    %c0_i32_0 = arith.constant 0 : i32
    return %arg0, %arg1, %c0_i32 : i32, i32, i32
  }
  func.func @transform_1(%arg0: i32, %arg1: i32) -> (i32, i32, i32) {
    %c0_i32 = arith.constant 0 : i32
    %c0_i32_0 = arith.constant 0 : i32
    %c0_i32_1 = arith.constant 0 : i32
    return %arg0, %c0_i32, %c0_i32_0 : i32, i32, i32
  }
  func.func @transform_2(%arg0: i32, %arg1: i32) -> (i32, i32, i32) {
    %c0_i32 = arith.constant 0 : i32
    %c0_i32_0 = arith.constant 0 : i32
    return %arg0, %c0_i32, %arg1 : i32, i32, i32
  }
}

</mosaic_0001>

<llo_original>
// kernel: tpu_custom_call.1
$region0: #{tpu_custom_call.1}
  #allocation0 [shape = 'u32[]', space=smem, size = 0x4, offset = 0x4, fixed_abs, tag = 'smem constant byte address 0x4 - core index']
  #allocation1 [shape = 'u32[144,128]{1,0:T(1,128)}', space=vmem, size = 0x12000, scoped, tag = 'internal scratch']
  %s0 = inlined_call_operand.vmem [shape: f32[2,128,3], index: 0, kind: input, shape index: {}]
  %s1 = inlined_call_operand.vmem [shape: f32[2,128,3], index: 1, kind: input, shape index: {}]
  %s2 = inlined_call_operand.hbm [shape: f32[2,1,128], index: 2, kind: output, shape index: {}]
  %s3 = sld [smem:[#allocation0]]
  $region18: #{tpu_custom_call.1} parent=0
    _
  %s5 = ssub.s32 1, %s3
  %s6 = scalar_select 0, %s5, %s3
  $region1: #{tpu_custom_call.1} parent=0
    #allocation2 [shape = 'u8[1024]{0}', space=vmem, size = 0x400, scoped, tag = 'output window, operand 0, single buffered']
    #allocation3 [shape = 's32[1]{0}', space=sflag, size = 0x4, scoped, tag = 'scoped memory for tpu_custom_call.1']
    %7 = vsyncpa [#allocation3], 0
    // Predicated region
    $region2: #{tpu_custom_call.1} parent=1 // pred_check
      _
    $region3: #{tpu_custom_call.1} parent=1 // pred_check_branch
      %9 = sbr.rel (0) target = $region5
    $region4: #{tpu_custom_call.1} parent=1 // pred_region
      _
    $region5: #{tpu_custom_call.1} parent=1 // pred_fallthru
      _
    // Predicated region
    $region6: #{tpu_custom_call.1} parent=1 // pred_check
      _
    $region7: #{tpu_custom_call.1} parent=1 // pred_check_branch
      %11 = sbr.rel (0) target = $region9
    $region8: #{tpu_custom_call.1} parent=1 // pred_region
      _
    $region9: #{tpu_custom_call.1} parent=1 // pred_fallthru
      _
    %s12 = smul.u32 0, 128
    %v13 = vlaneseq
    %v14 = vand.u32 %v13, 127
    %v15 = vstv %s12
    %v16 = vadd.s32 %v15, %v14
    %v17 = vld [vmem:[%s0] sm:$0xff]
    %v18 = vld [vmem:[%s0 + $0x8] sm:$0xff]
    %v19 = vld [vmem:[%s0 + $0x10] sm:$0xff]
    %v20 = vld [vmem:[%s0 + $0x18] sm:$0xff]
    %v21 = vld [vmem:[%s0 + $0x20] sm:$0xff]
    %v22 = vld [vmem:[%s0 + $0x28] sm:$0xff]
    %v23 = vld [vmem:[%s0 + $0x30] sm:$0xff]
    %v24 = vld [vmem:[%s0 + $0x38] sm:$0xff]
    %v25 = vld [vmem:[%s0 + $0x40] sm:$0xff]
    %v26 = vld [vmem:[%s0 + $0x48] sm:$0xff]
    %v27 = vld [vmem:[%s0 + $0x50] sm:$0xff]
    %v28 = vld [vmem:[%s0 + $0x58] sm:$0xff]
    %v29 = vld [vmem:[%s0 + $0x60] sm:$0xff]
    %v30 = vld [vmem:[%s0 + $0x68] sm:$0xff]
    %v31 = vld [vmem:[%s0 + $0x70] sm:$0xff]
    %v32 = vld [vmem:[%s0 + $0x78] sm:$0xff]
    %v33 = vmul.f32 %v17, %v17
    %v34 = vmul.f32 %v18, %v18
    %v35 = vmul.f32 %v19, %v19
    %v36 = vmul.f32 %v20, %v20
    %v37 = vmul.f32 %v21, %v21
    %v38 = vmul.f32 %v22, %v22
    %v39 = vmul.f32 %v23, %v23
    %v40 = vmul.f32 %v24, %v24
    %v41 = vmul.f32 %v25, %v25
    %v42 = vmul.f32 %v26, %v26
    %v43 = vmul.f32 %v27, %v27
    %v44 = vmul.f32 %v28, %v28
    %v45 = vmul.f32 %v29, %v29
    %v46 = vmul.f32 %v30, %v30
    %v47 = vmul.f32 %v31, %v31
    %v48 = vmul.f32 %v32, %v32
    %vm49 = vcmask 23552
    %v51 = vsel %vm49, 1.0, 0
    %v54 = vsel %vm49, %v33, 0
    %v57 = vsel %vm49, %v34, 0
    %v60 = vsel %vm49, %v35, 0
    %v63 = vsel %vm49, %v36, 0
    %v66 = vsel %vm49, %v37, 0
    %v69 = vsel %vm49, %v38, 0
    %v72 = vsel %vm49, %v39, 0
    %v75 = vsel %vm49, %v40, 0
    %v78 = vsel %vm49, %v41, 0
    %v81 = vsel %vm49, %v42, 0
    %v84 = vsel %vm49, %v43, 0
    %v87 = vsel %vm49, %v44, 0
    %v90 = vsel %vm49, %v45, 0
    %v93 = vsel %vm49, %v46, 0
    %v96 = vsel %vm49, %v47, 0
    %v99 = vsel %vm49, %v48, 0
    %101 = vmatprep.subr.mxu0 0.0
    %102 = vmatpush1.xpose.msra.mxu0 %v54
    %103 = vmatprep.subr.mxu0 0.0
    %104 = vmatpush1.xpose.msra.mxu0 %v57
    %105 = vmatprep.subr.mxu0 0.0
    %106 = vmatpush1.xpose.msra.mxu0 %v60
    %107 = vmatprep.subr.mxu0 0.0
    %108 = vmatpush1.xpose.msra.mxu0 %v63
    %109 = vmatprep.subr.mxu0 0.0
    %110 = vmatpush1.xpose.msra.mxu0 %v66
    %111 = vmatprep.subr.mxu0 0.0
    %112 = vmatpush1.xpose.msra.mxu0 %v69
    %113 = vmatprep.subr.mxu0 0.0
    %114 = vmatpush1.xpose.msra.mxu0 %v72
    %115 = vmatprep.subr.mxu0 0.0
    %116 = vmatpush1.xpose.msra.mxu0 %v75
    %117 = vmatprep.subr.mxu0 0.0
    %118 = vmatpush1.xpose.msra.mxu0 %v78
    %119 = vmatprep.subr.mxu0 0.0
    %120 = vmatpush1.xpose.msra.mxu0 %v81
    %121 = vmatprep.subr.mxu0 0.0
    %122 = vmatpush1.xpose.msra.mxu0 %v84
    %123 = vmatprep.subr.mxu0 0.0
    %124 = vmatpush1.xpose.msra.mxu0 %v87
    %125 = vmatprep.subr.mxu0 0.0
    %126 = vmatpush1.xpose.msra.mxu0 %v90
    %127 = vmatprep.subr.mxu0 0.0
    %128 = vmatpush1.xpose.msra.mxu0 %v93
    %129 = vmatprep.subr.mxu0 0.0
    %130 = vmatpush1.xpose.msra.mxu0 %v96
    %131 = vmatprep.subr.mxu0 0.0
    %132 = vmatpush1.xpose.msra.mxu0 %v99
    %133 = vmatprep.subr.mxu0 0.0
    %134 = vmatpush1.xpose.msra.mxu0 0.0
    %135 = vmatprep.subr.mxu0 0.0
    %136 = vmatpush1.xpose.msra.mxu0 0.0
    %137 = vmatprep.subr.mxu0 0.0
    %138 = vmatpush1.xpose.msra.mxu0 0.0
    %139 = vmatprep.subr.mxu0 0.0
    %140 = vmatpush1.xpose.msra.mxu0 0.0
    %141 = vmatprep.subr.mxu0 0.0
    %142 = vmatpush1.xpose.msra.mxu0 0.0
    %143 = vmatprep.subr.mxu0 0.0
    %144 = vmatpush1.xpose.msra.mxu0 0.0
    %145 = vmatprep.subr.mxu0 0.0
    %146 = vmatpush1.xpose.msra.mxu0 0.0
    %147 = vmatprep.subr.mxu0 0.0
    %148 = vmatpush1.xpose.msra.mxu0 0.0
    %149 = vmatprep.subr.mxu0 0.0
    %150 = vmatpush1.xpose.msra.mxu0 0.0
    %151 = vmatprep.subr.mxu0 0.0
    %152 = vmatpush1.xpose.msra.mxu0 0.0
    %153 = vmatprep.subr.mxu0 0.0
    %154 = vmatpush1.xpose.msra.mxu0 0.0
    %155 = vmatprep.subr.mxu0 0.0
    %156 = vmatpush1.xpose.msra.mxu0 0.0
    %157 = vmatprep.subr.mxu0 0.0
    %158 = vmatpush1.xpose.msra.mxu0 0.0
    %159 = vmatprep.subr.mxu0 0.0
    %160 = vmatpush1.xpose.msra.mxu0 0.0
    %161 = vmatprep.subr.mxu0 0.0
    %162 = vmatpush1.xpose.msra.mxu0 0.0
    %163 = vmatprep.subr.mxu0 0.0
    %164 = vmatpush1.xpose.msra.mxu0 0.0
    %165 = vmatprep.mubr.f32.mxu0 0.0
    %166 = vmatmul.mubr.f32.gmra.mrb[0].mxu0 %v51
    %v167 = vpop.f32.mrb[0].mxu0
    %v168 = vadd.f32 0.0, %v167
    %v169 = vpop.f32.mrb[0].mxu0
    %170 = vdwg.mxu0
    %v171 = vld [vmem:[%s1] sm:$0xff]
    %v172 = vld [vmem:[%s1 + $0x8] sm:$0xff]
    %v173 = vld [vmem:[%s1 + $0x10] sm:$0xff]
    %v174 = vld [vmem:[%s1 + $0x18] sm:$0xff]
    %v175 = vld [vmem:[%s1 + $0x20] sm:$0xff]
    %v176 = vld [vmem:[%s1 + $0x28] sm:$0xff]
    %v177 = vld [vmem:[%s1 + $0x30] sm:$0xff]
    %v178 = vld [vmem:[%s1 + $0x38] sm:$0xff]
    %v179 = vld [vmem:[%s1 + $0x40] sm:$0xff]
    %v180 = vld [vmem:[%s1 + $0x48] sm:$0xff]
    %v181 = vld [vmem:[%s1 + $0x50] sm:$0xff]
    %v182 = vld [vmem:[%s1 + $0x58] sm:$0xff]
    %v183 = vld [vmem:[%s1 + $0x60] sm:$0xff]
    %v184 = vld [vmem:[%s1 + $0x68] sm:$0xff]
    %v185 = vld [vmem:[%s1 + $0x70] sm:$0xff]
    %v186 = vld [vmem:[%s1 + $0x78] sm:$0xff]
    %v188 = vsel %vm49, %v171, 0
    %v191 = vsel %vm49, %v172, 0
    %v194 = vsel %vm49, %v173, 0
    %v197 = vsel %vm49, %v174, 0
    %v200 = vsel %vm49, %v175, 0
    %v203 = vsel %vm49, %v176, 0
    %v206 = vsel %vm49, %v177, 0
    %v209 = vsel %vm49, %v178, 0
    %v212 = vsel %vm49, %v179, 0
    %v215 = vsel %vm49, %v180, 0
    %v218 = vsel %vm49, %v181, 0
    %v221 = vsel %vm49, %v182, 0
    %v224 = vsel %vm49, %v183, 0
    %v227 = vsel %vm49, %v184, 0
    %v230 = vsel %vm49, %v185, 0
    %v233 = vsel %vm49, %v186, 0
    %v236 = vsel %vm49, %v17, 0
    %v239 = vsel %vm49, %v18, 0
    %v242 = vsel %vm49, %v19, 0
    %v245 = vsel %vm49, %v20, 0
    %v248 = vsel %vm49, %v21, 0
    %v251 = vsel %vm49, %v22, 0
    %v254 = vsel %vm49, %v23, 0
    %v257 = vsel %vm49, %v24, 0
    %v260 = vsel %vm49, %v25, 0
    %v263 = vsel %vm49, %v26, 0
    %v266 = vsel %vm49, %v27, 0
    %v269 = vsel %vm49, %v28, 0
    %v272 = vsel %vm49, %v29, 0
    %v275 = vsel %vm49, %v30, 0
    %v278 = vsel %vm49, %v31, 0
    %v281 = vsel %vm49, %v32, 0
    %283 = vmatprep.subr.mxu0 0.0
    %284 = vmatpush1.xpose.msra.mxu0 %v236
    %285 = vmatprep.subr.mxu0 0.0
    %286 = vmatpush1.xpose.msra.mxu0 %v239
    %287 = vmatprep.subr.mxu0 0.0
    %288 = vmatpush1.xpose.msra.mxu0 %v242
    %289 = vmatprep.subr.mxu0 0.0
    %290 = vmatpush1.xpose.msra.mxu0 %v245
    %291 = vmatprep.subr.mxu0 0.0
    %292 = vmatpush1.xpose.msra.mxu0 %v248
    %293 = vmatprep.subr.mxu0 0.0
    %294 = vmatpush1.xpose.msra.mxu0 %v251
    %295 = vmatprep.subr.mxu0 0.0
    %296 = vmatpush1.xpose.msra.mxu0 %v254
    %297 = vmatprep.subr.mxu0 0.0
    %298 = vmatpush1.xpose.msra.mxu0 %v257
    %299 = vmatprep.subr.mxu0 0.0
    %300 = vmatpush1.xpose.msra.mxu0 %v260
    %301 = vmatprep.subr.mxu0 0.0
    %302 = vmatpush1.xpose.msra.mxu0 %v263
    %303 = vmatprep.subr.mxu0 0.0
    %304 = vmatpush1.xpose.msra.mxu0 %v266
    %305 = vmatprep.subr.mxu0 0.0
    %306 = vmatpush1.xpose.msra.mxu0 %v269
    %307 = vmatprep.subr.mxu0 0.0
    %308 = vmatpush1.xpose.msra.mxu0 %v272
    %309 = vmatprep.subr.mxu0 0.0
    %310 = vmatpush1.xpose.msra.mxu0 %v275
    %311 = vmatprep.subr.mxu0 0.0
    %312 = vmatpush1.xpose.msra.mxu0 %v278
    %313 = vmatprep.subr.mxu0 0.0
    %314 = vmatpush1.xpose.msra.mxu0 %v281
    %315 = vmatprep.subr.mxu0 0.0
    %316 = vmatpush1.xpose.msra.mxu0 0.0
    %317 = vmatprep.subr.mxu0 0.0
    %318 = vmatpush1.xpose.msra.mxu0 0.0
    %319 = vmatprep.subr.mxu0 0.0
    %320 = vmatpush1.xpose.msra.mxu0 0.0
    %321 = vmatprep.subr.mxu0 0.0
    %322 = vmatpush1.xpose.msra.mxu0 0.0
    %323 = vmatprep.subr.mxu0 0.0
    %324 = vmatpush1.xpose.msra.mxu0 0.0
    %325 = vmatprep.subr.mxu0 0.0
    %326 = vmatpush1.xpose.msra.mxu0 0.0
    %327 = vmatprep.subr.mxu0 0.0
    %328 = vmatpush1.xpose.msra.mxu0 0.0
    %329 = vmatprep.subr.mxu0 0.0
    %330 = vmatpush1.xpose.msra.mxu0 0.0
    %331 = vmatprep.subr.mxu0 0.0
    %332 = vmatpush1.xpose.msra.mxu0 0.0
    %333 = vmatprep.subr.mxu0 0.0
    %334 = vmatpush1.xpose.msra.mxu0 0.0
    %335 = vmatprep.subr.mxu0 0.0
    %336 = vmatpush1.xpose.msra.mxu0 0.0
    %337 = vmatprep.subr.mxu0 0.0
    %338 = vmatpush1.xpose.msra.mxu0 0.0
    %339 = vmatprep.subr.mxu0 0.0
    %340 = vmatpush1.xpose.msra.mxu0 0.0
    %341 = vmatprep.subr.mxu0 0.0
    %342 = vmatpush1.xpose.msra.mxu0 0.0
    %343 = vmatprep.subr.mxu0 0.0
    %344 = vmatpush1.xpose.msra.mxu0 0.0
    %345 = vmatprep.subr.mxu0 0.0
    %346 = vmatpush1.xpose.msra.mxu0 0.0
    %347 = vmatprep.mubr.f32.mxu0 0.0
    %348 = vmatmul.mubr.f32.gmra.mrb[0].mxu0 %v188
    %v349 = vpop.f32.mrb[0].mxu0
    %v350 = vadd.f32 0.0, %v349
    %v351 = vpop.f32.mrb[0].mxu0
    %352 = vmatprep.mubr.f32.mxu0 0.0
    %353 = vmatmul.mubr.f32.gmra.mrb[0].mxu0 %v191
    %v354 = vpop.f32.mrb[0].mxu0
    %v355 = vadd.f32 0.0, %v354
    %v356 = vpop.f32.mrb[0].mxu0
    %357 = vmatprep.mubr.f32.mxu0 0.0
    %358 = vmatmul.mubr.f32.gmra.mrb[0].mxu0 %v194
    %v359 = vpop.f32.mrb[0].mxu0
    %v360 = vadd.f32 0.0, %v359
    %v361 = vpop.f32.mrb[0].mxu0
    %362 = vmatprep.mubr.f32.mxu0 0.0
    %363 = vmatmul.mubr.f32.gmra.mrb[0].mxu0 %v197
    %v364 = vpop.f32.mrb[0].mxu0
    %v365 = vadd.f32 0.0, %v364
    %v366 = vpop.f32.mrb[0].mxu0
    %367 = vmatprep.mubr.f32.mxu0 0.0
    %368 = vmatmul.mubr.f32.gmra.mrb[0].mxu0 %v200
    %v369 = vpop.f32.mrb[0].mxu0
    %v370 = vadd.f32 0.0, %v369
    %v371 = vpop.f32.mrb[0].mxu0
    %372 = vmatprep.mubr.f32.mxu0 0.0
    %373 = vmatmul.mubr.f32.gmra.mrb[0].mxu0 %v203
    %v374 = vpop.f32.mrb[0].mxu0
    %v375 = vadd.f32 0.0, %v374
    %v376 = vpop.f32.mrb[0].mxu0
    %377 = vmatprep.mubr.f32.mxu0 0.0
    %378 = vmatmul.mubr.f32.gmra.mrb[0].mxu0 %v206
    %v379 = vpop.f32.mrb[0].mxu0
    %v380 = vadd.f32 0.0, %v379
    %v381 = vpop.f32.mrb[0].mxu0
    %382 = vmatprep.mubr.f32.mxu0 0.0
    %383 = vmatmul.mubr.f32.gmra.mrb[0].mxu0 %v209
    %v384 = vpop.f32.mrb[0].mxu0
    %v385 = vadd.f32 0.0, %v384
    %v386 = vpop.f32.mrb[0].mxu0
    %387 = vmatprep.mubr.f32.mxu0 0.0
    %388 = vmatmul.mubr.f32.gmra.mrb[0].mxu0 %v212
    %v389 = vpop.f32.mrb[0].mxu0
    %v390 = vadd.f32 0.0, %v389
    %v391 = vpop.f32.mrb[0].mxu0
    %392 = vmatprep.mubr.f32.mxu0 0.0
    %393 = vmatmul.mubr.f32.gmra.mrb[0].mxu0 %v215
    %v394 = vpop.f32.mrb[0].mxu0
    %v395 = vadd.f32 0.0, %v394
    %v396 = vpop.f32.mrb[0].mxu0
    %397 = vmatprep.mubr.f32.mxu0 0.0
    %398 = vmatmul.mubr.f32.gmra.mrb[0].mxu0 %v218
    %v399 = vpop.f32.mrb[0].mxu0
    %v400 = vadd.f32 0.0, %v399
    %v401 = vpop.f32.mrb[0].mxu0
    %402 = vmatprep.mubr.f32.mxu0 0.0
    %403 = vmatmul.mubr.f32.gmra.mrb[0].mxu0 %v221
    %v404 = vpop.f32.mrb[0].mxu0
    %v405 = vadd.f32 0.0, %v404
    %v406 = vpop.f32.mrb[0].mxu0
    %407 = vmatprep.mubr.f32.mxu0 0.0
    %408 = vmatmul.mubr.f32.gmra.mrb[0].mxu0 %v224
    %v409 = vpop.f32.mrb[0].mxu0
    %v410 = vadd.f32 0.0, %v409
    %v411 = vpop.f32.mrb[0].mxu0
    %412 = vmatprep.mubr.f32.mxu0 0.0
    %413 = vmatmul.mubr.f32.gmra.mrb[0].mxu0 %v227
    %v414 = vpop.f32.mrb[0].mxu0
    %v415 = vadd.f32 0.0, %v414
    %v416 = vpop.f32.mrb[0].mxu0
    %417 = vmatprep.mubr.f32.mxu0 0.0
    %418 = vmatmul.mubr.f32.gmra.mrb[0].mxu0 %v230
    %v419 = vpop.f32.mrb[0].mxu0
    %v420 = vadd.f32 0.0, %v419
    %v421 = vpop.f32.mrb[0].mxu0
    %422 = vmatprep.mubr.f32.mxu0 0.0
    %423 = vmatmul.mubr.f32.gmra.mrb[0].mxu0 %v233
    %v424 = vpop.f32.mrb[0].mxu0
    %v425 = vadd.f32 0.0, %v424
    %v426 = vpop.f32.mrb[0].mxu0
    %427 = vdwg.mxu0
    %v428 = vmul.f32 %v171, %v171
    %v429 = vmul.f32 %v172, %v172
    %v430 = vmul.f32 %v173, %v173
    %v431 = vmul.f32 %v174, %v174
    %v432 = vmul.f32 %v175, %v175
    %v433 = vmul.f32 %v176, %v176
    %v434 = vmul.f32 %v177, %v177
    %v435 = vmul.f32 %v178, %v178
    %v436 = vmul.f32 %v179, %v179
    %v437 = vmul.f32 %v180, %v180
    %v438 = vmul.f32 %v181, %v181
    %v439 = vmul.f32 %v182, %v182
    %v440 = vmul.f32 %v183, %v183
    %v441 = vmul.f32 %v184, %v184
    %v442 = vmul.f32 %v185, %v185
    %v443 = vmul.f32 %v186, %v186
    %v444 = vsel %vm49, %v428, 0.0
    %445 = vadd.xlane.f32.xlu0 %v444
    %v446 = vpop.xlane.xlu0 %445
    %v447 = vsel %vm49, %v429, 0.0
    %448 = vadd.xlane.f32.xlu0 %v447
    %v449 = vpop.xlane.xlu0 %448
    %v450 = vsel %vm49, %v430, 0.0
    %451 = vadd.xlane.f32.xlu0 %v450
    %v452 = vpop.xlane.xlu0 %451
    %v453 = vsel %vm49, %v431, 0.0
    %454 = vadd.xlane.f32.xlu0 %v453
    %v455 = vpop.xlane.xlu0 %454
    %v456 = vsel %vm49, %v432, 0.0
    %457 = vadd.xlane.f32.xlu0 %v456
    %v458 = vpop.xlane.xlu0 %457
    %v459 = vsel %vm49, %v433, 0.0
    %460 = vadd.xlane.f32.xlu0 %v459
    %v461 = vpop.xlane.xlu0 %460
    %v462 = vsel %vm49, %v434, 0.0
    %463 = vadd.xlane.f32.xlu0 %v462
    %v464 = vpop.xlane.xlu0 %463
    %v465 = vsel %vm49, %v435, 0.0
    %466 = vadd.xlane.f32.xlu0 %v465
    %v467 = vpop.xlane.xlu0 %466
    %v468 = vsel %vm49, %v436, 0.0
    %469 = vadd.xlane.f32.xlu0 %v468
    %v470 = vpop.xlane.xlu0 %469
    %v471 = vsel %vm49, %v437, 0.0
    %472 = vadd.xlane.f32.xlu0 %v471
    %v473 = vpop.xlane.xlu0 %472
    %v474 = vsel %vm49, %v438, 0.0
    %475 = vadd.xlane.f32.xlu0 %v474
    %v476 = vpop.xlane.xlu0 %475
    %v477 = vsel %vm49, %v439, 0.0
    %478 = vadd.xlane.f32.xlu0 %v477
    %v479 = vpop.xlane.xlu0 %478
    %v480 = vsel %vm49, %v440, 0.0
    %481 = vadd.xlane.f32.xlu0 %v480
    %v482 = vpop.xlane.xlu0 %481
    %v483 = vsel %vm49, %v441, 0.0
    %484 = vadd.xlane.f32.xlu0 %v483
    %v485 = vpop.xlane.xlu0 %484
    %v486 = vsel %vm49, %v442, 0.0
    %487 = vadd.xlane.f32.xlu0 %v486
    %v488 = vpop.xlane.xlu0 %487
    %v489 = vsel %vm49, %v443, 0.0
    %490 = vadd.xlane.f32.xlu0 %v489
    %v491 = vpop.xlane.xlu0 %490
    %v492 = vmul.f32 %v350, 2.0
    %v493 = vmul.f32 %v355, 2.0
    %v494 = vmul.f32 %v360, 2.0
    %v495 = vmul.f32 %v365, 2.0
    %v496 = vmul.f32 %v370, 2.0
    %v497 = vmul.f32 %v375, 2.0
    %v498 = vmul.f32 %v380, 2.0
    %v499 = vmul.f32 %v385, 2.0
    %v500 = vmul.f32 %v390, 2.0
    %v501 = vmul.f32 %v395, 2.0
    %v502 = vmul.f32 %v400, 2.0
    %v503 = vmul.f32 %v405, 2.0
    %v504 = vmul.f32 %v410, 2.0
    %v505 = vmul.f32 %v415, 2.0
    %v506 = vmul.f32 %v420, 2.0
    %v507 = vmul.f32 %v425, 2.0
    %v508 = vsub.f32 %v446, %v492
    %v509 = vsub.f32 %v449, %v493
    %v510 = vsub.f32 %v452, %v494
    %v511 = vsub.f32 %v455, %v495
    %v512 = vsub.f32 %v458, %v496
    %v513 = vsub.f32 %v461, %v497
    %v514 = vsub.f32 %v464, %v498
    %v515 = vsub.f32 %v467, %v499
    %v516 = vsub.f32 %v470, %v500
    %v517 = vsub.f32 %v473, %v501
    %v518 = vsub.f32 %v476, %v502
    %v519 = vsub.f32 %v479, %v503
    %v520 = vsub.f32 %v482, %v504
    %v521 = vsub.f32 %v485, %v505
    %v522 = vsub.f32 %v488, %v506
    %v523 = vsub.f32 %v491, %v507
    %v524 = vlaneseq
    %v525 = vshrl.u32 %v524, 7
    %v526 = vsub.s32 0, %v525
    %v527 = vrot.slane %v168, %v526
    %v528 = vadd.f32 %v508, %v527
    %v529 = vadd.f32 %v509, %v527
    %v530 = vadd.f32 %v510, %v527
    %v531 = vadd.f32 %v511, %v527
    %v532 = vadd.f32 %v512, %v527
    %v533 = vadd.f32 %v513, %v527
    %v534 = vadd.f32 %v514, %v527
    %v535 = vadd.f32 %v515, %v527
    %v536 = vadd.f32 %v516, %v527
    %v537 = vadd.f32 %v517, %v527
    %v538 = vadd.f32 %v518, %v527
    %v539 = vadd.f32 %v519, %v527
    %v540 = vadd.f32 %v520, %v527
    %v541 = vadd.f32 %v521, %v527
    %v542 = vadd.f32 %v522, %v527
    %v543 = vadd.f32 %v523, %v527
    %v544 = vlaneseq
    %v545 = vshrl.u32 %v544, 7
    %v546 = vadd.s32 %v545, 8
    %v547 = vadd.s32 %v545, 16
    %v548 = vadd.s32 %v545, 24
    %v549 = vadd.s32 %v545, 32
    %v550 = vadd.s32 %v545, 40
    %v551 = vadd.s32 %v545, 48
    %v552 = vadd.s32 %v545, 56
    %v553 = vadd.s32 %v545, 64
    %v554 = vadd.s32 %v545, 72
    %v555 = vadd.s32 %v545, 80
    %v556 = vadd.s32 %v545, 88
    %v557 = vadd.s32 %v545, 96
    %v558 = vadd.s32 %v545, 104
    %v559 = vadd.s32 %v545, 112
    %v560 = vadd.s32 %v545, 120
    %vm561 = vcmp.eq.s32.totalorder %v545, %v16
    %vm562 = vcmp.eq.s32.totalorder %v546, %v16
    %vm563 = vcmp.eq.s32.totalorder %v547, %v16
    %vm564 = vcmp.eq.s32.totalorder %v548, %v16
    %vm565 = vcmp.eq.s32.totalorder %v549, %v16
    %vm566 = vcmp.eq.s32.totalorder %v550, %v16
    %vm567 = vcmp.eq.s32.totalorder %v551, %v16
    %vm568 = vcmp.eq.s32.totalorder %v552, %v16
    %vm569 = vcmp.eq.s32.totalorder %v553, %v16
    %vm570 = vcmp.eq.s32.totalorder %v554, %v16
    %vm571 = vcmp.eq.s32.totalorder %v555, %v16
    %vm572 = vcmp.eq.s32.totalorder %v556, %v16
    %vm573 = vcmp.eq.s32.totalorder %v557, %v16
    %vm574 = vcmp.eq.s32.totalorder %v558, %v16
    %vm575 = vcmp.eq.s32.totalorder %v559, %v16
    %vm576 = vcmp.eq.s32.totalorder %v560, %v16
    %v577 = vsel %vm561, 3e+38, %v528
    %v578 = vsel %vm562, 3e+38, %v529
    %v579 = vsel %vm563, 3e+38, %v530
    %v580 = vsel %vm564, 3e+38, %v531
    %v581 = vsel %vm565, 3e+38, %v532
    %v582 = vsel %vm566, 3e+38, %v533
    %v583 = vsel %vm567, 3e+38, %v534
    %v584 = vsel %vm568, 3e+38, %v535
    %v585 = vsel %vm569, 3e+38, %v536
    %v586 = vsel %vm570, 3e+38, %v537
    %v587 = vsel %vm571, 3e+38, %v538
    %v588 = vsel %vm572, 3e+38, %v539
    %v589 = vsel %vm573, 3e+38, %v540
    %v590 = vsel %vm574, 3e+38, %v541
    %v591 = vsel %vm575, 3e+38, %v542
    %v592 = vsel %vm576, 3e+38, %v543
    %v593 = vmin.f32 %v580, 3e+38
    %v594 = vmin.f32 %v577, %v581
    %v595 = vmin.f32 %v578, %v582
    %v596 = vmin.f32 %v579, %v583
    %v597 = vmin.f32 %v593, %v584
    %v598 = vmin.f32 %v594, %v585
    %v599 = vmin.f32 %v595, %v586
    %v600 = vmin.f32 %v596, %v587
    %v601 = vmin.f32 %v597, %v588
    %v602 = vmin.f32 %v598, %v589
    %v603 = vmin.f32 %v599, %v590
    %v604 = vmin.f32 %v600, %v591
    %v605 = vmin.f32 %v601, %v592
    %v606 = vmin.f32 %v605, %v602
    %v607 = vmin.f32 %v603, %v604
    %v608 = vmin.f32 %v606, %v607
    %v609 = vrot.slane %v608, 4
    %v610 = vmin.f32 %v608, %v609
    %v611 = vrot.slane %v610, 2
    %v612 = vmin.f32 %v610, %v611
    %v613 = vrot.slane %v612, 1
    %v614 = vmin.f32 %v612, %v613
    %vm615 = vcmp.eq.f32.partialorder %v577, %v614
    %vm616 = vcmp.eq.f32.partialorder %v578, %v614
    %vm617 = vcmp.eq.f32.partialorder %v579, %v614
    %vm618 = vcmp.eq.f32.partialorder %v580, %v614
    %vm619 = vcmp.eq.f32.partialorder %v581, %v614
    %vm620 = vcmp.eq.f32.partialorder %v582, %v614
    %vm621 = vcmp.eq.f32.partialorder %v583, %v614
    %vm622 = vcmp.eq.f32.partialorder %v584, %v614
    %vm623 = vcmp.eq.f32.partialorder %v585, %v614
    %vm624 = vcmp.eq.f32.partialorder %v586, %v614
    %vm625 = vcmp.eq.f32.partialorder %v587, %v614
    %vm626 = vcmp.eq.f32.partialorder %v588, %v614
    %vm627 = vcmp.eq.f32.partialorder %v589, %v614
    %vm628 = vcmp.eq.f32.partialorder %v590, %v614
    %vm629 = vcmp.eq.f32.partialorder %v591, %v614
    %vm630 = vcmp.eq.f32.partialorder %v592, %v614
    %v631 = vsel %vm615, 3e+38, %v577
    %v632 = vsel %vm616, 3e+38, %v578
    %v633 = vsel %vm617, 3e+38, %v579
    %v634 = vsel %vm618, 3e+38, %v580
    %v635 = vsel %vm619, 3e+38, %v581
    %v636 = vsel %vm620, 3e+38, %v582
    %v637 = vsel %vm621, 3e+38, %v583
    %v638 = vsel %vm622, 3e+38, %v584
    %v639 = vsel %vm623, 3e+38, %v585
    %v640 = vsel %vm624, 3e+38, %v586
    %v641 = vsel %vm625, 3e+38, %v587
    %v642 = vsel %vm626, 3e+38, %v588
    %v643 = vsel %vm627, 3e+38, %v589
    %v644 = vsel %vm628, 3e+38, %v590
    %v645 = vsel %vm629, 3e+38, %v591
    %v646 = vsel %vm630, 3e+38, %v592
    %v647 = vmin.f32 %v634, 3e+38
    %v648 = vmin.f32 %v631, %v635
    %v649 = vmin.f32 %v632, %v636
    %v650 = vmin.f32 %v633, %v637
    %v651 = vmin.f32 %v647, %v638
    %v652 = vmin.f32 %v648, %v639
    %v653 = vmin.f32 %v649, %v640
    %v654 = vmin.f32 %v650, %v641
    %v655 = vmin.f32 %v651, %v642
    %v656 = vmin.f32 %v652, %v643
    %v657 = vmin.f32 %v653, %v644
    %v658 = vmin.f32 %v654, %v645
    %v659 = vmin.f32 %v655, %v646
    %v660 = vmin.f32 %v659, %v656
    %v661 = vmin.f32 %v657, %v658
    %v662 = vmin.f32 %v660, %v661
    %v663 = vrot.slane %v662, 4
    %v664 = vmin.f32 %v662, %v663
    %v665 = vrot.slane %v664, 2
    %v666 = vmin.f32 %v664, %v665
    %v667 = vrot.slane %v666, 1
    %v668 = vmin.f32 %v666, %v667
    %vm669 = vcmp.eq.f32.partialorder %v631, %v668
    %vm670 = vcmp.eq.f32.partialorder %v632, %v668
    %vm671 = vcmp.eq.f32.partialorder %v633, %v668
    %vm672 = vcmp.eq.f32.partialorder %v634, %v668
    %vm673 = vcmp.eq.f32.partialorder %v635, %v668
    %vm674 = vcmp.eq.f32.partialorder %v636, %v668
    %vm675 = vcmp.eq.f32.partialorder %v637, %v668
    %vm676 = vcmp.eq.f32.partialorder %v638, %v668
    %vm677 = vcmp.eq.f32.partialorder %v639, %v668
    %vm678 = vcmp.eq.f32.partialorder %v640, %v668
    %vm679 = vcmp.eq.f32.partialorder %v641, %v668
    %vm680 = vcmp.eq.f32.partialorder %v642, %v668
    %vm681 = vcmp.eq.f32.partialorder %v643, %v668
    %vm682 = vcmp.eq.f32.partialorder %v644, %v668
    %vm683 = vcmp.eq.f32.partialorder %v645, %v668
    %vm684 = vcmp.eq.f32.partialorder %v646, %v668
    %v685 = vsel %vm669, 3e+38, %v631
    %v686 = vsel %vm670, 3e+38, %v632
    %v687 = vsel %vm671, 3e+38, %v633
    %v688 = vsel %vm672, 3e+38, %v634
    %v689 = vsel %vm673, 3e+38, %v635
    %v690 = vsel %vm674, 3e+38, %v636
    %v691 = vsel %vm675, 3e+38, %v637
    %v692 = vsel %vm676, 3e+38, %v638
    %v693 = vsel %vm677, 3e+38, %v639
    %v694 = vsel %vm678, 3e+38, %v640
    %v695 = vsel %vm679, 3e+38, %v641
    %v696 = vsel %vm680, 3e+38, %v642
    %v697 = vsel %vm681, 3e+38, %v643
    %v698 = vsel %vm682, 3e+38, %v644
    %v699 = vsel %vm683, 3e+38, %v645
    %v700 = vsel %vm684, 3e+38, %v646
    %v701 = vmin.f32 %v688, 3e+38
    %v702 = vmin.f32 %v685, %v689
    %v703 = vmin.f32 %v686, %v690
    %v704 = vmin.f32 %v687, %v691
    %v705 = vmin.f32 %v701, %v692
    %v706 = vmin.f32 %v702, %v693
    %v707 = vmin.f32 %v703, %v694
    %v708 = vmin.f32 %v704, %v695
    %v709 = vmin.f32 %v705, %v696
    %v710 = vmin.f32 %v706, %v697
    %v711 = vmin.f32 %v707, %v698
    %v712 = vmin.f32 %v708, %v699
    %v713 = vmin.f32 %v709, %v700
    %v714 = vmin.f32 %v713, %v710
    %v715 = vmin.f32 %v711, %v712
    %v716 = vmin.f32 %v714, %v715
    %v717 = vrot.slane %v716, 4
    %v718 = vmin.f32 %v716, %v717
    %v719 = vrot.slane %v718, 2
    %v720 = vmin.f32 %v718, %v719
    %v721 = vrot.slane %v720, 1
    %v722 = vmin.f32 %v720, %v721
    %vm723 = vcmp.eq.f32.partialorder %v685, %v722
    %vm724 = vcmp.eq.f32.partialorder %v686, %v722
    %vm725 = vcmp.eq.f32.partialorder %v687, %v722
    %vm726 = vcmp.eq.f32.partialorder %v688, %v722
    %vm727 = vcmp.eq.f32.partialorder %v689, %v722
    %vm728 = vcmp.eq.f32.partialorder %v690, %v722
    %vm729 = vcmp.eq.f32.partialorder %v691, %v722
    %vm730 = vcmp.eq.f32.partialorder %v692, %v722
    %vm731 = vcmp.eq.f32.partialorder %v693, %v722
    %vm732 = vcmp.eq.f32.partialorder %v694, %v722
    %vm733 = vcmp.eq.f32.partialorder %v695, %v722
    %vm734 = vcmp.eq.f32.partialorder %v696, %v722
    %vm735 = vcmp.eq.f32.partialorder %v697, %v722
    %vm736 = vcmp.eq.f32.partialorder %v698, %v722
    %vm737 = vcmp.eq.f32.partialorder %v699, %v722
    %vm738 = vcmp.eq.f32.partialorder %v700, %v722
    %v739 = vsel %vm723, 3e+38, %v685
    %v740 = vsel %vm724, 3e+38, %v686
    %v741 = vsel %vm725, 3e+38, %v687
    %v742 = vsel %vm726, 3e+38, %v688
    %v743 = vsel %vm727, 3e+38, %v689
    %v744 = vsel %vm728, 3e+38, %v690
    %v745 = vsel %vm729, 3e+38, %v691
    %v746 = vsel %vm730, 3e+38, %v692
    %v747 = vsel %vm731, 3e+38, %v693
    %v748 = vsel %vm732, 3e+38, %v694
    %v749 = vsel %vm733, 3e+38, %v695
    %v750 = vsel %vm734, 3e+38, %v696
    %v751 = vsel %vm735, 3e+38, %v697
    %v752 = vsel %vm736, 3e+38, %v698
    %v753 = vsel %vm737, 3e+38, %v699
    %v754 = vsel %vm738, 3e+38, %v700
    %v755 = vmin.f32 %v742, 3e+38
    %v756 = vmin.f32 %v739, %v743
    %v757 = vmin.f32 %v740, %v744
    %v758 = vmin.f32 %v741, %v745
    %v759 = vmin.f32 %v755, %v746
    %v760 = vmin.f32 %v756, %v747
    %v761 = vmin.f32 %v757, %v748
    %v762 = vmin.f32 %v758, %v749
    %v763 = vmin.f32 %v759, %v750
    %v764 = vmin.f32 %v760, %v751
    %v765 = vmin.f32 %v761, %v752
    %v766 = vmin.f32 %v762, %v753
    %v767 = vmin.f32 %v763, %v754
    %v768 = vmin.f32 %v767, %v764
    %v769 = vmin.f32 %v765, %v766
    %v770 = vmin.f32 %v768, %v769
    %v771 = vrot.slane %v770, 4
    %v772 = vmin.f32 %v770, %v771
    %v773 = vrot.slane %v772, 2
    %v774 = vmin.f32 %v772, %v773
    %v775 = vrot.slane %v774, 1
    %v776 = vmin.f32 %v774, %v775
    %vm777 = vcmp.eq.f32.partialorder %v739, %v776
    %vm778 = vcmp.eq.f32.partialorder %v740, %v776
    %vm779 = vcmp.eq.f32.partialorder %v741, %v776
    %vm780 = vcmp.eq.f32.partialorder %v742, %v776
    %vm781 = vcmp.eq.f32.partialorder %v743, %v776
    %vm782 = vcmp.eq.f32.partialorder %v744, %v776
    %vm783 = vcmp.eq.f32.partialorder %v745, %v776
    %vm784 = vcmp.eq.f32.partialorder %v746, %v776
    %vm785 = vcmp.eq.f32.partialorder %v747, %v776
    %vm786 = vcmp.eq.f32.partialorder %v748, %v776
    %vm787 = vcmp.eq.f32.partialorder %v749, %v776
    %vm788 = vcmp.eq.f32.partialorder %v750, %v776
    %vm789 = vcmp.eq.f32.partialorder %v751, %v776
    %vm790 = vcmp.eq.f32.partialorder %v752, %v776
    %vm791 = vcmp.eq.f32.partialorder %v753, %v776
    %vm792 = vcmp.eq.f32.partialorder %v754, %v776
    %v793 = vsel %vm777, 3e+38, %v739
    %v794 = vsel %vm778, 3e+38, %v740
    %v795 = vsel %vm779, 3e+38, %v741
    %v796 = vsel %vm780, 3e+38, %v742
    %v797 = vsel %vm781, 3e+38, %v743
    %v798 = vsel %vm782, 3e+38, %v744
    %v799 = vsel %vm783, 3e+38, %v745
    %v800 = vsel %vm784, 3e+38, %v746
    %v801 = vsel %vm785, 3e+38, %v747
    %v802 = vsel %vm786, 3e+38, %v748
    %v803 = vsel %vm787, 3e+38, %v749
    %v804 = vsel %vm788, 3e+38, %v750
    %v805 = vsel %vm789, 3e+38, %v751
    %v806 = vsel %vm790, 3e+38, %v752
    %v807 = vsel %vm791, 3e+38, %v753
    %v808 = vsel %vm792, 3e+38, %v754
    %v809 = vmin.f32 %v796, 3e+38
    %v810 = vmin.f32 %v793, %v797
    %v811 = vmin.f32 %v794, %v798
    %v812 = vmin.f32 %v795, %v799
    %v813 = vmin.f32 %v809, %v800
    %v814 = vmin.f32 %v810, %v801
    %v815 = vmin.f32 %v811, %v802
    %v816 = vmin.f32 %v812, %v803
    %v817 = vmin.f32 %v813, %v804
    %v818 = vmin.f32 %v814, %v805
    %v819 = vmin.f32 %v815, %v806
    %v820 = vmin.f32 %v816, %v807
    %v821 = vmin.f32 %v817, %v808
    %v822 = vmin.f32 %v821, %v818
    %v823 = vmin.f32 %v819, %v820
    %v824 = vmin.f32 %v822, %v823
    %v825 = vrot.slane %v824, 4
    %v826 = vmin.f32 %v824, %v825
    %v827 = vrot.slane %v826, 2
    %v828 = vmin.f32 %v826, %v827
    %v829 = vrot.slane %v828, 1
    %v830 = vmin.f32 %v828, %v829
    %vm831 = vcmask 1040384
    %v832 = vsel %vm831, %v614, %v668
    %vm833 = vcmask 1041408
    %v834 = vsel %vm833, %v832, %v722
    %vm835 = vcmask 1042432
    %v836 = vsel %vm835, %v834, %v776
    %vm837 = vcmask 1043456
    %v838 = vsel %vm837, %v836, %v830
    %vm839 = vcmask 1044480
    %v840 = vsel %vm839, %v838, 3e+38
    %v841 = vsel %vm839, %v840, 0.0
    %v842 = vrot.slane %v841, 4
    %v843 = vadd.f32 %v841, %v842
    %v844 = vrot.slane %v843, 2
    %v845 = vadd.f32 %v843, %v844
    %v846 = vrot.slane %v845, 1
    %v847 = vadd.f32 %v845, %v846
    %v848 = vmul.f32 %v847, 0.2
    %849 = vst [vmem:[#allocation2] sm:$0x1] %v848
    %s850 = scalar_lea.vmem %s0, 128
    %v851 = vld [vmem:[%s850] sm:$0xff]
    %v852 = vld [vmem:[%s850 + $0x8] sm:$0xff]
    %v853 = vld [vmem:[%s850 + $0x10] sm:$0xff]
    %v854 = vld [vmem:[%s850 + $0x18] sm:$0xff]
    %v855 = vld [vmem:[%s850 + $0x20] sm:$0xff]
    %v856 = vld [vmem:[%s850 + $0x28] sm:$0xff]
    %v857 = vld [vmem:[%s850 + $0x30] sm:$0xff]
    %v858 = vld [vmem:[%s850 + $0x38] sm:$0xff]
    %v859 = vld [vmem:[%s850 + $0x40] sm:$0xff]
    %v860 = vld [vmem:[%s850 + $0x48] sm:$0xff]
    %v861 = vld [vmem:[%s850 + $0x50] sm:$0xff]
    %v862 = vld [vmem:[%s850 + $0x58] sm:$0xff]
    %v863 = vld [vmem:[%s850 + $0x60] sm:$0xff]
    %v864 = vld [vmem:[%s850 + $0x68] sm:$0xff]
    %v865 = vld [vmem:[%s850 + $0x70] sm:$0xff]
    %v866 = vld [vmem:[%s850 + $0x78] sm:$0xff]
    %v867 = vmul.f32 %v851, %v851
    %v868 = vmul.f32 %v852, %v852
    %v869 = vmul.f32 %v853, %v853
    %v870 = vmul.f32 %v854, %v854
    %v871 = vmul.f32 %v855, %v855
    %v872 = vmul.f32 %v856, %v856
    %v873 = vmul.f32 %v857, %v857
    %v874 = vmul.f32 %v858, %v858
    %v875 = vmul.f32 %v859, %v859
    %v876 = vmul.f32 %v860, %v860
    %v877 = vmul.f32 %v861, %v861
    %v878 = vmul.f32 %v862, %v862
    %v879 = vmul.f32 %v863, %v863
    %v880 = vmul.f32 %v864, %v864
    %v881 = vmul.f32 %v865, %v865
    %v882 = vmul.f32 %v866, %v866
    %v884 = vsel %vm49, %v867, 0
    %v887 = vsel %vm49, %v868, 0
    %v890 = vsel %vm49, %v869, 0
    %v893 = vsel %vm49, %v870, 0
    %v896 = vsel %vm49, %v871, 0
    %v899 = vsel %vm49, %v872, 0
    %v902 = vsel %vm49, %v873, 0
    %v905 = vsel %vm49, %v874, 0
    %v908 = vsel %vm49, %v875, 0
    %v911 = vsel %vm49, %v876, 0
    %v914 = vsel %vm49, %v877, 0
    %v917 = vsel %vm49, %v878, 0
    %v920 = vsel %vm49, %v879, 0
    %v923 = vsel %vm49, %v880, 0
    %v926 = vsel %vm49, %v881, 0
    %v929 = vsel %vm49, %v882, 0
    %931 = vmatprep.subr.mxu0 0.0
    %932 = vmatpush1.xpose.msra.mxu0 %v884
    %933 = vmatprep.subr.mxu0 0.0
    %934 = vmatpush1.xpose.msra.mxu0 %v887
    %935 = vmatprep.subr.mxu0 0.0
    %936 = vmatpush1.xpose.msra.mxu0 %v890
    %937 = vmatprep.subr.mxu0 0.0
    %938 = vmatpush1.xpose.msra.mxu0 %v893
    %939 = vmatprep.subr.mxu0 0.0
    %940 = vmatpush1.xpose.msra.mxu0 %v896
    %941 = vmatprep.subr.mxu0 0.0
    %942 = vmatpush1.xpose.msra.mxu0 %v899
    %943 = vmatprep.subr.mxu0 0.0
    %944 = vmatpush1.xpose.msra.mxu0 %v902
    %945 = vmatprep.subr.mxu0 0.0
    %946 = vmatpush1.xpose.msra.mxu0 %v905
    %947 = vmatprep.subr.mxu0 0.0
    %948 = vmatpush1.xpose.msra.mxu0 %v908
    %949 = vmatprep.subr.mxu0 0.0
    %950 = vmatpush1.xpose.msra.mxu0 %v911
    %951 = vmatprep.subr.mxu0 0.0
    %952 = vmatpush1.xpose.msra.mxu0 %v914
    %953 = vmatprep.subr.mxu0 0.0
    %954 = vmatpush1.xpose.msra.mxu0 %v917
    %955 = vmatprep.subr.mxu0 0.0
    %956 = vmatpush1.xpose.msra.mxu0 %v920
    %957 = vmatprep.subr.mxu0 0.0
    %958 = vmatpush1.xpose.msra.mxu0 %v923
    %959 = vmatprep.subr.mxu0 0.0
    %960 = vmatpush1.xpose.msra.mxu0 %v926
    %961 = vmatprep.subr.mxu0 0.0
    %962 = vmatpush1.xpose.msra.mxu0 %v929
    %963 = vmatprep.subr.mxu0 0.0
    %964 = vmatpush1.xpose.msra.mxu0 0.0
    %965 = vmatprep.subr.mxu0 0.0
    %966 = vmatpush1.xpose.msra.mxu0 0.0
    %967 = vmatprep.subr.mxu0 0.0
    %968 = vmatpush1.xpose.msra.mxu0 0.0
    %969 = vmatprep.subr.mxu0 0.0
    %970 = vmatpush1.xpose.msra.mxu0 0.0
    %971 = vmatprep.subr.mxu0 0.0
    %972 = vmatpush1.xpose.msra.mxu0 0.0
    %973 = vmatprep.subr.mxu0 0.0
    %974 = vmatpush1.xpose.msra.mxu0 0.0
    %975 = vmatprep.subr.mxu0 0.0
    %976 = vmatpush1.xpose.msra.mxu0 0.0
    %977 = vmatprep.subr.mxu0 0.0
    %978 = vmatpush1.xpose.msra.mxu0 0.0
    %979 = vmatprep.subr.mxu0 0.0
    %980 = vmatpush1.xpose.msra.mxu0 0.0
    %981 = vmatprep.subr.mxu0 0.0
    %982 = vmatpush1.xpose.msra.mxu0 0.0
    %983 = vmatprep.subr.mxu0 0.0
    %984 = vmatpush1.xpose.msra.mxu0 0.0
    %985 = vmatprep.subr.mxu0 0.0
    %986 = vmatpush1.xpose.msra.mxu0 0.0
    %987 = vmatprep.subr.mxu0 0.0
    %988 = vmatpush1.xpose.msra.mxu0 0.0
    %989 = vmatprep.subr.mxu0 0.0
    %990 = vmatpush1.xpose.msra.mxu0 0.0
    %991 = vmatprep.subr.mxu0 0.0
    %992 = vmatpush1.xpose.msra.mxu0 0.0
    %993 = vmatprep.subr.mxu0 0.0
    %994 = vmatpush1.xpose.msra.mxu0 0.0
    %995 = vmatprep.mubr.f32.mxu0 0.0
    %996 = vmatmul.mubr.f32.gmra.mrb[0].mxu0 %v51
    %v997 = vpop.f32.mrb[0].mxu0
    %v998 = vadd.f32 0.0, %v997
    %v999 = vpop.f32.mrb[0].mxu0
    %1000 = vdwg.mxu0
    %s1001 = sadd.s32 0, 128
    %s1002 = scalar_lea.vmem %s1, %s1001
    %v1003 = vld [vmem:[%s1002] sm:$0xff]
    %v1004 = vld [vmem:[%s1002 + $0x8] sm:$0xff]
    %v1005 = vld [vmem:[%s1002 + $0x10] sm:$0xff]
    %v1006 = vld [vmem:[%s1002 + $0x18] sm:$0xff]
    %v1007 = vld [vmem:[%s1002 + $0x20] sm:$0xff]
    %v1008 = vld [vmem:[%s1002 + $0x28] sm:$0xff]
    %v1009 = vld [vmem:[%s1002 + $0x30] sm:$0xff]
    %v1010 = vld [vmem:[%s1002 + $0x38] sm:$0xff]
    %v1011 = vld [vmem:[%s1002 + $0x40] sm:$0xff]
    %v1012 = vld [vmem:[%s1002 + $0x48] sm:$0xff]
    %v1013 = vld [vmem:[%s1002 + $0x50] sm:$0xff]
    %v1014 = vld [vmem:[%s1002 + $0x58] sm:$0xff]
    %v1015 = vld [vmem:[%s1002 + $0x60] sm:$0xff]
    %v1016 = vld [vmem:[%s1002 + $0x68] sm:$0xff]
    %v1017 = vld [vmem:[%s1002 + $0x70] sm:$0xff]
    %v1018 = vld [vmem:[%s1002 + $0x78] sm:$0xff]
    %v1020 = vsel %vm49, %v1003, 0
    %v1023 = vsel %vm49, %v1004, 0
    %v1026 = vsel %vm49, %v1005, 0
    %v1029 = vsel %vm49, %v1006, 0
    %v1032 = vsel %vm49, %v1007, 0
    %v1035 = vsel %vm49, %v1008, 0
    %v1038 = vsel %vm49, %v1009, 0
    %v1041 = vsel %vm49, %v1010, 0
    %v1044 = vsel %vm49, %v1011, 0
    %v1047 = vsel %vm49, %v1012, 0
    %v1050 = vsel %vm49, %v1013, 0
    %v1053 = vsel %vm49, %v1014, 0
    %v1056 = vsel %vm49, %v1015, 0
    %v1059 = vsel %vm49, %v1016, 0
    %v1062 = vsel %vm49, %v1017, 0
    %v1065 = vsel %vm49, %v1018, 0
    %v1068 = vsel %vm49, %v851, 0
    %v1071 = vsel %vm49, %v852, 0
    %v1074 = vsel %vm49, %v853, 0
    %v1077 = vsel %vm49, %v854, 0
    %v1080 = vsel %vm49, %v855, 0
    %v1083 = vsel %vm49, %v856, 0
    %v1086 = vsel %vm49, %v857, 0
    %v1089 = vsel %vm49, %v858, 0
    %v1092 = vsel %vm49, %v859, 0
    %v1095 = vsel %vm49, %v860, 0
    %v1098 = vsel %vm49, %v861, 0
    %v1101 = vsel %vm49, %v862, 0
    %v1104 = vsel %vm49, %v863, 0
    %v1107 = vsel %vm49, %v864, 0
    %v1110 = vsel %vm49, %v865, 0
    %v1113 = vsel %vm49, %v866, 0
    %1115 = vmatprep.subr.mxu0 0.0
    %1116 = vmatpush1.xpose.msra.mxu0 %v1068
    %1117 = vmatprep.subr.mxu0 0.0
    %1118 = vmatpush1.xpose.msra.mxu0 %v1071
    %1119 = vmatprep.subr.mxu0 0.0
    %1120 = vmatpush1.xpose.msra.mxu0 %v1074
    %1121 = vmatprep.subr.mxu0 0.0
    %1122 = vmatpush1.xpose.msra.mxu0 %v1077
    %1123 = vmatprep.subr.mxu0 0.0
    %1124 = vmatpush1.xpose.msra.mxu0 %v1080
    %1125 = vmatprep.subr.mxu0 0.0
    %1126 = vmatpush1.xpose.msra.mxu0 %v1083
    %1127 = vmatprep.subr.mxu0 0.0
    %1128 = vmatpush1.xpose.msra.mxu0 %v1086
    %1129 = vmatprep.subr.mxu0 0.0
    %1130 = vmatpush1.xpose.msra.mxu0 %v1089
    %1131 = vmatprep.subr.mxu0 0.0
    %1132 = vmatpush1.xpose.msra.mxu0 %v1092
    %1133 = vmatprep.subr.mxu0 0.0
    %1134 = vmatpush1.xpose.msra.mxu0 %v1095
    %1135 = vmatprep.subr.mxu0 0.0
    %1136 = vmatpush1.xpose.msra.mxu0 %v1098
    %1137 = vmatprep.subr.mxu0 0.0
    %1138 = vmatpush1.xpose.msra.mxu0 %v1101
    %1139 = vmatprep.subr.mxu0 0.0
    %1140 = vmatpush1.xpose.msra.mxu0 %v1104
    %1141 = vmatprep.subr.mxu0 0.0
    %1142 = vmatpush1.xpose.msra.mxu0 %v1107
    %1143 = vmatprep.subr.mxu0 0.0
    %1144 = vmatpush1.xpose.msra.mxu0 %v1110
    %1145 = vmatprep.subr.mxu0 0.0
    %1146 = vmatpush1.xpose.msra.mxu0 %v1113
    %1147 = vmatprep.subr.mxu0 0.0
    %1148 = vmatpush1.xpose.msra.mxu0 0.0
    %1149 = vmatprep.subr.mxu0 0.0
    %1150 = vmatpush1.xpose.msra.mxu0 0.0
    %1151 = vmatprep.subr.mxu0 0.0
    %1152 = vmatpush1.xpose.msra.mxu0 0.0
    %1153 = vmatprep.subr.mxu0 0.0
    %1154 = vmatpush1.xpose.msra.mxu0 0.0
    %1155 = vmatprep.subr.mxu0 0.0
    %1156 = vmatpush1.xpose.msra.mxu0 0.0
    %1157 = vmatprep.subr.mxu0 0.0
    %1158 = vmatpush1.xpose.msra.mxu0 0.0
    %1159 = vmatprep.subr.mxu0 0.0
    %1160 = vmatpush1.xpose.msra.mxu0 0.0
    %1161 = vmatprep.subr.mxu0 0.0
    %1162 = vmatpush1.xpose.msra.mxu0 0.0
    %1163 = vmatprep.subr.mxu0 0.0
    %1164 = vmatpush1.xpose.msra.mxu0 0.0
    %1165 = vmatprep.subr.mxu0 0.0
    %1166 = vmatpush1.xpose.msra.mxu0 0.0
    %1167 = vmatprep.subr.mxu0 0.0
    %1168 = vmatpush1.xpose.msra.mxu0 0.0
    %1169 = vmatprep.subr.mxu0 0.0
    %1170 = vmatpush1.xpose.msra.mxu0 0.0
    %1171 = vmatprep.subr.mxu0 0.0
    %1172 = vmatpush1.xpose.msra.mxu0 0.0
    %1173 = vmatprep.subr.mxu0 0.0
    %1174 = vmatpush1.xpose.msra.mxu0 0.0
    %1175 = vmatprep.subr.mxu0 0.0
    %1176 = vmatpush1.xpose.msra.mxu0 0.0
    %1177 = vmatprep.subr.mxu0 0.0
    %1178 = vmatpush1.xpose.msra.mxu0 0.0
    %1179 = vmatprep.mubr.f32.mxu0 0.0
    %1180 = vmatmul.mubr.f32.gmra.mrb[0].mxu0 %v1020
    %v1181 = vpop.f32.mrb[0].mxu0
    %v1182 = vadd.f32 0.0, %v1181
    %v1183 = vpop.f32.mrb[0].mxu0
    %1184 = vmatprep.mubr.f32.mxu0 0.0
    %1185 = vmatmul.mubr.f32.gmra.mrb[0].mxu0 %v1023
    %v1186 = vpop.f32.mrb[0].mxu0
    %v1187 = vadd.f32 0.0, %v1186
    %v1188 = vpop.f32.mrb[0].mxu0
    %1189 = vmatprep.mubr.f32.mxu0 0.0
    %1190 = vmatmul.mubr.f32.gmra.mrb[0].mxu0 %v1026
    %v1191 = vpop.f32.mrb[0].mxu0
    %v1192 = vadd.f32 0.0, %v1191
    %v1193 = vpop.f32.mrb[0].mxu0
    %1194 = vmatprep.mubr.f32.mxu0 0.0
    %1195 = vmatmul.mubr.f32.gmra.mrb[0].mxu0 %v1029
    %v1196 = vpop.f32.mrb[0].mxu0
    %v1197 = vadd.f32 0.0, %v1196
    %v1198 = vpop.f32.mrb[0].mxu0
    %1199 = vmatprep.mubr.f32.mxu0 0.0
    %1200 = vmatmul.mubr.f32.gmra.mrb[0].mxu0 %v1032
    %v1201 = vpop.f32.mrb[0].mxu0
    %v1202 = vadd.f32 0.0, %v1201
    %v1203 = vpop.f32.mrb[0].mxu0
    %1204 = vmatprep.mubr.f32.mxu0 0.0
    %1205 = vmatmul.mubr.f32.gmra.mrb[0].mxu0 %v1035
    %v1206 = vpop.f32.mrb[0].mxu0
    %v1207 = vadd.f32 0.0, %v1206
    %v1208 = vpop.f32.mrb[0].mxu0
    %1209 = vmatprep.mubr.f32.mxu0 0.0
    %1210 = vmatmul.mubr.f32.gmra.mrb[0].mxu0 %v1038
    %v1211 = vpop.f32.mrb[0].mxu0
    %v1212 = vadd.f32 0.0, %v1211
    %v1213 = vpop.f32.mrb[0].mxu0
    %1214 = vmatprep.mubr.f32.mxu0 0.0
    %1215 = vmatmul.mubr.f32.gmra.mrb[0].mxu0 %v1041
    %v1216 = vpop.f32.mrb[0].mxu0
    %v1217 = vadd.f32 0.0, %v1216
    %v1218 = vpop.f32.mrb[0].mxu0
    %1219 = vmatprep.mubr.f32.mxu0 0.0
    %1220 = vmatmul.mubr.f32.gmra.mrb[0].mxu0 %v1044
    %v1221 = vpop.f32.mrb[0].mxu0
    %v1222 = vadd.f32 0.0, %v1221
    %v1223 = vpop.f32.mrb[0].mxu0
    %1224 = vmatprep.mubr.f32.mxu0 0.0
    %1225 = vmatmul.mubr.f32.gmra.mrb[0].mxu0 %v1047
    %v1226 = vpop.f32.mrb[0].mxu0
    %v1227 = vadd.f32 0.0, %v1226
    %v1228 = vpop.f32.mrb[0].mxu0
    %1229 = vmatprep.mubr.f32.mxu0 0.0
    %1230 = vmatmul.mubr.f32.gmra.mrb[0].mxu0 %v1050
    %v1231 = vpop.f32.mrb[0].mxu0
    %v1232 = vadd.f32 0.0, %v1231
    %v1233 = vpop.f32.mrb[0].mxu0
    %1234 = vmatprep.mubr.f32.mxu0 0.0
    %1235 = vmatmul.mubr.f32.gmra.mrb[0].mxu0 %v1053
    %v1236 = vpop.f32.mrb[0].mxu0
    %v1237 = vadd.f32 0.0, %v1236
    %v1238 = vpop.f32.mrb[0].mxu0
    %1239 = vmatprep.mubr.f32.mxu0 0.0
    %1240 = vmatmul.mubr.f32.gmra.mrb[0].mxu0 %v1056
    %v1241 = vpop.f32.mrb[0].mxu0
    %v1242 = vadd.f32 0.0, %v1241
    %v1243 = vpop.f32.mrb[0].mxu0
    %1244 = vmatprep.mubr.f32.mxu0 0.0
    %1245 = vmatmul.mubr.f32.gmra.mrb[0].mxu0 %v1059
    %v1246 = vpop.f32.mrb[0].mxu0
    %v1247 = vadd.f32 0.0, %v1246
    %v1248 = vpop.f32.mrb[0].mxu0
    %1249 = vmatprep.mubr.f32.mxu0 0.0
    %1250 = vmatmul.mubr.f32.gmra.mrb[0].mxu0 %v1062
    %v1251 = vpop.f32.mrb[0].mxu0
    %v1252 = vadd.f32 0.0, %v1251
    %v1253 = vpop.f32.mrb[0].mxu0
    %1254 = vmatprep.mubr.f32.mxu0 0.0
    %1255 = vmatmul.mubr.f32.gmra.mrb[0].mxu0 %v1065
    %v1256 = vpop.f32.mrb[0].mxu0
    %v1257 = vadd.f32 0.0, %v1256
    %v1258 = vpop.f32.mrb[0].mxu0
    %1259 = vdwg.mxu0
    %v1260 = vmul.f32 %v1003, %v1003
    %v1261 = vmul.f32 %v1004, %v1004
    %v1262 = vmul.f32 %v1005, %v1005
    %v1263 = vmul.f32 %v1006, %v1006
    %v1264 = vmul.f32 %v1007, %v1007
    %v1265 = vmul.f32 %v1008, %v1008
    %v1266 = vmul.f32 %v1009, %v1009
    %v1267 = vmul.f32 %v1010, %v1010
    %v1268 = vmul.f32 %v1011, %v1011
    %v1269 = vmul.f32 %v1012, %v1012
    %v1270 = vmul.f32 %v1013, %v1013
    %v1271 = vmul.f32 %v1014, %v1014
    %v1272 = vmul.f32 %v1015, %v1015
    %v1273 = vmul.f32 %v1016, %v1016
    %v1274 = vmul.f32 %v1017, %v1017
    %v1275 = vmul.f32 %v1018, %v1018
    %v1276 = vsel %vm49, %v1260, 0.0
    %1277 = vadd.xlane.f32.xlu0 %v1276
    %v1278 = vpop.xlane.xlu0 %1277
    %v1279 = vsel %vm49, %v1261, 0.0
    %1280 = vadd.xlane.f32.xlu0 %v1279
    %v1281 = vpop.xlane.xlu0 %1280
    %v1282 = vsel %vm49, %v1262, 0.0
    %1283 = vadd.xlane.f32.xlu0 %v1282
    %v1284 = vpop.xlane.xlu0 %1283
    %v1285 = vsel %vm49, %v1263, 0.0
    %1286 = vadd.xlane.f32.xlu0 %v1285
    %v1287 = vpop.xlane.xlu0 %1286
    %v1288 = vsel %vm49, %v1264, 0.0
    %1289 = vadd.xlane.f32.xlu0 %v1288
    %v1290 = vpop.xlane.xlu0 %1289
    %v1291 = vsel %vm49, %v1265, 0.0
    %1292 = vadd.xlane.f32.xlu0 %v1291
    %v1293 = vpop.xlane.xlu0 %1292
    %v1294 = vsel %vm49, %v1266, 0.0
    %1295 = vadd.xlane.f32.xlu0 %v1294
    %v1296 = vpop.xlane.xlu0 %1295
    %v1297 = vsel %vm49, %v1267, 0.0
    %1298 = vadd.xlane.f32.xlu0 %v1297
    %v1299 = vpop.xlane.xlu0 %1298
    %v1300 = vsel %vm49, %v1268, 0.0
    %1301 = vadd.xlane.f32.xlu0 %v1300
    %v1302 = vpop.xlane.xlu0 %1301
    %v1303 = vsel %vm49, %v1269, 0.0
    %1304 = vadd.xlane.f32.xlu0 %v1303
    %v1305 = vpop.xlane.xlu0 %1304
    %v1306 = vsel %vm49, %v1270, 0.0
    %1307 = vadd.xlane.f32.xlu0 %v1306
    %v1308 = vpop.xlane.xlu0 %1307
    %v1309 = vsel %vm49, %v1271, 0.0
    %1310 = vadd.xlane.f32.xlu0 %v1309
    %v1311 = vpop.xlane.xlu0 %1310
    %v1312 = vsel %vm49, %v1272, 0.0
    %1313 = vadd.xlane.f32.xlu0 %v1312
    %v1314 = vpop.xlane.xlu0 %1313
    %v1315 = vsel %vm49, %v1273, 0.0
    %1316 = vadd.xlane.f32.xlu0 %v1315
    %v1317 = vpop.xlane.xlu0 %1316
    %v1318 = vsel %vm49, %v1274, 0.0
    %1319 = vadd.xlane.f32.xlu0 %v1318
    %v1320 = vpop.xlane.xlu0 %1319
    %v1321 = vsel %vm49, %v1275, 0.0
    %1322 = vadd.xlane.f32.xlu0 %v1321
    %v1323 = vpop.xlane.xlu0 %1322
    %v1324 = vmul.f32 %v1182, 2.0
    %v1325 = vmul.f32 %v1187, 2.0
    %v1326 = vmul.f32 %v1192, 2.0
    %v1327 = vmul.f32 %v1197, 2.0
    %v1328 = vmul.f32 %v1202, 2.0
    %v1329 = vmul.f32 %v1207, 2.0
    %v1330 = vmul.f32 %v1212, 2.0
    %v1331 = vmul.f32 %v1217, 2.0
    %v1332 = vmul.f32 %v1222, 2.0
    %v1333 = vmul.f32 %v1227, 2.0
    %v1334 = vmul.f32 %v1232, 2.0
    %v1335 = vmul.f32 %v1237, 2.0
    %v1336 = vmul.f32 %v1242, 2.0
    %v1337 = vmul.f32 %v1247, 2.0
    %v1338 = vmul.f32 %v1252, 2.0
    %v1339 = vmul.f32 %v1257, 2.0
    %v1340 = vsub.f32 %v1278, %v1324
    %v1341 = vsub.f32 %v1281, %v1325
    %v1342 = vsub.f32 %v1284, %v1326
    %v1343 = vsub.f32 %v1287, %v1327
    %v1344 = vsub.f32 %v1290, %v1328
    %v1345 = vsub.f32 %v1293, %v1329
    %v1346 = vsub.f32 %v1296, %v1330
    %v1347 = vsub.f32 %v1299, %v1331
    %v1348 = vsub.f32 %v1302, %v1332
    %v1349 = vsub.f32 %v1305, %v1333
    %v1350 = vsub.f32 %v1308, %v1334
    %v1351 = vsub.f32 %v1311, %v1335
    %v1352 = vsub.f32 %v1314, %v1336
    %v1353 = vsub.f32 %v1317, %v1337
    %v1354 = vsub.f32 %v1320, %v1338
    %v1355 = vsub.f32 %v1323, %v1339
    %v1356 = vlaneseq
    %v1357 = vshrl.u32 %v1356, 7
    %v1358 = vsub.s32 0, %v1357
    %v1359 = vrot.slane %v998, %v1358
    %v1360 = vadd.f32 %v1340, %v1359
    %v1361 = vadd.f32 %v1341, %v1359
    %v1362 = vadd.f32 %v1342, %v1359
    %v1363 = vadd.f32 %v1343, %v1359
    %v1364 = vadd.f32 %v1344, %v1359
    %v1365 = vadd.f32 %v1345, %v1359
    %v1366 = vadd.f32 %v1346, %v1359
    %v1367 = vadd.f32 %v1347, %v1359
    %v1368 = vadd.f32 %v1348, %v1359
    %v1369 = vadd.f32 %v1349, %v1359
    %v1370 = vadd.f32 %v1350, %v1359
    %v1371 = vadd.f32 %v1351, %v1359
    %v1372 = vadd.f32 %v1352, %v1359
    %v1373 = vadd.f32 %v1353, %v1359
    %v1374 = vadd.f32 %v1354, %v1359
    %v1375 = vadd.f32 %v1355, %v1359
    %v1376 = vsel %vm561, 3e+38, %v1360
    %v1377 = vsel %vm562, 3e+38, %v1361
    %v1378 = vsel %vm563, 3e+38, %v1362
    %v1379 = vsel %vm564, 3e+38, %v1363
    %v1380 = vsel %vm565, 3e+38, %v1364
    %v1381 = vsel %vm566, 3e+38, %v1365
    %v1382 = vsel %vm567, 3e+38, %v1366
    %v1383 = vsel %vm568, 3e+38, %v1367
    %v1384 = vsel %vm569, 3e+38, %v1368
    %v1385 = vsel %vm570, 3e+38, %v1369
    %v1386 = vsel %vm571, 3e+38, %v1370
    %v1387 = vsel %vm572, 3e+38, %v1371
    %v1388 = vsel %vm573, 3e+38, %v1372
    %v1389 = vsel %vm574, 3e+38, %v1373
    %v1390 = vsel %vm575, 3e+38, %v1374
    %v1391 = vsel %vm576, 3e+38, %v1375
    %v1392 = vmin.f32 %v1379, 3e+38
    %v1393 = vmin.f32 %v1376, %v1380
    %v1394 = vmin.f32 %v1377, %v1381
    %v1395 = vmin.f32 %v1378, %v1382
    %v1396 = vmin.f32 %v1392, %v1383
    %v1397 = vmin.f32 %v1393, %v1384
    %v1398 = vmin.f32 %v1394, %v1385
    %v1399 = vmin.f32 %v1395, %v1386
    %v1400 = vmin.f32 %v1396, %v1387
    %v1401 = vmin.f32 %v1397, %v1388
    %v1402 = vmin.f32 %v1398, %v1389
    %v1403 = vmin.f32 %v1399, %v1390
    %v1404 = vmin.f32 %v1400, %v1391
    %v1405 = vmin.f32 %v1404, %v1401
    %v1406 = vmin.f32 %v1402, %v1403
    %v1407 = vmin.f32 %v1405, %v1406
    %v1408 = vrot.slane %v1407, 4
    %v1409 = vmin.f32 %v1407, %v1408
    %v1410 = vrot.slane %v1409, 2
    %v1411 = vmin.f32 %v1409, %v1410
    %v1412 = vrot.slane %v1411, 1
    %v1413 = vmin.f32 %v1411, %v1412
    %vm1414 = vcmp.eq.f32.partialorder %v1376, %v1413
    %vm1415 = vcmp.eq.f32.partialorder %v1377, %v1413
    %vm1416 = vcmp.eq.f32.partialorder %v1378, %v1413
    %vm1417 = vcmp.eq.f32.partialorder %v1379, %v1413
    %vm1418 = vcmp.eq.f32.partialorder %v1380, %v1413
    %vm1419 = vcmp.eq.f32.partialorder %v1381, %v1413
    %vm1420 = vcmp.eq.f32.partialorder %v1382, %v1413
    %vm1421 = vcmp.eq.f32.partialorder %v1383, %v1413
    %vm1422 = vcmp.eq.f32.partialorder %v1384, %v1413
    %vm1423 = vcmp.eq.f32.partialorder %v1385, %v1413
    %vm1424 = vcmp.eq.f32.partialorder %v1386, %v1413
    %vm1425 = vcmp.eq.f32.partialorder %v1387, %v1413
    %vm1426 = vcmp.eq.f32.partialorder %v1388, %v1413
    %vm1427 = vcmp.eq.f32.partialorder %v1389, %v1413
    %vm1428 = vcmp.eq.f32.partialorder %v1390, %v1413
    %vm1429 = vcmp.eq.f32.partialorder %v1391, %v1413
    %v1430 = vsel %vm1414, 3e+38, %v1376
    %v1431 = vsel %vm1415, 3e+38, %v1377
    %v1432 = vsel %vm1416, 3e+38, %v1378
    %v1433 = vsel %vm1417, 3e+38, %v1379
    %v1434 = vsel %vm1418, 3e+38, %v1380
    %v1435 = vsel %vm1419, 3e+38, %v1381
    %v1436 = vsel %vm1420, 3e+38, %v1382
    %v1437 = vsel %vm1421, 3e+38, %v1383
    %v1438 = vsel %vm1422, 3e+38, %v1384
    %v1439 = vsel %vm1423, 3e+38, %v1385
    %v1440 = vsel %vm1424, 3e+38, %v1386
    %v1441 = vsel %vm1425, 3e+38, %v1387
    %v1442 = vsel %vm1426, 3e+38, %v1388
    %v1443 = vsel %vm1427, 3e+38, %v1389
    %v1444 = vsel %vm1428, 3e+38, %v1390
    %v1445 = vsel %vm1429, 3e+38, %v1391
    %v1446 = vmin.f32 %v1433, 3e+38
    %v1447 = vmin.f32 %v1430, %v1434
    %v1448 = vmin.f32 %v1431, %v1435
    %v1449 = vmin.f32 %v1432, %v1436
    %v1450 = vmin.f32 %v1446, %v1437
    %v1451 = vmin.f32 %v1447, %v1438
    %v1452 = vmin.f32 %v1448, %v1439
    %v1453 = vmin.f32 %v1449, %v1440
    %v1454 = vmin.f32 %v1450, %v1441
    %v1455 = vmin.f32 %v1451, %v1442
    %v1456 = vmin.f32 %v1452, %v1443
    %v1457 = vmin.f32 %v1453, %v1444
    %v1458 = vmin.f32 %v1454, %v1445
    %v1459 = vmin.f32 %v1458, %v1455
    %v1460 = vmin.f32 %v1456, %v1457
    %v1461 = vmin.f32 %v1459, %v1460
    %v1462 = vrot.slane %v1461, 4
    %v1463 = vmin.f32 %v1461, %v1462
    %v1464 = vrot.slane %v1463, 2
    %v1465 = vmin.f32 %v1463, %v1464
    %v1466 = vrot.slane %v1465, 1
    %v1467 = vmin.f32 %v1465, %v1466
    %vm1468 = vcmp.eq.f32.partialorder %v1430, %v1467
    %vm1469 = vcmp.eq.f32.partialorder %v1431, %v1467
    %vm1470 = vcmp.eq.f32.partialorder %v1432, %v1467
    %vm1471 = vcmp.eq.f32.partialorder %v1433, %v1467
    %vm1472 = vcmp.eq.f32.partialorder %v1434, %v1467
    %vm1473 = vcmp.eq.f32.partialorder %v1435, %v1467
    %vm1474 = vcmp.eq.f32.partialorder %v1436, %v1467
    %vm1475 = vcmp.eq.f32.partialorder %v1437, %v1467
    %vm1476 = vcmp.eq.f32.partialorder %v1438, %v1467
    %vm1477 = vcmp.eq.f32.partialorder %v1439, %v1467
    %vm1478 = vcmp.eq.f32.partialorder %v1440, %v1467
    %vm1479 = vcmp.eq.f32.partialorder %v1441, %v1467
    %vm1480 = vcmp.eq.f32.partialorder %v1442, %v1467
    %vm1481 = vcmp.eq.f32.partialorder %v1443, %v1467
    %vm1482 = vcmp.eq.f32.partialorder %v1444, %v1467
    %vm1483 = vcmp.eq.f32.partialorder %v1445, %v1467
    %v1484 = vsel %vm1468, 3e+38, %v1430
    %v1485 = vsel %vm1469, 3e+38, %v1431
    %v1486 = vsel %vm1470, 3e+38, %v1432
    %v1487 = vsel %vm1471, 3e+38, %v1433
    %v1488 = vsel %vm1472, 3e+38, %v1434
    %v1489 = vsel %vm1473, 3e+38, %v1435
    %v1490 = vsel %vm1474, 3e+38, %v1436
    %v1491 = vsel %vm1475, 3e+38, %v1437
    %v1492 = vsel %vm1476, 3e+38, %v1438
    %v1493 = vsel %vm1477, 3e+38, %v1439
    %v1494 = vsel %vm1478, 3e+38, %v1440
    %v1495 = vsel %vm1479, 3e+38, %v1441
    %v1496 = vsel %vm1480, 3e+38, %v1442
    %v1497 = vsel %vm1481, 3e+38, %v1443
    %v1498 = vsel %vm1482, 3e+38, %v1444
    %v1499 = vsel %vm1483, 3e+38, %v1445
    %v1500 = vmin.f32 %v1487, 3e+38
    %v1501 = vmin.f32 %v1484, %v1488
    %v1502 = vmin.f32 %v1485, %v1489
    %v1503 = vmin.f32 %v1486, %v1490
    %v1504 = vmin.f32 %v1500, %v1491
    %v1505 = vmin.f32 %v1501, %v1492
    %v1506 = vmin.f32 %v1502, %v1493
    %v1507 = vmin.f32 %v1503, %v1494
    %v1508 = vmin.f32 %v1504, %v1495
    %v1509 = vmin.f32 %v1505, %v1496
    %v1510 = vmin.f32 %v1506, %v1497
    %v1511 = vmin.f32 %v1507, %v1498
    %v1512 = vmin.f32 %v1508, %v1499
    %v1513 = vmin.f32 %v1512, %v1509
    %v1514 = vmin.f32 %v1510, %v1511
    %v1515 = vmin.f32 %v1513, %v1514
    %v1516 = vrot.slane %v1515, 4
    %v1517 = vmin.f32 %v1515, %v1516
    %v1518 = vrot.slane %v1517, 2
    %v1519 = vmin.f32 %v1517, %v1518
    %v1520 = vrot.slane %v1519, 1
    %v1521 = vmin.f32 %v1519, %v1520
    %vm1522 = vcmp.eq.f32.partialorder %v1484, %v1521
    %vm1523 = vcmp.eq.f32.partialorder %v1485, %v1521
    %vm1524 = vcmp.eq.f32.partialorder %v1486, %v1521
    %vm1525 = vcmp.eq.f32.partialorder %v1487, %v1521
    %vm1526 = vcmp.eq.f32.partialorder %v1488, %v1521
    %vm1527 = vcmp.eq.f32.partialorder %v1489, %v1521
    %vm1528 = vcmp.eq.f32.partialorder %v1490, %v1521
    %vm1529 = vcmp.eq.f32.partialorder %v1491, %v1521
    %vm1530 = vcmp.eq.f32.partialorder %v1492, %v1521
    %vm1531 = vcmp.eq.f32.partialorder %v1493, %v1521
    %vm1532 = vcmp.eq.f32.partialorder %v1494, %v1521
    %vm1533 = vcmp.eq.f32.partialorder %v1495, %v1521
    %vm1534 = vcmp.eq.f32.partialorder %v1496, %v1521
    %vm1535 = vcmp.eq.f32.partialorder %v1497, %v1521
    %vm1536 = vcmp.eq.f32.partialorder %v1498, %v1521
    %vm1537 = vcmp.eq.f32.partialorder %v1499, %v1521
    %v1538 = vsel %vm1522, 3e+38, %v1484
    %v1539 = vsel %vm1523, 3e+38, %v1485
    %v1540 = vsel %vm1524, 3e+38, %v1486
    %v1541 = vsel %vm1525, 3e+38, %v1487
    %v1542 = vsel %vm1526, 3e+38, %v1488
    %v1543 = vsel %vm1527, 3e+38, %v1489
    %v1544 = vsel %vm1528, 3e+38, %v1490
    %v1545 = vsel %vm1529, 3e+38, %v1491
    %v1546 = vsel %vm1530, 3e+38, %v1492
    %v1547 = vsel %vm1531, 3e+38, %v1493
    %v1548 = vsel %vm1532, 3e+38, %v1494
    %v1549 = vsel %vm1533, 3e+38, %v1495
    %v1550 = vsel %vm1534, 3e+38, %v1496
    %v1551 = vsel %vm1535, 3e+38, %v1497
    %v1552 = vsel %vm1536, 3e+38, %v1498
    %v1553 = vsel %vm1537, 3e+38, %v1499
    %v1554 = vmin.f32 %v1541, 3e+38
    %v1555 = vmin.f32 %v1538, %v1542
    %v1556 = vmin.f32 %v1539, %v1543
    %v1557 = vmin.f32 %v1540, %v1544
    %v1558 = vmin.f32 %v1554, %v1545
    %v1559 = vmin.f32 %v1555, %v1546
    %v1560 = vmin.f32 %v1556, %v1547
    %v1561 = vmin.f32 %v1557, %v1548
    %v1562 = vmin.f32 %v1558, %v1549
    %v1563 = vmin.f32 %v1559, %v1550
    %v1564 = vmin.f32 %v1560, %v1551
    %v1565 = vmin.f32 %v1561, %v1552
    %v1566 = vmin.f32 %v1562, %v1553
    %v1567 = vmin.f32 %v1566, %v1563
    %v1568 = vmin.f32 %v1564, %v1565
    %v1569 = vmin.f32 %v1567, %v1568
    %v1570 = vrot.slane %v1569, 4
    %v1571 = vmin.f32 %v1569, %v1570
    %v1572 = vrot.slane %v1571, 2
    %v1573 = vmin.f32 %v1571, %v1572
    %v1574 = vrot.slane %v1573, 1
    %v1575 = vmin.f32 %v1573, %v1574
    %vm1576 = vcmp.eq.f32.partialorder %v1538, %v1575
    %vm1577 = vcmp.eq.f32.partialorder %v1539, %v1575
    %vm1578 = vcmp.eq.f32.partialorder %v1540, %v1575
    %vm1579 = vcmp.eq.f32.partialorder %v1541, %v1575
    %vm1580 = vcmp.eq.f32.partialorder %v1542, %v1575
    %vm1581 = vcmp.eq.f32.partialorder %v1543, %v1575
    %vm1582 = vcmp.eq.f32.partialorder %v1544, %v1575
    %vm1583 = vcmp.eq.f32.partialorder %v1545, %v1575
    %vm1584 = vcmp.eq.f32.partialorder %v1546, %v1575
    %vm1585 = vcmp.eq.f32.partialorder %v1547, %v1575
    %vm1586 = vcmp.eq.f32.partialorder %v1548, %v1575
    %vm1587 = vcmp.eq.f32.partialorder %v1549, %v1575
    %vm1588 = vcmp.eq.f32.partialorder %v1550, %v1575
    %vm1589 = vcmp.eq.f32.partialorder %v1551, %v1575
    %vm1590 = vcmp.eq.f32.partialorder %v1552, %v1575
    %vm1591 = vcmp.eq.f32.partialorder %v1553, %v1575
    %v1592 = vsel %vm1576, 3e+38, %v1538
    %v1593 = vsel %vm1577, 3e+38, %v1539
    %v1594 = vsel %vm1578, 3e+38, %v1540
    %v1595 = vsel %vm1579, 3e+38, %v1541
    %v1596 = vsel %vm1580, 3e+38, %v1542
    %v1597 = vsel %vm1581, 3e+38, %v1543
    %v1598 = vsel %vm1582, 3e+38, %v1544
    %v1599 = vsel %vm1583, 3e+38, %v1545
    %v1600 = vsel %vm1584, 3e+38, %v1546
    %v1601 = vsel %vm1585, 3e+38, %v1547
    %v1602 = vsel %vm1586, 3e+38, %v1548
    %v1603 = vsel %vm1587, 3e+38, %v1549
    %v1604 = vsel %vm1588, 3e+38, %v1550
    %v1605 = vsel %vm1589, 3e+38, %v1551
    %v1606 = vsel %vm1590, 3e+38, %v1552
    %v1607 = vsel %vm1591, 3e+38, %v1553
    %v1608 = vmin.f32 %v1595, 3e+38
    %v1609 = vmin.f32 %v1592, %v1596
    %v1610 = vmin.f32 %v1593, %v1597
    %v1611 = vmin.f32 %v1594, %v1598
    %v1612 = vmin.f32 %v1608, %v1599
    %v1613 = vmin.f32 %v1609, %v1600
    %v1614 = vmin.f32 %v1610, %v1601
    %v1615 = vmin.f32 %v1611, %v1602
    %v1616 = vmin.f32 %v1612, %v1603
    %v1617 = vmin.f32 %v1613, %v1604
    %v1618 = vmin.f32 %v1614, %v1605
    %v1619 = vmin.f32 %v1615, %v1606
    %v1620 = vmin.f32 %v1616, %v1607
    %v1621 = vmin.f32 %v1620, %v1617
    %v1622 = vmin.f32 %v1618, %v1619
    %v1623 = vmin.f32 %v1621, %v1622
    %v1624 = vrot.slane %v1623, 4
    %v1625 = vmin.f32 %v1623, %v1624
    %v1626 = vrot.slane %v1625, 2
    %v1627 = vmin.f32 %v1625, %v1626
    %v1628 = vrot.slane %v1627, 1
    %v1629 = vmin.f32 %v1627, %v1628
    %v1630 = vsel %vm831, %v1413, %v1467
    %v1631 = vsel %vm833, %v1630, %v1521
    %v1632 = vsel %vm835, %v1631, %v1575
    %v1633 = vsel %vm837, %v1632, %v1629
    %v1634 = vsel %vm839, %v1633, 3e+38
    %v1635 = vsel %vm839, %v1634, 0.0
    %v1636 = vrot.slane %v1635, 4
    %v1637 = vadd.f32 %v1635, %v1636
    %v1638 = vrot.slane %v1637, 2
    %v1639 = vadd.f32 %v1637, %v1638
    %v1640 = vrot.slane %v1639, 1
    %v1641 = vadd.f32 %v1639, %v1640
    %v1642 = vmul.f32 %v1641, 0.2
    %s1643 = scalar_lea.vmem [#allocation2], 1
    %1644 = vst [vmem:[%s1643] sm:$0x1] %v1642
    // Predicated region
    $region10: #{tpu_custom_call.1} parent=1 // pred_check
      _
    $region11: #{tpu_custom_call.1} parent=1 // pred_check_branch
      %1646 = sbr.rel (0) target = $region13
    $region12: #{tpu_custom_call.1} parent=1 // pred_region
      %s1648 = ssub.s32 32, 32
      %1649 = vsyncadd [#allocation3], %s1648
      %s1650 = sshll.u32 [#allocation2], 4
      %s1651 = int_to_ptr.vmem [resolvable:$true] %s1650
      %1656 = dma.vmem_to_hbm [thread:$0]  %s1651, 32, %s2, [#allocation3], 16, 16, 1
    $region13: #{tpu_custom_call.1} parent=1 // pred_fallthru
      _
    // Predicated region
    $region14: #{tpu_custom_call.1} parent=1 // pred_check
      _
    $region15: #{tpu_custom_call.1} parent=1 // pred_check_branch
      %1658 = sbr.rel (0) target = $region17
    $region16: #{tpu_custom_call.1} parent=1 // pred_region
      %1659 = dma.done [#allocation3], 32
    $region17: #{tpu_custom_call.1} parent=1 // pred_fallthru
      _
    %1660 = vsyncpa [#allocation3], 1

// kernel: tpu_custom_call.1
$region0: #{tpu_custom_call.1}
  #allocation0 [shape = 'u32[]', space=smem, size = 0x4, offset = 0x4, fixed_abs, tag = 'smem constant byte address 0x4 - core index']
  #allocation1 [shape = 'u32[144,128]{1,0:T(1,128)}', space=vmem, size = 0x12000, scoped, tag = 'internal scratch']
  %s0 = inlined_call_operand.vmem [shape: f32[2,128,3], index: 0, kind: input, shape index: {}]
  %s1 = inlined_call_operand.vmem [shape: f32[2,128,3], index: 1, kind: input, shape index: {}]
  %s2 = inlined_call_operand.hbm [shape: f32[2,1,128], index: 2, kind: output, shape index: {}]
  %s3 = sld [smem:[#allocation0]]
  $region18: #{tpu_custom_call.1} parent=0
    _
  %s5 = ssub.s32 1, %s3
  %s6 = scalar_select 0, %s5, %s3
  $region1: #{tpu_custom_call.1} parent=0
    #allocation2 [shape = 'u8[1024]{0}', space=vmem, size = 0x400, scoped, tag = 'output window, operand 0, single buffered']
    #allocation3 [shape = 's32[1]{0}', space=sflag, size = 0x4, scoped, tag = 'scoped memory for tpu_custom_call.1']
    %7 = vsyncpa [#allocation3], 0
    // Predicated region
    $region2: #{tpu_custom_call.1} parent=1 // pred_check
      _
    $region3: #{tpu_custom_call.1} parent=1 // pred_check_branch
      %9 = sbr.rel (0) target = $region5
    $region4: #{tpu_custom_call.1} parent=1 // pred_region
      _
    $region5: #{tpu_custom_call.1} parent=1 // pred_fallthru
      _
    // Predicated region
    $region6: #{tpu_custom_call.1} parent=1 // pred_check
      _
    $region7: #{tpu_custom_call.1} parent=1 // pred_check_branch
      %11 = sbr.rel (0) target = $region9
    $region8: #{tpu_custom_call.1} parent=1 // pred_region
      _
    $region9: #{tpu_custom_call.1} parent=1 // pred_fallthru
      _
    %s12 = smul.u32 0, 128
    %v13 = vlaneseq
    %v14 = vand.u32 %v13, 127
    %v15 = vstv %s12
    %v16 = vadd.s32 %v15, %v14
    %v17 = vld [vmem:[%s0] sm:$0xff]
    %v18 = vld [vmem:[%s0 + $0x8] sm:$0xff]
    %v19 = vld [vmem:[%s0 + $0x10] sm:$0xff]
    %v20 = vld [vmem:[%s0 + $0x18] sm:$0xff]
    %v21 = vld [vmem:[%s0 + $0x20] sm:$0xff]
    %v22 = vld [vmem:[%s0 + $0x28] sm:$0xff]
    %v23 = vld [vmem:[%s0 + $0x30] sm:$0xff]
    %v24 = vld [vmem:[%s0 + $0x38] sm:$0xff]
    %v25 = vld [vmem:[%s0 + $0x40] sm:$0xff]
    %v26 = vld [vmem:[%s0 + $0x48] sm:$0xff]
    %v27 = vld [vmem:[%s0 + $0x50] sm:$0xff]
    %v28 = vld [vmem:[%s0 + $0x58] sm:$0xff]
    %v29 = vld [vmem:[%s0 + $0x60] sm:$0xff]
    %v30 = vld [vmem:[%s0 + $0x68] sm:$0xff]
    %v31 = vld [vmem:[%s0 + $0x70] sm:$0xff]
    %v32 = vld [vmem:[%s0 + $0x78] sm:$0xff]
    %v33 = vmul.f32 %v17, %v17
    %v34 = vmul.f32 %v18, %v18
    %v35 = vmul.f32 %v19, %v19
    %v36 = vmul.f32 %v20, %v20
    %v37 = vmul.f32 %v21, %v21
    %v38 = vmul.f32 %v22, %v22
    %v39 = vmul.f32 %v23, %v23
    %v40 = vmul.f32 %v24, %v24
    %v41 = vmul.f32 %v25, %v25
    %v42 = vmul.f32 %v26, %v26
    %v43 = vmul.f32 %v27, %v27
    %v44 = vmul.f32 %v28, %v28
    %v45 = vmul.f32 %v29, %v29
    %v46 = vmul.f32 %v30, %v30
    %v47 = vmul.f32 %v31, %v31
    %v48 = vmul.f32 %v32, %v32
    %vm49 = vcmask 23552
    %v51 = vsel %vm49, 1.0, 0
    %v54 = vsel %vm49, %v33, 0
    %v57 = vsel %vm49, %v34, 0
    %v60 = vsel %vm49, %v35, 0
    %v63 = vsel %vm49, %v36, 0
    %v66 = vsel %vm49, %v37, 0
    %v69 = vsel %vm49, %v38, 0
    %v72 = vsel %vm49, %v39, 0
    %v75 = vsel %vm49, %v40, 0
    %v78 = vsel %vm49, %v41, 0
    %v81 = vsel %vm49, %v42, 0
    %v84 = vsel %vm49, %v43, 0
    %v87 = vsel %vm49, %v44, 0
    %v90 = vsel %vm49, %v45, 0
    %v93 = vsel %vm49, %v46, 0
    %v96 = vsel %vm49, %v47, 0
    %v99 = vsel %vm49, %v48, 0
    %101 = vmatprep.subr.mxu0 0.0
    %102 = vmatpush1.xpose.msra.mxu0 %v54
    %103 = vmatprep.subr.mxu0 0.0
    %104 = vmatpush1.xpose.msra.mxu0 %v57
    %105 = vmatprep.subr.mxu0 0.0
    %106 = vmatpush1.xpose.msra.mxu0 %v60
    %107 = vmatprep.subr.mxu0 0.0
    %108 = vmatpush1.xpose.msra.mxu0 %v63
    %109 = vmatprep.subr.mxu0 0.0
    %110 = vmatpush1.xpose.msra.mxu0 %v66
    %111 = vmatprep.subr.mxu0 0.0
    %112 = vmatpush1.xpose.msra.mxu0 %v69
    %113 = vmatprep.subr.mxu0 0.0
    %114 = vmatpush1.xpose.msra.mxu0 %v72
    %115 = vmatprep.subr.mxu0 0.0
    %116 = vmatpush1.xpose.msra.mxu0 %v75
    %117 = vmatprep.subr.mxu0 0.0
    %118 = vmatpush1.xpose.msra.mxu0 %v78
    %119 = vmatprep.subr.mxu0 0.0
    %120 = vmatpush1.xpose.msra.mxu0 %v81
    %121 = vmatprep.subr.mxu0 0.0
    %122 = vmatpush1.xpose.msra.mxu0 %v84
    %123 = vmatprep.subr.mxu0 0.0
    %124 = vmatpush1.xpose.msra.mxu0 %v87
    %125 = vmatprep.subr.mxu0 0.0
    %126 = vmatpush1.xpose.msra.mxu0 %v90
    %127 = vmatprep.subr.mxu0 0.0
    %128 = vmatpush1.xpose.msra.mxu0 %v93
    %129 = vmatprep.subr.mxu0 0.0
    %130 = vmatpush1.xpose.msra.mxu0 %v96
    %131 = vmatprep.subr.mxu0 0.0
    %132 = vmatpush1.xpose.msra.mxu0 %v99
    %133 = vmatprep.subr.mxu0 0.0
    %134 = vmatpush1.xpose.msra.mxu0 0.0
    %135 = vmatprep.subr.mxu0 0.0
    %136 = vmatpush1.xpose.msra.mxu0 0.0
    %137 = vmatprep.subr.mxu0 0.0
    %138 = vmatpush1.xpose.msra.mxu0 0.0
    %139 = vmatprep.subr.mxu0 0.0
    %140 = vmatpush1.xpose.msra.mxu0 0.0
    %141 = vmatprep.subr.mxu0 0.0
    %142 = vmatpush1.xpose.msra.mxu0 0.0
    %143 = vmatprep.subr.mxu0 0.0
    %144 = vmatpush1.xpose.msra.mxu0 0.0
    %145 = vmatprep.subr.mxu0 0.0
    %146 = vmatpush1.xpose.msra.mxu0 0.0
    %147 = vmatprep.subr.mxu0 0.0
    %148 = vmatpush1.xpose.msra.mxu0 0.0
    %149 = vmatprep.subr.mxu0 0.0
    %150 = vmatpush1.xpose.msra.mxu0 0.0
    %151 = vmatprep.subr.mxu0 0.0
    %152 = vmatpush1.xpose.msra.mxu0 0.0
    %153 = vmatprep.subr.mxu0 0.0
    %154 = vmatpush1.xpose.msra.mxu0 0.0
    %155 = vmatprep.subr.mxu0 0.0
    %156 = vmatpush1.xpose.msra.mxu0 0.0
    %157 = vmatprep.subr.mxu0 0.0
    %158 = vmatpush1.xpose.msra.mxu0 0.0
    %159 = vmatprep.subr.mxu0 0.0
    %160 = vmatpush1.xpose.msra.mxu0 0.0
    %161 = vmatprep.subr.mxu0 0.0
    %162 = vmatpush1.xpose.msra.mxu0 0.0
    %163 = vmatprep.subr.mxu0 0.0
    %164 = vmatpush1.xpose.msra.mxu0 0.0
    %165 = vmatprep.mubr.f32.mxu0 0.0
    %166 = vmatmul.mubr.f32.gmra.mrb[0].mxu0 %v51
    %v167 = vpop.f32.mrb[0].mxu0
    %v168 = vadd.f32 0.0, %v167
    %v169 = vpop.f32.mrb[0].mxu0
    %170 = vdwg.mxu0
    %v171 = vld [vmem:[%s1] sm:$0xff]
    %v172 = vld [vmem:[%s1 + $0x8] sm:$0xff]
    %v173 = vld [vmem:[%s1 + $0x10] sm:$0xff]
    %v174 = vld [vmem:[%s1 + $0x18] sm:$0xff]
    %v175 = vld [vmem:[%s1 + $0x20] sm:$0xff]
    %v176 = vld [vmem:[%s1 + $0x28] sm:$0xff]
    %v177 = vld [vmem:[%s1 + $0x30] sm:$0xff]
    %v178 = vld [vmem:[%s1 + $0x38] sm:$0xff]
    %v179 = vld [vmem:[%s1 + $0x40] sm:$0xff]
    %v180 = vld [vmem:[%s1 + $0x48] sm:$0xff]
    %v181 = vld [vmem:[%s1 + $0x50] sm:$0xff]
    %v182 = vld [vmem:[%s1 + $0x58] sm:$0xff]
    %v183 = vld [vmem:[%s1 + $0x60] sm:$0xff]
    %v184 = vld [vmem:[%s1 + $0x68] sm:$0xff]
    %v185 = vld [vmem:[%s1 + $0x70] sm:$0xff]
    %v186 = vld [vmem:[%s1 + $0x78] sm:$0xff]
    %v188 = vsel %vm49, %v171, 0
    %v191 = vsel %vm49, %v172, 0
    %v194 = vsel %vm49, %v173, 0
    %v197 = vsel %vm49, %v174, 0
    %v200 = vsel %vm49, %v175, 0
    %v203 = vsel %vm49, %v176, 0
    %v206 = vsel %vm49, %v177, 0
    %v209 = vsel %vm49, %v178, 0
    %v212 = vsel %vm49, %v179, 0
    %v215 = vsel %vm49, %v180, 0
    %v218 = vsel %vm49, %v181, 0
    %v221 = vsel %vm49, %v182, 0
    %v224 = vsel %vm49, %v183, 0
    %v227 = vsel %vm49, %v184, 0
    %v230 = vsel %vm49, %v185, 0
    %v233 = vsel %vm49, %v186, 0
    %v236 = vsel %vm49, %v17, 0
    %v239 = vsel %vm49, %v18, 0
    %v242 = vsel %vm49, %v19, 0
    %v245 = vsel %vm49, %v20, 0
    %v248 = vsel %vm49, %v21, 0
    %v251 = vsel %vm49, %v22, 0
    %v254 = vsel %vm49, %v23, 0
    %v257 = vsel %vm49, %v24, 0
    %v260 = vsel %vm49, %v25, 0
    %v263 = vsel %vm49, %v26, 0
    %v266 = vsel %vm49, %v27, 0
    %v269 = vsel %vm49, %v28, 0
    %v272 = vsel %vm49, %v29, 0
    %v275 = vsel %vm49, %v30, 0
    %v278 = vsel %vm49, %v31, 0
    %v281 = vsel %vm49, %v32, 0
    %283 = vmatprep.subr.mxu0 0.0
    %284 = vmatpush1.xpose.msra.mxu0 %v236
    %285 = vmatprep.subr.mxu0 0.0
    %286 = vmatpush1.xpose.msra.mxu0 %v239
    %287 = vmatprep.subr.mxu0 0.0
    %288 = vmatpush1.xpose.msra.mxu0 %v242
    %289 = vmatprep.subr.mxu0 0.0
    %290 = vmatpush1.xpose.msra.mxu0 %v245
    %291 = vmatprep.subr.mxu0 0.0
    %292 = vmatpush1.xpose.msra.mxu0 %v248
    %293 = vmatprep.subr.mxu0 0.0
    %294 = vmatpush1.xpose.msra.mxu0 %v251
    %295 = vmatprep.subr.mxu0 0.0
    %296 = vmatpush1.xpose.msra.mxu0 %v254
    %297 = vmatprep.subr.mxu0 0.0
    %298 = vmatpush1.xpose.msra.mxu0 %v257
    %299 = vmatprep.subr.mxu0 0.0
    %300 = vmatpush1.xpose.msra.mxu0 %v260
    %301 = vmatprep.subr.mxu0 0.0
    %302 = vmatpush1.xpose.msra.mxu0 %v263
    %303 = vmatprep.subr.mxu0 0.0
    %304 = vmatpush1.xpose.msra.mxu0 %v266
    %305 = vmatprep.subr.mxu0 0.0
    %306 = vmatpush1.xpose.msra.mxu0 %v269
    %307 = vmatprep.subr.mxu0 0.0
    %308 = vmatpush1.xpose.msra.mxu0 %v272
    %309 = vmatprep.subr.mxu0 0.0
    %310 = vmatpush1.xpose.msra.mxu0 %v275
    %311 = vmatprep.subr.mxu0 0.0
    %312 = vmatpush1.xpose.msra.mxu0 %v278
    %313 = vmatprep.subr.mxu0 0.0
    %314 = vmatpush1.xpose.msra.mxu0 %v281
    %315 = vmatprep.subr.mxu0 0.0
    %316 = vmatpush1.xpose.msra.mxu0 0.0
    %317 = vmatprep.subr.mxu0 0.0
    %318 = vmatpush1.xpose.msra.mxu0 0.0
    %319 = vmatprep.subr.mxu0 0.0
    %320 = vmatpush1.xpose.msra.mxu0 0.0
    %321 = vmatprep.subr.mxu0 0.0
    %322 = vmatpush1.xpose.msra.mxu0 0.0
    %323 = vmatprep.subr.mxu0 0.0
    %324 = vmatpush1.xpose.msra.mxu0 0.0
    %325 = vmatprep.subr.mxu0 0.0
    %326 = vmatpush1.xpose.msra.mxu0 0.0
    %327 = vmatprep.subr.mxu0 0.0
    %328 = vmatpush1.xpose.msra.mxu0 0.0
    %329 = vmatprep.subr.mxu0 0.0
    %330 = vmatpush1.xpose.msra.mxu0 0.0
    %331 = vmatprep.subr.mxu0 0.0
    %332 = vmatpush1.xpose.msra.mxu0 0.0
    %333 = vmatprep.subr.mxu0 0.0
    %334 = vmatpush1.xpose.msra.mxu0 0.0
    %335 = vmatprep.subr.mxu0 0.0
    %336 = vmatpush1.xpose.msra.mxu0 0.0
    %337 = vmatprep.subr.mxu0 0.0
    %338 = vmatpush1.xpose.msra.mxu0 0.0
    %339 = vmatprep.subr.mxu0 0.0
    %340 = vmatpush1.xpose.msra.mxu0 0.0
    %341 = vmatprep.subr.mxu0 0.0
    %342 = vmatpush1.xpose.msra.mxu0 0.0
    %343 = vmatprep.subr.mxu0 0.0
    %344 = vmatpush1.xpose.msra.mxu0 0.0
    %345 = vmatprep.subr.mxu0 0.0
    %346 = vmatpush1.xpose.msra.mxu0 0.0
    %347 = vmatprep.mubr.f32.mxu0 0.0
    %348 = vmatmul.mubr.f32.gmra.mrb[0].mxu0 %v188
    %v349 = vpop.f32.mrb[0].mxu0
    %v350 = vadd.f32 0.0, %v349
    %v351 = vpop.f32.mrb[0].mxu0
    %352 = vmatprep.mubr.f32.mxu0 0.0
    %353 = vmatmul.mubr.f32.gmra.mrb[0].mxu0 %v191
    %v354 = vpop.f32.mrb[0].mxu0
    %v355 = vadd.f32 0.0, %v354
    %v356 = vpop.f32.mrb[0].mxu0
    %357 = vmatprep.mubr.f32.mxu0 0.0
    %358 = vmatmul.mubr.f32.gmra.mrb[0].mxu0 %v194
    %v359 = vpop.f32.mrb[0].mxu0
    %v360 = vadd.f32 0.0, %v359
    %v361 = vpop.f32.mrb[0].mxu0
    %362 = vmatprep.mubr.f32.mxu0 0.0
    %363 = vmatmul.mubr.f32.gmra.mrb[0].mxu0 %v197
    %v364 = vpop.f32.mrb[0].mxu0
    %v365 = vadd.f32 0.0, %v364
    %v366 = vpop.f32.mrb[0].mxu0
    %367 = vmatprep.mubr.f32.mxu0 0.0
    %368 = vmatmul.mubr.f32.gmra.mrb[0].mxu0 %v200
    %v369 = vpop.f32.mrb[0].mxu0
    %v370 = vadd.f32 0.0, %v369
    %v371 = vpop.f32.mrb[0].mxu0
    %372 = vmatprep.mubr.f32.mxu0 0.0
    %373 = vmatmul.mubr.f32.gmra.mrb[0].mxu0 %v203
    %v374 = vpop.f32.mrb[0].mxu0
    %v375 = vadd.f32 0.0, %v374
    %v376 = vpop.f32.mrb[0].mxu0
    %377 = vmatprep.mubr.f32.mxu0 0.0
    %378 = vmatmul.mubr.f32.gmra.mrb[0].mxu0 %v206
    %v379 = vpop.f32.mrb[0].mxu0
    %v380 = vadd.f32 0.0, %v379
    %v381 = vpop.f32.mrb[0].mxu0
    %382 = vmatprep.mubr.f32.mxu0 0.0
    %383 = vmatmul.mubr.f32.gmra.mrb[0].mxu0 %v209
    %v384 = vpop.f32.mrb[0].mxu0
    %v385 = vadd.f32 0.0, %v384
    %v386 = vpop.f32.mrb[0].mxu0
    %387 = vmatprep.mubr.f32.mxu0 0.0
    %388 = vmatmul.mubr.f32.gmra.mrb[0].mxu0 %v212
    %v389 = vpop.f32.mrb[0].mxu0
    %v390 = vadd.f32 0.0, %v389
    %v391 = vpop.f32.mrb[0].mxu0
    %392 = vmatprep.mubr.f32.mxu0 0.0
    %393 = vmatmul.mubr.f32.gmra.mrb[0].mxu0 %v215
    %v394 = vpop.f32.mrb[0].mxu0
    %v395 = vadd.f32 0.0, %v394
    %v396 = vpop.f32.mrb[0].mxu0
    %397 = vmatprep.mubr.f32.mxu0 0.0
    %398 = vmatmul.mubr.f32.gmra.mrb[0].mxu0 %v218
    %v399 = vpop.f32.mrb[0].mxu0
    %v400 = vadd.f32 0.0, %v399
    %v401 = vpop.f32.mrb[0].mxu0
    %402 = vmatprep.mubr.f32.mxu0 0.0
    %403 = vmatmul.mubr.f32.gmra.mrb[0].mxu0 %v221
    %v404 = vpop.f32.mrb[0].mxu0
    %v405 = vadd.f32 0.0, %v404
    %v406 = vpop.f32.mrb[0].mxu0
    %407 = vmatprep.mubr.f32.mxu0 0.0
    %408 = vmatmul.mubr.f32.gmra.mrb[0].mxu0 %v224
    %v409 = vpop.f32.mrb[0].mxu0
    %v410 = vadd.f32 0.0, %v409
    %v411 = vpop.f32.mrb[0].mxu0
    %412 = vmatprep.mubr.f32.mxu0 0.0
    %413 = vmatmul.mubr.f32.gmra.mrb[0].mxu0 %v227
    %v414 = vpop.f32.mrb[0].mxu0
    %v415 = vadd.f32 0.0, %v414
    %v416 = vpop.f32.mrb[0].mxu0
    %417 = vmatprep.mubr.f32.mxu0 0.0
    %418 = vmatmul.mubr.f32.gmra.mrb[0].mxu0 %v230
    %v419 = vpop.f32.mrb[0].mxu0
    %v420 = vadd.f32 0.0, %v419
    %v421 = vpop.f32.mrb[0].mxu0
    %422 = vmatprep.mubr.f32.mxu0 0.0
    %423 = vmatmul.mubr.f32.gmra.mrb[0].mxu0 %v233
    %v424 = vpop.f32.mrb[0].mxu0
    %v425 = vadd.f32 0.0, %v424
    %v426 = vpop.f32.mrb[0].mxu0
    %427 = vdwg.mxu0
    %v428 = vmul.f32 %v171, %v171
    %v429 = vmul.f32 %v172, %v172
    %v430 = vmul.f32 %v173, %v173
    %v431 = vmul.f32 %v174, %v174
    %v432 = vmul.f32 %v175, %v175
    %v433 = vmul.f32 %v176, %v176
    %v434 = vmul.f32 %v177, %v177
    %v435 = vmul.f32 %v178, %v178
    %v436 = vmul.f32 %v179, %v179
    %v437 = vmul.f32 %v180, %v180
    %v438 = vmul.f32 %v181, %v181
    %v439 = vmul.f32 %v182, %v182
    %v440 = vmul.f32 %v183, %v183
    %v441 = vmul.f32 %v184, %v184
    %v442 = vmul.f32 %v185, %v185
    %v443 = vmul.f32 %v186, %v186
    %v444 = vsel %vm49, %v428, 0.0
    %445 = vadd.xlane.f32.xlu0 %v444
    %v446 = vpop.xlane.xlu0 %445
    %v447 = vsel %vm49, %v429, 0.0
    %448 = vadd.xlane.f32.xlu0 %v447
    %v449 = vpop.xlane.xlu0 %448
    %v450 = vsel %vm49, %v430, 0.0
    %451 = vadd.xlane.f32.xlu0 %v450
    %v452 = vpop.xlane.xlu0 %451
    %v453 = vsel %vm49, %v431, 0.0
    %454 = vadd.xlane.f32.xlu0 %v453
    %v455 = vpop.xlane.xlu0 %454
    %v456 = vsel %vm49, %v432, 0.0
    %457 = vadd.xlane.f32.xlu0 %v456
    %v458 = vpop.xlane.xlu0 %457
    %v459 = vsel %vm49, %v433, 0.0
    %460 = vadd.xlane.f32.xlu0 %v459
    %v461 = vpop.xlane.xlu0 %460
    %v462 = vsel %vm49, %v434, 0.0
    %463 = vadd.xlane.f32.xlu0 %v462
    %v464 = vpop.xlane.xlu0 %463
    %v465 = vsel %vm49, %v435, 0.0
    %466 = vadd.xlane.f32.xlu0 %v465
    %v467 = vpop.xlane.xlu0 %466
    %v468 = vsel %vm49, %v436, 0.0
    %469 = vadd.xlane.f32.xlu0 %v468
    %v470 = vpop.xlane.xlu0 %469
    %v471 = vsel %vm49, %v437, 0.0
    %472 = vadd.xlane.f32.xlu0 %v471
    %v473 = vpop.xlane.xlu0 %472
    %v474 = vsel %vm49, %v438, 0.0
    %475 = vadd.xlane.f32.xlu0 %v474
    %v476 = vpop.xlane.xlu0 %475
    %v477 = vsel %vm49, %v439, 0.0
    %478 = vadd.xlane.f32.xlu0 %v477
    %v479 = vpop.xlane.xlu0 %478
    %v480 = vsel %vm49, %v440, 0.0
    %481 = vadd.xlane.f32.xlu0 %v480
    %v482 = vpop.xlane.xlu0 %481
    %v483 = vsel %vm49, %v441, 0.0
    %484 = vadd.xlane.f32.xlu0 %v483
    %v485 = vpop.xlane.xlu0 %484
    %v486 = vsel %vm49, %v442, 0.0
    %487 = vadd.xlane.f32.xlu0 %v486
    %v488 = vpop.xlane.xlu0 %487
    %v489 = vsel %vm49, %v443, 0.0
    %490 = vadd.xlane.f32.xlu0 %v489
    %v491 = vpop.xlane.xlu0 %490
    %v492 = vmul.f32 %v350, 2.0
    %v493 = vmul.f32 %v355, 2.0
    %v494 = vmul.f32 %v360, 2.0
    %v495 = vmul.f32 %v365, 2.0
    %v496 = vmul.f32 %v370, 2.0
    %v497 = vmul.f32 %v375, 2.0
    %v498 = vmul.f32 %v380, 2.0
    %v499 = vmul.f32 %v385, 2.0
    %v500 = vmul.f32 %v390, 2.0
    %v501 = vmul.f32 %v395, 2.0
    %v502 = vmul.f32 %v400, 2.0
    %v503 = vmul.f32 %v405, 2.0
    %v504 = vmul.f32 %v410, 2.0
    %v505 = vmul.f32 %v415, 2.0
    %v506 = vmul.f32 %v420, 2.0
    %v507 = vmul.f32 %v425, 2.0
    %v508 = vsub.f32 %v446, %v492
    %v509 = vsub.f32 %v449, %v493
    %v510 = vsub.f32 %v452, %v494
    %v511 = vsub.f32 %v455, %v495
    %v512 = vsub.f32 %v458, %v496
    %v513 = vsub.f32 %v461, %v497
    %v514 = vsub.f32 %v464, %v498
    %v515 = vsub.f32 %v467, %v499
    %v516 = vsub.f32 %v470, %v500
    %v517 = vsub.f32 %v473, %v501
    %v518 = vsub.f32 %v476, %v502
    %v519 = vsub.f32 %v479, %v503
    %v520 = vsub.f32 %v482, %v504
    %v521 = vsub.f32 %v485, %v505
    %v522 = vsub.f32 %v488, %v506
    %v523 = vsub.f32 %v491, %v507
    %v524 = vlaneseq
    %v525 = vshrl.u32 %v524, 7
    %v526 = vsub.s32 0, %v525
    %v527 = vrot.slane %v168, %v526
    %v528 = vadd.f32 %v508, %v527
    %v529 = vadd.f32 %v509, %v527
    %v530 = vadd.f32 %v510, %v527
    %v531 = vadd.f32 %v511, %v527
    %v532 = vadd.f32 %v512, %v527
    %v533 = vadd.f32 %v513, %v527
    %v534 = vadd.f32 %v514, %v527
    %v535 = vadd.f32 %v515, %v527
    %v536 = vadd.f32 %v516, %v527
    %v537 = vadd.f32 %v517, %v527
    %v538 = vadd.f32 %v518, %v527
    %v539 = vadd.f32 %v519, %v527
    %v540 = vadd.f32 %v520, %v527
    %v541 = vadd.f32 %v521, %v527
    %v542 = vadd.f32 %v522, %v527
    %v543 = vadd.f32 %v523, %v527
    %v544 = vlaneseq
    %v545 = vshrl.u32 %v544, 7
    %v546 = vadd.s32 %v545, 8
    %v547 = vadd.s32 %v545, 16
    %v548 = vadd.s32 %v545, 24
    %v549 = vadd.s32 %v545, 32
    %v550 = vadd.s32 %v545, 40
    %v551 = vadd.s32 %v545, 48
    %v552 = vadd.s32 %v545, 56
    %v553 = vadd.s32 %v545, 64
    %v554 = vadd.s32 %v545, 72
    %v555 = vadd.s32 %v545, 80
    %v556 = vadd.s32 %v545, 88
    %v557 = vadd.s32 %v545, 96
    %v558 = vadd.s32 %v545, 104
    %v559 = vadd.s32 %v545, 112
    %v560 = vadd.s32 %v545, 120
    %vm561 = vcmp.eq.s32.totalorder %v545, %v16
    %vm562 = vcmp.eq.s32.totalorder %v546, %v16
    %vm563 = vcmp.eq.s32.totalorder %v547, %v16
    %vm564 = vcmp.eq.s32.totalorder %v548, %v16
    %vm565 = vcmp.eq.s32.totalorder %v549, %v16
    %vm566 = vcmp.eq.s32.totalorder %v550, %v16
    %vm567 = vcmp.eq.s32.totalorder %v551, %v16
    %vm568 = vcmp.eq.s32.totalorder %v552, %v16
    %vm569 = vcmp.eq.s32.totalorder %v553, %v16
    %vm570 = vcmp.eq.s32.totalorder %v554, %v16
    %vm571 = vcmp.eq.s32.totalorder %v555, %v16
    %vm572 = vcmp.eq.s32.totalorder %v556, %v16
    %vm573 = vcmp.eq.s32.totalorder %v557, %v16
    %vm574 = vcmp.eq.s32.totalorder %v558, %v16
    %vm575 = vcmp.eq.s32.totalorder %v559, %v16
    %vm576 = vcmp.eq.s32.totalorder %v560, %v16
    %v577 = vsel %vm561, 3e+38, %v528
    %v578 = vsel %vm562, 3e+38, %v529
    %v579 = vsel %vm563, 3e+38, %v530
    %v580 = vsel %vm564, 3e+38, %v531
    %v581 = vsel %vm565, 3e+38, %v532
    %v582 = vsel %vm566, 3e+38, %v533
    %v583 = vsel %vm567, 3e+38, %v534
    %v584 = vsel %vm568, 3e+38, %v535
    %v585 = vsel %vm569, 3e+38, %v536
    %v586 = vsel %vm570, 3e+38, %v537
    %v587 = vsel %vm571, 3e+38, %v538
    %v588 = vsel %vm572, 3e+38, %v539
    %v589 = vsel %vm573, 3e+38, %v540
    %v590 = vsel %vm574, 3e+38, %v541
    %v591 = vsel %vm575, 3e+38, %v542
    %v592 = vsel %vm576, 3e+38, %v543
    %v593 = vmin.f32 %v580, 3e+38
    %v594 = vmin.f32 %v577, %v581
    %v595 = vmin.f32 %v578, %v582
    %v596 = vmin.f32 %v579, %v583
    %v597 = vmin.f32 %v593, %v584
    %v598 = vmin.f32 %v594, %v585
    %v599 = vmin.f32 %v595, %v586
    %v600 = vmin.f32 %v596, %v587
    %v601 = vmin.f32 %v597, %v588
    %v602 = vmin.f32 %v598, %v589
    %v603 = vmin.f32 %v599, %v590
    %v604 = vmin.f32 %v600, %v591
    %v605 = vmin.f32 %v601, %v592
    %v606 = vmin.f32 %v605, %v602
    %v607 = vmin.f32 %v603, %v604
    %v608 = vmin.f32 %v606, %v607
    %v609 = vrot.slane %v608, 4
    %v610 = vmin.f32 %v608, %v609
    %v611 = vrot.slane %v610, 2
    %v612 = vmin.f32 %v610, %v611
    %v613 = vrot.slane %v612, 1
    %v614 = vmin.f32 %v612, %v613
    %vm615 = vcmp.eq.f32.partialorder %v577, %v614
    %vm616 = vcmp.eq.f32.partialorder %v578, %v614
    %vm617 = vcmp.eq.f32.partialorder %v579, %v614
    %vm618 = vcmp.eq.f32.partialorder %v580, %v614
    %vm619 = vcmp.eq.f32.partialorder %v581, %v614
    %vm620 = vcmp.eq.f32.partialorder %v582, %v614
    %vm621 = vcmp.eq.f32.partialorder %v583, %v614
    %vm622 = vcmp.eq.f32.partialorder %v584, %v614
    %vm623 = vcmp.eq.f32.partialorder %v585, %v614
    %vm624 = vcmp.eq.f32.partialorder %v586, %v614
    %vm625 = vcmp.eq.f32.partialorder %v587, %v614
    %vm626 = vcmp.eq.f32.partialorder %v588, %v614
    %vm627 = vcmp.eq.f32.partialorder %v589, %v614
    %vm628 = vcmp.eq.f32.partialorder %v590, %v614
    %vm629 = vcmp.eq.f32.partialorder %v591, %v614
    %vm630 = vcmp.eq.f32.partialorder %v592, %v614
    %v631 = vsel %vm615, 3e+38, %v577
    %v632 = vsel %vm616, 3e+38, %v578
    %v633 = vsel %vm617, 3e+38, %v579
    %v634 = vsel %vm618, 3e+38, %v580
    %v635 = vsel %vm619, 3e+38, %v581
    %v636 = vsel %vm620, 3e+38, %v582
    %v637 = vsel %vm621, 3e+38, %v583
    %v638 = vsel %vm622, 3e+38, %v584
    %v639 = vsel %vm623, 3e+38, %v585
    %v640 = vsel %vm624, 3e+38, %v586
    %v641 = vsel %vm625, 3e+38, %v587
    %v642 = vsel %vm626, 3e+38, %v588
    %v643 = vsel %vm627, 3e+38, %v589
    %v644 = vsel %vm628, 3e+38, %v590
    %v645 = vsel %vm629, 3e+38, %v591
    %v646 = vsel %vm630, 3e+38, %v592
    %v647 = vmin.f32 %v634, 3e+38
    %v648 = vmin.f32 %v631, %v635
    %v649 = vmin.f32 %v632, %v636
    %v650 = vmin.f32 %v633, %v637
    %v651 = vmin.f32 %v647, %v638
    %v652 = vmin.f32 %v648, %v639
    %v653 = vmin.f32 %v649, %v640
    %v654 = vmin.f32 %v650, %v641
    %v655 = vmin.f32 %v651, %v642
    %v656 = vmin.f32 %v652, %v643
    %v657 = vmin.f32 %v653, %v644
    %v658 = vmin.f32 %v654, %v645
    %v659 = vmin.f32 %v655, %v646
    %v660 = vmin.f32 %v659, %v656
    %v661 = vmin.f32 %v657, %v658
    %v662 = vmin.f32 %v660, %v661
    %v663 = vrot.slane %v662, 4
    %v664 = vmin.f32 %v662, %v663
    %v665 = vrot.slane %v664, 2
    %v666 = vmin.f32 %v664, %v665
    %v667 = vrot.slane %v666, 1
    %v668 = vmin.f32 %v666, %v667
    %vm669 = vcmp.eq.f32.partialorder %v631, %v668
    %vm670 = vcmp.eq.f32.partialorder %v632, %v668
    %vm671 = vcmp.eq.f32.partialorder %v633, %v668
    %vm672 = vcmp.eq.f32.partialorder %v634, %v668
    %vm673 = vcmp.eq.f32.partialorder %v635, %v668
    %vm674 = vcmp.eq.f32.partialorder %v636, %v668
    %vm675 = vcmp.eq.f32.partialorder %v637, %v668
    %vm676 = vcmp.eq.f32.partialorder %v638, %v668
    %vm677 = vcmp.eq.f32.partialorder %v639, %v668
    %vm678 = vcmp.eq.f32.partialorder %v640, %v668
    %vm679 = vcmp.eq.f32.partialorder %v641, %v668
    %vm680 = vcmp.eq.f32.partialorder %v642, %v668
    %vm681 = vcmp.eq.f32.partialorder %v643, %v668
    %vm682 = vcmp.eq.f32.partialorder %v644, %v668
    %vm683 = vcmp.eq.f32.partialorder %v645, %v668
    %vm684 = vcmp.eq.f32.partialorder %v646, %v668
    %v685 = vsel %vm669, 3e+38, %v631
    %v686 = vsel %vm670, 3e+38, %v632
    %v687 = vsel %vm671, 3e+38, %v633
    %v688 = vsel %vm672, 3e+38, %v634
    %v689 = vsel %vm673, 3e+38, %v635
    %v690 = vsel %vm674, 3e+38, %v636
    %v691 = vsel %vm675, 3e+38, %v637
    %v692 = vsel %vm676, 3e+38, %v638
    %v693 = vsel %vm677, 3e+38, %v639
    %v694 = vsel %vm678, 3e+38, %v640
    %v695 = vsel %vm679, 3e+38, %v641
    %v696 = vsel %vm680, 3e+38, %v642
    %v697 = vsel %vm681, 3e+38, %v643
    %v698 = vsel %vm682, 3e+38, %v644
    %v699 = vsel %vm683, 3e+38, %v645
    %v700 = vsel %vm684, 3e+38, %v646
    %v701 = vmin.f32 %v688, 3e+38
    %v702 = vmin.f32 %v685, %v689
    %v703 = vmin.f32 %v686, %v690
    %v704 = vmin.f32 %v687, %v691
    %v705 = vmin.f32 %v701, %v692
    %v706 = vmin.f32 %v702, %v693
    %v707 = vmin.f32 %v703, %v694
    %v708 = vmin.f32 %v704, %v695
    %v709 = vmin.f32 %v705, %v696
    %v710 = vmin.f32 %v706, %v697
    %v711 = vmin.f32 %v707, %v698
    %v712 = vmin.f32 %v708, %v699
    %v713 = vmin.f32 %v709, %v700
    %v714 = vmin.f32 %v713, %v710
    %v715 = vmin.f32 %v711, %v712
    %v716 = vmin.f32 %v714, %v715
    %v717 = vrot.slane %v716, 4
    %v718 = vmin.f32 %v716, %v717
    %v719 = vrot.slane %v718, 2
    %v720 = vmin.f32 %v718, %v719
    %v721 = vrot.slane %v720, 1
    %v722 = vmin.f32 %v720, %v721
    %vm723 = vcmp.eq.f32.partialorder %v685, %v722
    %vm724 = vcmp.eq.f32.partialorder %v686, %v722
    %vm725 = vcmp.eq.f32.partialorder %v687, %v722
    %vm726 = vcmp.eq.f32.partialorder %v688, %v722
    %vm727 = vcmp.eq.f32.partialorder %v689, %v722
    %vm728 = vcmp.eq.f32.partialorder %v690, %v722
    %vm729 = vcmp.eq.f32.partialorder %v691, %v722
    %vm730 = vcmp.eq.f32.partialorder %v692, %v722
    %vm731 = vcmp.eq.f32.partialorder %v693, %v722
    %vm732 = vcmp.eq.f32.partialorder %v694, %v722
    %vm733 = vcmp.eq.f32.partialorder %v695, %v722
    %vm734 = vcmp.eq.f32.partialorder %v696, %v722
    %vm735 = vcmp.eq.f32.partialorder %v697, %v722
    %vm736 = vcmp.eq.f32.partialorder %v698, %v722
    %vm737 = vcmp.eq.f32.partialorder %v699, %v722
    %vm738 = vcmp.eq.f32.partialorder %v700, %v722
    %v739 = vsel %vm723, 3e+38, %v685
    %v740 = vsel %vm724, 3e+38, %v686
    %v741 = vsel %vm725, 3e+38, %v687
    %v742 = vsel %vm726, 3e+38, %v688
    %v743 = vsel %vm727, 3e+38, %v689
    %v744 = vsel %vm728, 3e+38, %v690
    %v745 = vsel %vm729, 3e+38, %v691
    %v746 = vsel %vm730, 3e+38, %v692
    %v747 = vsel %vm731, 3e+38, %v693
    %v748 = vsel %vm732, 3e+38, %v694
    %v749 = vsel %vm733, 3e+38, %v695
    %v750 = vsel %vm734, 3e+38, %v696
    %v751 = vsel %vm735, 3e+38, %v697
    %v752 = vsel %vm736, 3e+38, %v698
    %v753 = vsel %vm737, 3e+38, %v699
    %v754 = vsel %vm738, 3e+38, %v700
    %v755 = vmin.f32 %v742, 3e+38
    %v756 = vmin.f32 %v739, %v743
    %v757 = vmin.f32 %v740, %v744
    %v758 = vmin.f32 %v741, %v745
    %v759 = vmin.f32 %v755, %v746
    %v760 = vmin.f32 %v756, %v747
    %v761 = vmin.f32 %v757, %v748
    %v762 = vmin.f32 %v758, %v749
    %v763 = vmin.f32 %v759, %v750
    %v764 = vmin.f32 %v760, %v751
    %v765 = vmin.f32 %v761, %v752
    %v766 = vmin.f32 %v762, %v753
    %v767 = vmin.f32 %v763, %v754
    %v768 = vmin.f32 %v767, %v764
    %v769 = vmin.f32 %v765, %v766
    %v770 = vmin.f32 %v768, %v769
    %v771 = vrot.slane %v770, 4
    %v772 = vmin.f32 %v770, %v771
    %v773 = vrot.slane %v772, 2
    %v774 = vmin.f32 %v772, %v773
    %v775 = vrot.slane %v774, 1
    %v776 = vmin.f32 %v774, %v775
    %vm777 = vcmp.eq.f32.partialorder %v739, %v776
    %vm778 = vcmp.eq.f32.partialorder %v740, %v776
    %vm779 = vcmp.eq.f32.partialorder %v741, %v776
    %vm780 = vcmp.eq.f32.partialorder %v742, %v776
    %vm781 = vcmp.eq.f32.partialorder %v743, %v776
    %vm782 = vcmp.eq.f32.partialorder %v744, %v776
    %vm783 = vcmp.eq.f32.partialorder %v745, %v776
    %vm784 = vcmp.eq.f32.partialorder %v746, %v776
    %vm785 = vcmp.eq.f32.partialorder %v747, %v776
    %vm786 = vcmp.eq.f32.partialorder %v748, %v776
    %vm787 = vcmp.eq.f32.partialorder %v749, %v776
    %vm788 = vcmp.eq.f32.partialorder %v750, %v776
    %vm789 = vcmp.eq.f32.partialorder %v751, %v776
    %vm790 = vcmp.eq.f32.partialorder %v752, %v776
    %vm791 = vcmp.eq.f32.partialorder %v753, %v776
    %vm792 = vcmp.eq.f32.partialorder %v754, %v776
    %v793 = vsel %vm777, 3e+38, %v739
    %v794 = vsel %vm778, 3e+38, %v740
    %v795 = vsel %vm779, 3e+38, %v741
    %v796 = vsel %vm780, 3e+38, %v742
    %v797 = vsel %vm781, 3e+38, %v743
    %v798 = vsel %vm782, 3e+38, %v744
    %v799 = vsel %vm783, 3e+38, %v745
    %v800 = vsel %vm784, 3e+38, %v746
    %v801 = vsel %vm785, 3e+38, %v747
    %v802 = vsel %vm786, 3e+38, %v748
    %v803 = vsel %vm787, 3e+38, %v749
    %v804 = vsel %vm788, 3e+38, %v750
    %v805 = vsel %vm789, 3e+38, %v751
    %v806 = vsel %vm790, 3e+38, %v752
    %v807 = vsel %vm791, 3e+38, %v753
    %v808 = vsel %vm792, 3e+38, %v754
    %v809 = vmin.f32 %v796, 3e+38
    %v810 = vmin.f32 %v793, %v797
    %v811 = vmin.f32 %v794, %v798
    %v812 = vmin.f32 %v795, %v799
    %v813 = vmin.f32 %v809, %v800
    %v814 = vmin.f32 %v810, %v801
    %v815 = vmin.f32 %v811, %v802
    %v816 = vmin.f32 %v812, %v803
    %v817 = vmin.f32 %v813, %v804
    %v818 = vmin.f32 %v814, %v805
    %v819 = vmin.f32 %v815, %v806
    %v820 = vmin.f32 %v816, %v807
    %v821 = vmin.f32 %v817, %v808
    %v822 = vmin.f32 %v821, %v818
    %v823 = vmin.f32 %v819, %v820
    %v824 = vmin.f32 %v822, %v823
    %v825 = vrot.slane %v824, 4
    %v826 = vmin.f32 %v824, %v825
    %v827 = vrot.slane %v826, 2
    %v828 = vmin.f32 %v826, %v827
    %v829 = vrot.slane %v828, 1
    %v830 = vmin.f32 %v828, %v829
    %vm831 = vcmask 1040384
    %v832 = vsel %vm831, %v614, %v668
    %vm833 = vcmask 1041408
    %v834 = vsel %vm833, %v832, %v722
    %vm835 = vcmask 1042432
    %v836 = vsel %vm835, %v834, %v776
    %vm837 = vcmask 1043456
    %v838 = vsel %vm837, %v836, %v830
    %vm839 = vcmask 1044480
    %v840 = vsel %vm839, %v838, 3e+38
    %v841 = vsel %vm839, %v840, 0.0
    %v842 = vrot.slane %v841, 4
    %v843 = vadd.f32 %v841, %v842
    %v844 = vrot.slane %v843, 2
    %v845 = vadd.f32 %v843, %v844
    %v846 = vrot.slane %v845, 1
    %v847 = vadd.f32 %v845, %v846
    %v848 = vmul.f32 %v847, 0.2
    %849 = vst [vmem:[#allocation2] sm:$0x1] %v848
    %s850 = scalar_lea.vmem %s0, 128
    %v851 = vld [vmem:[%s850] sm:$0xff]
    %v852 = vld [vmem:[%s850 + $0x8] sm:$0xff]
    %v853 = vld [vmem:[%s850 + $0x10] sm:$0xff]
    %v854 = vld [vmem:[%s850 + $0x18] sm:$0xff]
    %v855 = vld [vmem:[%s850 + $0x20] sm:$0xff]
    %v856 = vld [vmem:[%s850 + $0x28] sm:$0xff]
    %v857 = vld [vmem:[%s850 + $0x30] sm:$0xff]
    %v858 = vld [vmem:[%s850 + $0x38] sm:$0xff]
    %v859 = vld [vmem:[%s850 + $0x40] sm:$0xff]
    %v860 = vld [vmem:[%s850 + $0x48] sm:$0xff]
    %v861 = vld [vmem:[%s850 + $0x50] sm:$0xff]
    %v862 = vld [vmem:[%s850 + $0x58] sm:$0xff]
    %v863 = vld [vmem:[%s850 + $0x60] sm:$0xff]
    %v864 = vld [vmem:[%s850 + $0x68] sm:$0xff]
    %v865 = vld [vmem:[%s850 + $0x70] sm:$0xff]
    %v866 = vld [vmem:[%s850 + $0x78] sm:$0xff]
    %v867 = vmul.f32 %v851, %v851
    %v868 = vmul.f32 %v852, %v852
    %v869 = vmul.f32 %v853, %v853
    %v870 = vmul.f32 %v854, %v854
    %v871 = vmul.f32 %v855, %v855
    %v872 = vmul.f32 %v856, %v856
    %v873 = vmul.f32 %v857, %v857
    %v874 = vmul.f32 %v858, %v858
    %v875 = vmul.f32 %v859, %v859
    %v876 = vmul.f32 %v860, %v860
    %v877 = vmul.f32 %v861, %v861
    %v878 = vmul.f32 %v862, %v862
    %v879 = vmul.f32 %v863, %v863
    %v880 = vmul.f32 %v864, %v864
    %v881 = vmul.f32 %v865, %v865
    %v882 = vmul.f32 %v866, %v866
    %v884 = vsel %vm49, %v867, 0
    %v887 = vsel %vm49, %v868, 0
    %v890 = vsel %vm49, %v869, 0
    %v893 = vsel %vm49, %v870, 0
    %v896 = vsel %vm49, %v871, 0
    %v899 = vsel %vm49, %v872, 0
    %v902 = vsel %vm49, %v873, 0
    %v905 = vsel %vm49, %v874, 0
    %v908 = vsel %vm49, %v875, 0
    %v911 = vsel %vm49, %v876, 0
    %v914 = vsel %vm49, %v877, 0
    %v917 = vsel %vm49, %v878, 0
    %v920 = vsel %vm49, %v879, 0
    %v923 = vsel %vm49, %v880, 0
    %v926 = vsel %vm49, %v881, 0
    %v929 = vsel %vm49, %v882, 0
    %931 = vmatprep.subr.mxu0 0.0
    %932 = vmatpush1.xpose.msra.mxu0 %v884
    %933 = vmatprep.subr.mxu0 0.0
    %934 = vmatpush1.xpose.msra.mxu0 %v887
    %935 = vmatprep.subr.mxu0 0.0
    %936 = vmatpush1.xpose.msra.mxu0 %v890
    %937 = vmatprep.subr.mxu0 0.0
    %938 = vmatpush1.xpose.msra.mxu0 %v893
    %939 = vmatprep.subr.mxu0 0.0
    %940 = vmatpush1.xpose.msra.mxu0 %v896
    %941 = vmatprep.subr.mxu0 0.0
    %942 = vmatpush1.xpose.msra.mxu0 %v899
    %943 = vmatprep.subr.mxu0 0.0
    %944 = vmatpush1.xpose.msra.mxu0 %v902
    %945 = vmatprep.subr.mxu0 0.0
    %946 = vmatpush1.xpose.msra.mxu0 %v905
    %947 = vmatprep.subr.mxu0 0.0
    %948 = vmatpush1.xpose.msra.mxu0 %v908
    %949 = vmatprep.subr.mxu0 0.0
    %950 = vmatpush1.xpose.msra.mxu0 %v911
    %951 = vmatprep.subr.mxu0 0.0
    %952 = vmatpush1.xpose.msra.mxu0 %v914
    %953 = vmatprep.subr.mxu0 0.0
    %954 = vmatpush1.xpose.msra.mxu0 %v917
    %955 = vmatprep.subr.mxu0 0.0
    %956 = vmatpush1.xpose.msra.mxu0 %v920
    %957 = vmatprep.subr.mxu0 0.0
    %958 = vmatpush1.xpose.msra.mxu0 %v923
    %959 = vmatprep.subr.mxu0 0.0
    %960 = vmatpush1.xpose.msra.mxu0 %v926
    %961 = vmatprep.subr.mxu0 0.0
    %962 = vmatpush1.xpose.msra.mxu0 %v929
    %963 = vmatprep.subr.mxu0 0.0
    %964 = vmatpush1.xpose.msra.mxu0 0.0
    %965 = vmatprep.subr.mxu0 0.0
    %966 = vmatpush1.xpose.msra.mxu0 0.0
    %967 = vmatprep.subr.mxu0 0.0
    %968 = vmatpush1.xpose.msra.mxu0 0.0
    %969 = vmatprep.subr.mxu0 0.0
    %970 = vmatpush1.xpose.msra.mxu0 0.0
    %971 = vmatprep.subr.mxu0 0.0
    %972 = vmatpush1.xpose.msra.mxu0 0.0
    %973 = vmatprep.subr.mxu0 0.0
    %974 = vmatpush1.xpose.msra.mxu0 0.0
    %975 = vmatprep.subr.mxu0 0.0
    %976 = vmatpush1.xpose.msra.mxu0 0.0
    %977 = vmatprep.subr.mxu0 0.0
    %978 = vmatpush1.xpose.msra.mxu0 0.0
    %979 = vmatprep.subr.mxu0 0.0
    %980 = vmatpush1.xpose.msra.mxu0 0.0
    %981 = vmatprep.subr.mxu0 0.0
    %982 = vmatpush1.xpose.msra.mxu0 0.0
    %983 = vmatprep.subr.mxu0 0.0
    %984 = vmatpush1.xpose.msra.mxu0 0.0
    %985 = vmatprep.subr.mxu0 0.0
    %986 = vmatpush1.xpose.msra.mxu0 0.0
    %987 = vmatprep.subr.mxu0 0.0
    %988 = vmatpush1.xpose.msra.mxu0 0.0
    %989 = vmatprep.subr.mxu0 0.0
    %990 = vmatpush1.xpose.msra.mxu0 0.0
    %991 = vmatprep.subr.mxu0 0.0
    %992 = vmatpush1.xpose.msra.mxu0 0.0
    %993 = vmatprep.subr.mxu0 0.0
    %994 = vmatpush1.xpose.msra.mxu0 0.0
    %995 = vmatprep.mubr.f32.mxu0 0.0
    %996 = vmatmul.mubr.f32.gmra.mrb[0].mxu0 %v51
    %v997 = vpop.f32.mrb[0].mxu0
    %v998 = vadd.f32 0.0, %v997
    %v999 = vpop.f32.mrb[0].mxu0
    %1000 = vdwg.mxu0
    %s1001 = sadd.s32 0, 128
    %s1002 = scalar_lea.vmem %s1, %s1001
    %v1003 = vld [vmem:[%s1002] sm:$0xff]
    %v1004 = vld [vmem:[%s1002 + $0x8] sm:$0xff]
    %v1005 = vld [vmem:[%s1002 + $0x10] sm:$0xff]
    %v1006 = vld [vmem:[%s1002 + $0x18] sm:$0xff]
    %v1007 = vld [vmem:[%s1002 + $0x20] sm:$0xff]
    %v1008 = vld [vmem:[%s1002 + $0x28] sm:$0xff]
    %v1009 = vld [vmem:[%s1002 + $0x30] sm:$0xff]
    %v1010 = vld [vmem:[%s1002 + $0x38] sm:$0xff]
    %v1011 = vld [vmem:[%s1002 + $0x40] sm:$0xff]
    %v1012 = vld [vmem:[%s1002 + $0x48] sm:$0xff]
    %v1013 = vld [vmem:[%s1002 + $0x50] sm:$0xff]
    %v1014 = vld [vmem:[%s1002 + $0x58] sm:$0xff]
    %v1015 = vld [vmem:[%s1002 + $0x60] sm:$0xff]
    %v1016 = vld [vmem:[%s1002 + $0x68] sm:$0xff]
    %v1017 = vld [vmem:[%s1002 + $0x70] sm:$0xff]
    %v1018 = vld [vmem:[%s1002 + $0x78] sm:$0xff]
    %v1020 = vsel %vm49, %v1003, 0
    %v1023 = vsel %vm49, %v1004, 0
    %v1026 = vsel %vm49, %v1005, 0
    %v1029 = vsel %vm49, %v1006, 0
    %v1032 = vsel %vm49, %v1007, 0
    %v1035 = vsel %vm49, %v1008, 0
    %v1038 = vsel %vm49, %v1009, 0
    %v1041 = vsel %vm49, %v1010, 0
    %v1044 = vsel %vm49, %v1011, 0
    %v1047 = vsel %vm49, %v1012, 0
    %v1050 = vsel %vm49, %v1013, 0
    %v1053 = vsel %vm49, %v1014, 0
    %v1056 = vsel %vm49, %v1015, 0
    %v1059 = vsel %vm49, %v1016, 0
    %v1062 = vsel %vm49, %v1017, 0
    %v1065 = vsel %vm49, %v1018, 0
    %v1068 = vsel %vm49, %v851, 0
    %v1071 = vsel %vm49, %v852, 0
    %v1074 = vsel %vm49, %v853, 0
    %v1077 = vsel %vm49, %v854, 0
    %v1080 = vsel %vm49, %v855, 0
    %v1083 = vsel %vm49, %v856, 0
    %v1086 = vsel %vm49, %v857, 0
    %v1089 = vsel %vm49, %v858, 0
    %v1092 = vsel %vm49, %v859, 0
    %v1095 = vsel %vm49, %v860, 0
    %v1098 = vsel %vm49, %v861, 0
    %v1101 = vsel %vm49, %v862, 0
    %v1104 = vsel %vm49, %v863, 0
    %v1107 = vsel %vm49, %v864, 0
    %v1110 = vsel %vm49, %v865, 0
    %v1113 = vsel %vm49, %v866, 0
    %1115 = vmatprep.subr.mxu0 0.0
    %1116 = vmatpush1.xpose.msra.mxu0 %v1068
    %1117 = vmatprep.subr.mxu0 0.0
    %1118 = vmatpush1.xpose.msra.mxu0 %v1071
    %1119 = vmatprep.subr.mxu0 0.0
    %1120 = vmatpush1.xpose.msra.mxu0 %v1074
    %1121 = vmatprep.subr.mxu0 0.0
    %1122 = vmatpush1.xpose.msra.mxu0 %v1077
    %1123 = vmatprep.subr.mxu0 0.0
    %1124 = vmatpush1.xpose.msra.mxu0 %v1080
    %1125 = vmatprep.subr.mxu0 0.0
    %1126 = vmatpush1.xpose.msra.mxu0 %v1083
    %1127 = vmatprep.subr.mxu0 0.0
    %1128 = vmatpush1.xpose.msra.mxu0 %v1086
    %1129 = vmatprep.subr.mxu0 0.0
    %1130 = vmatpush1.xpose.msra.mxu0 %v1089
    %1131 = vmatprep.subr.mxu0 0.0
    %1132 = vmatpush1.xpose.msra.mxu0 %v1092
    %1133 = vmatprep.subr.mxu0 0.0
    %1134 = vmatpush1.xpose.msra.mxu0 %v1095
    %1135 = vmatprep.subr.mxu0 0.0
    %1136 = vmatpush1.xpose.msra.mxu0 %v1098
    %1137 = vmatprep.subr.mxu0 0.0
    %1138 = vmatpush1.xpose.msra.mxu0 %v1101
    %1139 = vmatprep.subr.mxu0 0.0
    %1140 = vmatpush1.xpose.msra.mxu0 %v1104
    %1141 = vmatprep.subr.mxu0 0.0
    %1142 = vmatpush1.xpose.msra.mxu0 %v1107
    %1143 = vmatprep.subr.mxu0 0.0
    %1144 = vmatpush1.xpose.msra.mxu0 %v1110
    %1145 = vmatprep.subr.mxu0 0.0
    %1146 = vmatpush1.xpose.msra.mxu0 %v1113
    %1147 = vmatprep.subr.mxu0 0.0
    %1148 = vmatpush1.xpose.msra.mxu0 0.0
    %1149 = vmatprep.subr.mxu0 0.0
    %1150 = vmatpush1.xpose.msra.mxu0 0.0
    %1151 = vmatprep.subr.mxu0 0.0
    %1152 = vmatpush1.xpose.msra.mxu0 0.0
    %1153 = vmatprep.subr.mxu0 0.0
    %1154 = vmatpush1.xpose.msra.mxu0 0.0
    %1155 = vmatprep.subr.mxu0 0.0
    %1156 = vmatpush1.xpose.msra.mxu0 0.0
    %1157 = vmatprep.subr.mxu0 0.0
    %1158 = vmatpush1.xpose.msra.mxu0 0.0
    %1159 = vmatprep.subr.mxu0 0.0
    %1160 = vmatpush1.xpose.msra.mxu0 0.0
    %1161 = vmatprep.subr.mxu0 0.0
    %1162 = vmatpush1.xpose.msra.mxu0 0.0
    %1163 = vmatprep.subr.mxu0 0.0
    %1164 = vmatpush1.xpose.msra.mxu0 0.0
    %1165 = vmatprep.subr.mxu0 0.0
    %1166 = vmatpush1.xpose.msra.mxu0 0.0
    %1167 = vmatprep.subr.mxu0 0.0
    %1168 = vmatpush1.xpose.msra.mxu0 0.0
    %1169 = vmatprep.subr.mxu0 0.0
    %1170 = vmatpush1.xpose.msra.mxu0 0.0
    %1171 = vmatprep.subr.mxu0 0.0
    %1172 = vmatpush1.xpose.msra.mxu0 0.0
    %1173 = vmatprep.subr.mxu0 0.0
    %1174 = vmatpush1.xpose.msra.mxu0 0.0
    %1175 = vmatprep.subr.mxu0 0.0
    %1176 = vmatpush1.xpose.msra.mxu0 0.0
    %1177 = vmatprep.subr.mxu0 0.0
    %1178 = vmatpush1.xpose.msra.mxu0 0.0
    %1179 = vmatprep.mubr.f32.mxu0 0.0
    %1180 = vmatmul.mubr.f32.gmra.mrb[0].mxu0 %v1020
    %v1181 = vpop.f32.mrb[0].mxu0
    %v1182 = vadd.f32 0.0, %v1181
    %v1183 = vpop.f32.mrb[0].mxu0
    %1184 = vmatprep.mubr.f32.mxu0 0.0
    %1185 = vmatmul.mubr.f32.gmra.mrb[0].mxu0 %v1023
    %v1186 = vpop.f32.mrb[0].mxu0
    %v1187 = vadd.f32 0.0, %v1186
    %v1188 = vpop.f32.mrb[0].mxu0
    %1189 = vmatprep.mubr.f32.mxu0 0.0
    %1190 = vmatmul.mubr.f32.gmra.mrb[0].mxu0 %v1026
    %v1191 = vpop.f32.mrb[0].mxu0
    %v1192 = vadd.f32 0.0, %v1191
    %v1193 = vpop.f32.mrb[0].mxu0
    %1194 = vmatprep.mubr.f32.mxu0 0.0
    %1195 = vmatmul.mubr.f32.gmra.mrb[0].mxu0 %v1029
    %v1196 = vpop.f32.mrb[0].mxu0
    %v1197 = vadd.f32 0.0, %v1196
    %v1198 = vpop.f32.mrb[0].mxu0
    %1199 = vmatprep.mubr.f32.mxu0 0.0
    %1200 = vmatmul.mubr.f32.gmra.mrb[0].mxu0 %v1032
    %v1201 = vpop.f32.mrb[0].mxu0
    %v1202 = vadd.f32 0.0, %v1201
    %v1203 = vpop.f32.mrb[0].mxu0
    %1204 = vmatprep.mubr.f32.mxu0 0.0
    %1205 = vmatmul.mubr.f32.gmra.mrb[0].mxu0 %v1035
    %v1206 = vpop.f32.mrb[0].mxu0
    %v1207 = vadd.f32 0.0, %v1206
    %v1208 = vpop.f32.mrb[0].mxu0
    %1209 = vmatprep.mubr.f32.mxu0 0.0
    %1210 = vmatmul.mubr.f32.gmra.mrb[0].mxu0 %v1038
    %v1211 = vpop.f32.mrb[0].mxu0
    %v1212 = vadd.f32 0.0, %v1211
    %v1213 = vpop.f32.mrb[0].mxu0
    %1214 = vmatprep.mubr.f32.mxu0 0.0
    %1215 = vmatmul.mubr.f32.gmra.mrb[0].mxu0 %v1041
    %v1216 = vpop.f32.mrb[0].mxu0
    %v1217 = vadd.f32 0.0, %v1216
    %v1218 = vpop.f32.mrb[0].mxu0
    %1219 = vmatprep.mubr.f32.mxu0 0.0
    %1220 = vmatmul.mubr.f32.gmra.mrb[0].mxu0 %v1044
    %v1221 = vpop.f32.mrb[0].mxu0
    %v1222 = vadd.f32 0.0, %v1221
    %v1223 = vpop.f32.mrb[0].mxu0
    %1224 = vmatprep.mubr.f32.mxu0 0.0
    %1225 = vmatmul.mubr.f32.gmra.mrb[0].mxu0 %v1047
    %v1226 = vpop.f32.mrb[0].mxu0
    %v1227 = vadd.f32 0.0, %v1226
    %v1228 = vpop.f32.mrb[0].mxu0
    %1229 = vmatprep.mubr.f32.mxu0 0.0
    %1230 = vmatmul.mubr.f32.gmra.mrb[0].mxu0 %v1050
    %v1231 = vpop.f32.mrb[0].mxu0
    %v1232 = vadd.f32 0.0, %v1231
    %v1233 = vpop.f32.mrb[0].mxu0
    %1234 = vmatprep.mubr.f32.mxu0 0.0
    %1235 = vmatmul.mubr.f32.gmra.mrb[0].mxu0 %v1053
    %v1236 = vpop.f32.mrb[0].mxu0
    %v1237 = vadd.f32 0.0, %v1236
    %v1238 = vpop.f32.mrb[0].mxu0
    %1239 = vmatprep.mubr.f32.mxu0 0.0
    %1240 = vmatmul.mubr.f32.gmra.mrb[0].mxu0 %v1056
    %v1241 = vpop.f32.mrb[0].mxu0
    %v1242 = vadd.f32 0.0, %v1241
    %v1243 = vpop.f32.mrb[0].mxu0
    %1244 = vmatprep.mubr.f32.mxu0 0.0
    %1245 = vmatmul.mubr.f32.gmra.mrb[0].mxu0 %v1059
    %v1246 = vpop.f32.mrb[0].mxu0
    %v1247 = vadd.f32 0.0, %v1246
    %v1248 = vpop.f32.mrb[0].mxu0
    %1249 = vmatprep.mubr.f32.mxu0 0.0
    %1250 = vmatmul.mubr.f32.gmra.mrb[0].mxu0 %v1062
    %v1251 = vpop.f32.mrb[0].mxu0
    %v1252 = vadd.f32 0.0, %v1251
    %v1253 = vpop.f32.mrb[0].mxu0
    %1254 = vmatprep.mubr.f32.mxu0 0.0
    %1255 = vmatmul.mubr.f32.gmra.mrb[0].mxu0 %v1065
    %v1256 = vpop.f32.mrb[0].mxu0
    %v1257 = vadd.f32 0.0, %v1256
    %v1258 = vpop.f32.mrb[0].mxu0
    %1259 = vdwg.mxu0
    %v1260 = vmul.f32 %v1003, %v1003
    %v1261 = vmul.f32 %v1004, %v1004
    %v1262 = vmul.f32 %v1005, %v1005
    %v1263 = vmul.f32 %v1006, %v1006
    %v1264 = vmul.f32 %v1007, %v1007
    %v1265 = vmul.f32 %v1008, %v1008
    %v1266 = vmul.f32 %v1009, %v1009
    %v1267 = vmul.f32 %v1010, %v1010
    %v1268 = vmul.f32 %v1011, %v1011
    %v1269 = vmul.f32 %v1012, %v1012
    %v1270 = vmul.f32 %v1013, %v1013
    %v1271 = vmul.f32 %v1014, %v1014
    %v1272 = vmul.f32 %v1015, %v1015
    %v1273 = vmul.f32 %v1016, %v1016
    %v1274 = vmul.f32 %v1017, %v1017
    %v1275 = vmul.f32 %v1018, %v1018
    %v1276 = vsel %vm49, %v1260, 0.0
    %1277 = vadd.xlane.f32.xlu0 %v1276
    %v1278 = vpop.xlane.xlu0 %1277
    %v1279 = vsel %vm49, %v1261, 0.0
    %1280 = vadd.xlane.f32.xlu0 %v1279
    %v1281 = vpop.xlane.xlu0 %1280
    %v1282 = vsel %vm49, %v1262, 0.0
    %1283 = vadd.xlane.f32.xlu0 %v1282
    %v1284 = vpop.xlane.xlu0 %1283
    %v1285 = vsel %vm49, %v1263, 0.0
    %1286 = vadd.xlane.f32.xlu0 %v1285
    %v1287 = vpop.xlane.xlu0 %1286
    %v1288 = vsel %vm49, %v1264, 0.0
    %1289 = vadd.xlane.f32.xlu0 %v1288
    %v1290 = vpop.xlane.xlu0 %1289
    %v1291 = vsel %vm49, %v1265, 0.0
    %1292 = vadd.xlane.f32.xlu0 %v1291
    %v1293 = vpop.xlane.xlu0 %1292
    %v1294 = vsel %vm49, %v1266, 0.0
    %1295 = vadd.xlane.f32.xlu0 %v1294
    %v1296 = vpop.xlane.xlu0 %1295
    %v1297 = vsel %vm49, %v1267, 0.0
    %1298 = vadd.xlane.f32.xlu0 %v1297
    %v1299 = vpop.xlane.xlu0 %1298
    %v1300 = vsel %vm49, %v1268, 0.0
    %1301 = vadd.xlane.f32.xlu0 %v1300
    %v1302 = vpop.xlane.xlu0 %1301
    %v1303 = vsel %vm49, %v1269, 0.0
    %1304 = vadd.xlane.f32.xlu0 %v1303
    %v1305 = vpop.xlane.xlu0 %1304
    %v1306 = vsel %vm49, %v1270, 0.0
    %1307 = vadd.xlane.f32.xlu0 %v1306
    %v1308 = vpop.xlane.xlu0 %1307
    %v1309 = vsel %vm49, %v1271, 0.0
    %1310 = vadd.xlane.f32.xlu0 %v1309
    %v1311 = vpop.xlane.xlu0 %1310
    %v1312 = vsel %vm49, %v1272, 0.0
    %1313 = vadd.xlane.f32.xlu0 %v1312
    %v1314 = vpop.xlane.xlu0 %1313
    %v1315 = vsel %vm49, %v1273, 0.0
    %1316 = vadd.xlane.f32.xlu0 %v1315
    %v1317 = vpop.xlane.xlu0 %1316
    %v1318 = vsel %vm49, %v1274, 0.0
    %1319 = vadd.xlane.f32.xlu0 %v1318
    %v1320 = vpop.xlane.xlu0 %1319
    %v1321 = vsel %vm49, %v1275, 0.0
    %1322 = vadd.xlane.f32.xlu0 %v1321
    %v1323 = vpop.xlane.xlu0 %1322
    %v1324 = vmul.f32 %v1182, 2.0
    %v1325 = vmul.f32 %v1187, 2.0
    %v1326 = vmul.f32 %v1192, 2.0
    %v1327 = vmul.f32 %v1197, 2.0
    %v1328 = vmul.f32 %v1202, 2.0
    %v1329 = vmul.f32 %v1207, 2.0
    %v1330 = vmul.f32 %v1212, 2.0
    %v1331 = vmul.f32 %v1217, 2.0
    %v1332 = vmul.f32 %v1222, 2.0
    %v1333 = vmul.f32 %v1227, 2.0
    %v1334 = vmul.f32 %v1232, 2.0
    %v1335 = vmul.f32 %v1237, 2.0
    %v1336 = vmul.f32 %v1242, 2.0
    %v1337 = vmul.f32 %v1247, 2.0
    %v1338 = vmul.f32 %v1252, 2.0
    %v1339 = vmul.f32 %v1257, 2.0
    %v1340 = vsub.f32 %v1278, %v1324
    %v1341 = vsub.f32 %v1281, %v1325
    %v1342 = vsub.f32 %v1284, %v1326
    %v1343 = vsub.f32 %v1287, %v1327
    %v1344 = vsub.f32 %v1290, %v1328
    %v1345 = vsub.f32 %v1293, %v1329
    %v1346 = vsub.f32 %v1296, %v1330
    %v1347 = vsub.f32 %v1299, %v1331
    %v1348 = vsub.f32 %v1302, %v1332
    %v1349 = vsub.f32 %v1305, %v1333
    %v1350 = vsub.f32 %v1308, %v1334
    %v1351 = vsub.f32 %v1311, %v1335
    %v1352 = vsub.f32 %v1314, %v1336
    %v1353 = vsub.f32 %v1317, %v1337
    %v1354 = vsub.f32 %v1320, %v1338
    %v1355 = vsub.f32 %v1323, %v1339
    %v1356 = vlaneseq
    %v1357 = vshrl.u32 %v1356, 7
    %v1358 = vsub.s32 0, %v1357
    %v1359 = vrot.slane %v998, %v1358
    %v1360 = vadd.f32 %v1340, %v1359
    %v1361 = vadd.f32 %v1341, %v1359
    %v1362 = vadd.f32 %v1342, %v1359
    %v1363 = vadd.f32 %v1343, %v1359
    %v1364 = vadd.f32 %v1344, %v1359
    %v1365 = vadd.f32 %v1345, %v1359
    %v1366 = vadd.f32 %v1346, %v1359
    %v1367 = vadd.f32 %v1347, %v1359
    %v1368 = vadd.f32 %v1348, %v1359
    %v1369 = vadd.f32 %v1349, %v1359
    %v1370 = vadd.f32 %v1350, %v1359
    %v1371 = vadd.f32 %v1351, %v1359
    %v1372 = vadd.f32 %v1352, %v1359
    %v1373 = vadd.f32 %v1353, %v1359
    %v1374 = vadd.f32 %v1354, %v1359
    %v1375 = vadd.f32 %v1355, %v1359
    %v1376 = vsel %vm561, 3e+38, %v1360
    %v1377 = vsel %vm562, 3e+38, %v1361
    %v1378 = vsel %vm563, 3e+38, %v1362
    %v1379 = vsel %vm564, 3e+38, %v1363
    %v1380 = vsel %vm565, 3e+38, %v1364
    %v1381 = vsel %vm566, 3e+38, %v1365
    %v1382 = vsel %vm567, 3e+38, %v1366
    %v1383 = vsel %vm568, 3e+38, %v1367
    %v1384 = vsel %vm569, 3e+38, %v1368
    %v1385 = vsel %vm570, 3e+38, %v1369
    %v1386 = vsel %vm571, 3e+38, %v1370
    %v1387 = vsel %vm572, 3e+38, %v1371
    %v1388 = vsel %vm573, 3e+38, %v1372
    %v1389 = vsel %vm574, 3e+38, %v1373
    %v1390 = vsel %vm575, 3e+38, %v1374
    %v1391 = vsel %vm576, 3e+38, %v1375
    %v1392 = vmin.f32 %v1379, 3e+38
    %v1393 = vmin.f32 %v1376, %v1380
    %v1394 = vmin.f32 %v1377, %v1381
    %v1395 = vmin.f32 %v1378, %v1382
    %v1396 = vmin.f32 %v1392, %v1383
    %v1397 = vmin.f32 %v1393, %v1384
    %v1398 = vmin.f32 %v1394, %v1385
    %v1399 = vmin.f32 %v1395, %v1386
    %v1400 = vmin.f32 %v1396, %v1387
    %v1401 = vmin.f32 %v1397, %v1388
    %v1402 = vmin.f32 %v1398, %v1389
    %v1403 = vmin.f32 %v1399, %v1390
    %v1404 = vmin.f32 %v1400, %v1391
    %v1405 = vmin.f32 %v1404, %v1401
    %v1406 = vmin.f32 %v1402, %v1403
    %v1407 = vmin.f32 %v1405, %v1406
    %v1408 = vrot.slane %v1407, 4
    %v1409 = vmin.f32 %v1407, %v1408
    %v1410 = vrot.slane %v1409, 2
    %v1411 = vmin.f32 %v1409, %v1410
    %v1412 = vrot.slane %v1411, 1
    %v1413 = vmin.f32 %v1411, %v1412
    %vm1414 = vcmp.eq.f32.partialorder %v1376, %v1413
    %vm1415 = vcmp.eq.f32.partialorder %v1377, %v1413
    %vm1416 = vcmp.eq.f32.partialorder %v1378, %v1413
    %vm1417 = vcmp.eq.f32.partialorder %v1379, %v1413
    %vm1418 = vcmp.eq.f32.partialorder %v1380, %v1413
    %vm1419 = vcmp.eq.f32.partialorder %v1381, %v1413
    %vm1420 = vcmp.eq.f32.partialorder %v1382, %v1413
    %vm1421 = vcmp.eq.f32.partialorder %v1383, %v1413
    %vm1422 = vcmp.eq.f32.partialorder %v1384, %v1413
    %vm1423 = vcmp.eq.f32.partialorder %v1385, %v1413
    %vm1424 = vcmp.eq.f32.partialorder %v1386, %v1413
    %vm1425 = vcmp.eq.f32.partialorder %v1387, %v1413
    %vm1426 = vcmp.eq.f32.partialorder %v1388, %v1413
    %vm1427 = vcmp.eq.f32.partialorder %v1389, %v1413
    %vm1428 = vcmp.eq.f32.partialorder %v1390, %v1413
    %vm1429 = vcmp.eq.f32.partialorder %v1391, %v1413
    %v1430 = vsel %vm1414, 3e+38, %v1376
    %v1431 = vsel %vm1415, 3e+38, %v1377
    %v1432 = vsel %vm1416, 3e+38, %v1378
    %v1433 = vsel %vm1417, 3e+38, %v1379
    %v1434 = vsel %vm1418, 3e+38, %v1380
    %v1435 = vsel %vm1419, 3e+38, %v1381
    %v1436 = vsel %vm1420, 3e+38, %v1382
    %v1437 = vsel %vm1421, 3e+38, %v1383
    %v1438 = vsel %vm1422, 3e+38, %v1384
    %v1439 = vsel %vm1423, 3e+38, %v1385
    %v1440 = vsel %vm1424, 3e+38, %v1386
    %v1441 = vsel %vm1425, 3e+38, %v1387
    %v1442 = vsel %vm1426, 3e+38, %v1388
    %v1443 = vsel %vm1427, 3e+38, %v1389
    %v1444 = vsel %vm1428, 3e+38, %v1390
    %v1445 = vsel %vm1429, 3e+38, %v1391
    %v1446 = vmin.f32 %v1433, 3e+38
    %v1447 = vmin.f32 %v1430, %v1434
    %v1448 = vmin.f32 %v1431, %v1435
    %v1449 = vmin.f32 %v1432, %v1436
    %v1450 = vmin.f32 %v1446, %v1437
    %v1451 = vmin.f32 %v1447, %v1438
    %v1452 = vmin.f32 %v1448, %v1439
    %v1453 = vmin.f32 %v1449, %v1440
    %v1454 = vmin.f32 %v1450, %v1441
    %v1455 = vmin.f32 %v1451, %v1442
    %v1456 = vmin.f32 %v1452, %v1443
    %v1457 = vmin.f32 %v1453, %v1444
    %v1458 = vmin.f32 %v1454, %v1445
    %v1459 = vmin.f32 %v1458, %v1455
    %v1460 = vmin.f32 %v1456, %v1457
    %v1461 = vmin.f32 %v1459, %v1460
    %v1462 = vrot.slane %v1461, 4
    %v1463 = vmin.f32 %v1461, %v1462
    %v1464 = vrot.slane %v1463, 2
    %v1465 = vmin.f32 %v1463, %v1464
    %v1466 = vrot.slane %v1465, 1
    %v1467 = vmin.f32 %v1465, %v1466
    %vm1468 = vcmp.eq.f32.partialorder %v1430, %v1467
    %vm1469 = vcmp.eq.f32.partialorder %v1431, %v1467
    %vm1470 = vcmp.eq.f32.partialorder %v1432, %v1467
    %vm1471 = vcmp.eq.f32.partialorder %v1433, %v1467
    %vm1472 = vcmp.eq.f32.partialorder %v1434, %v1467
    %vm1473 = vcmp.eq.f32.partialorder %v1435, %v1467
    %vm1474 = vcmp.eq.f32.partialorder %v1436, %v1467
    %vm1475 = vcmp.eq.f32.partialorder %v1437, %v1467
    %vm1476 = vcmp.eq.f32.partialorder %v1438, %v1467
    %vm1477 = vcmp.eq.f32.partialorder %v1439, %v1467
    %vm1478 = vcmp.eq.f32.partialorder %v1440, %v1467
    %vm1479 = vcmp.eq.f32.partialorder %v1441, %v1467
    %vm1480 = vcmp.eq.f32.partialorder %v1442, %v1467
    %vm1481 = vcmp.eq.f32.partialorder %v1443, %v1467
    %vm1482 = vcmp.eq.f32.partialorder %v1444, %v1467
    %vm1483 = vcmp.eq.f32.partialorder %v1445, %v1467
    %v1484 = vsel %vm1468, 3e+38, %v1430
    %v1485 = vsel %vm1469, 3e+38, %v1431
    %v1486 = vsel %vm1470, 3e+38, %v1432
    %v1487 = vsel %vm1471, 3e+38, %v1433
    %v1488 = vsel %vm1472, 3e+38, %v1434
    %v1489 = vsel %vm1473, 3e+38, %v1435
    %v1490 = vsel %vm1474, 3e+38, %v1436
    %v1491 = vsel %vm1475, 3e+38, %v1437
    %v1492 = vsel %vm1476, 3e+38, %v1438
    %v1493 = vsel %vm1477, 3e+38, %v1439
    %v1494 = vsel %vm1478, 3e+38, %v1440
    %v1495 = vsel %vm1479, 3e+38, %v1441
    %v1496 = vsel %vm1480, 3e+38, %v1442
    %v1497 = vsel %vm1481, 3e+38, %v1443
    %v1498 = vsel %vm1482, 3e+38, %v1444
    %v1499 = vsel %vm1483, 3e+38, %v1445
    %v1500 = vmin.f32 %v1487, 3e+38
    %v1501 = vmin.f32 %v1484, %v1488
    %v1502 = vmin.f32 %v1485, %v1489
    %v1503 = vmin.f32 %v1486, %v1490
    %v1504 = vmin.f32 %v1500, %v1491
    %v1505 = vmin.f32 %v1501, %v1492
    %v1506 = vmin.f32 %v1502, %v1493
    %v1507 = vmin.f32 %v1503, %v1494
    %v1508 = vmin.f32 %v1504, %v1495
    %v1509 = vmin.f32 %v1505, %v1496
    %v1510 = vmin.f32 %v1506, %v1497
    %v1511 = vmin.f32 %v1507, %v1498
    %v1512 = vmin.f32 %v1508, %v1499
    %v1513 = vmin.f32 %v1512, %v1509
    %v1514 = vmin.f32 %v1510, %v1511
    %v1515 = vmin.f32 %v1513, %v1514
    %v1516 = vrot.slane %v1515, 4
    %v1517 = vmin.f32 %v1515, %v1516
    %v1518 = vrot.slane %v1517, 2
    %v1519 = vmin.f32 %v1517, %v1518
    %v1520 = vrot.slane %v1519, 1
    %v1521 = vmin.f32 %v1519, %v1520
    %vm1522 = vcmp.eq.f32.partialorder %v1484, %v1521
    %vm1523 = vcmp.eq.f32.partialorder %v1485, %v1521
    %vm1524 = vcmp.eq.f32.partialorder %v1486, %v1521
    %vm1525 = vcmp.eq.f32.partialorder %v1487, %v1521
    %vm1526 = vcmp.eq.f32.partialorder %v1488, %v1521
    %vm1527 = vcmp.eq.f32.partialorder %v1489, %v1521
    %vm1528 = vcmp.eq.f32.partialorder %v1490, %v1521
    %vm1529 = vcmp.eq.f32.partialorder %v1491, %v1521
    %vm1530 = vcmp.eq.f32.partialorder %v1492, %v1521
    %vm1531 = vcmp.eq.f32.partialorder %v1493, %v1521
    %vm1532 = vcmp.eq.f32.partialorder %v1494, %v1521
    %vm1533 = vcmp.eq.f32.partialorder %v1495, %v1521
    %vm1534 = vcmp.eq.f32.partialorder %v1496, %v1521
    %vm1535 = vcmp.eq.f32.partialorder %v1497, %v1521
    %vm1536 = vcmp.eq.f32.partialorder %v1498, %v1521
    %vm1537 = vcmp.eq.f32.partialorder %v1499, %v1521
    %v1538 = vsel %vm1522, 3e+38, %v1484
    %v1539 = vsel %vm1523, 3e+38, %v1485
    %v1540 = vsel %vm1524, 3e+38, %v1486
    %v1541 = vsel %vm1525, 3e+38, %v1487
    %v1542 = vsel %vm1526, 3e+38, %v1488
    %v1543 = vsel %vm1527, 3e+38, %v1489
    %v1544 = vsel %vm1528, 3e+38, %v1490
    %v1545 = vsel %vm1529, 3e+38, %v1491
    %v1546 = vsel %vm1530, 3e+38, %v1492
    %v1547 = vsel %vm1531, 3e+38, %v1493
    %v1548 = vsel %vm1532, 3e+38, %v1494
    %v1549 = vsel %vm1533, 3e+38, %v1495
    %v1550 = vsel %vm1534, 3e+38, %v1496
    %v1551 = vsel %vm1535, 3e+38, %v1497
    %v1552 = vsel %vm1536, 3e+38, %v1498
    %v1553 = vsel %vm1537, 3e+38, %v1499
    %v1554 = vmin.f32 %v1541, 3e+38
    %v1555 = vmin.f32 %v1538, %v1542
    %v1556 = vmin.f32 %v1539, %v1543
    %v1557 = vmin.f32 %v1540, %v1544
    %v1558 = vmin.f32 %v1554, %v1545
    %v1559 = vmin.f32 %v1555, %v1546
    %v1560 = vmin.f32 %v1556, %v1547
    %v1561 = vmin.f32 %v1557, %v1548
    %v1562 = vmin.f32 %v1558, %v1549
    %v1563 = vmin.f32 %v1559, %v1550
    %v1564 = vmin.f32 %v1560, %v1551
    %v1565 = vmin.f32 %v1561, %v1552
    %v1566 = vmin.f32 %v1562, %v1553
    %v1567 = vmin.f32 %v1566, %v1563
    %v1568 = vmin.f32 %v1564, %v1565
    %v1569 = vmin.f32 %v1567, %v1568
    %v1570 = vrot.slane %v1569, 4
    %v1571 = vmin.f32 %v1569, %v1570
    %v1572 = vrot.slane %v1571, 2
    %v1573 = vmin.f32 %v1571, %v1572
    %v1574 = vrot.slane %v1573, 1
    %v1575 = vmin.f32 %v1573, %v1574
    %vm1576 = vcmp.eq.f32.partialorder %v1538, %v1575
    %vm1577 = vcmp.eq.f32.partialorder %v1539, %v1575
    %vm1578 = vcmp.eq.f32.partialorder %v1540, %v1575
    %vm1579 = vcmp.eq.f32.partialorder %v1541, %v1575
    %vm1580 = vcmp.eq.f32.partialorder %v1542, %v1575
    %vm1581 = vcmp.eq.f32.partialorder %v1543, %v1575
    %vm1582 = vcmp.eq.f32.partialorder %v1544, %v1575
    %vm1583 = vcmp.eq.f32.partialorder %v1545, %v1575
    %vm1584 = vcmp.eq.f32.partialorder %v1546, %v1575
    %vm1585 = vcmp.eq.f32.partialorder %v1547, %v1575
    %vm1586 = vcmp.eq.f32.partialorder %v1548, %v1575
    %vm1587 = vcmp.eq.f32.partialorder %v1549, %v1575
    %vm1588 = vcmp.eq.f32.partialorder %v1550, %v1575
    %vm1589 = vcmp.eq.f32.partialorder %v1551, %v1575
    %vm1590 = vcmp.eq.f32.partialorder %v1552, %v1575
    %vm1591 = vcmp.eq.f32.partialorder %v1553, %v1575
    %v1592 = vsel %vm1576, 3e+38, %v1538
    %v1593 = vsel %vm1577, 3e+38, %v1539
    %v1594 = vsel %vm1578, 3e+38, %v1540
    %v1595 = vsel %vm1579, 3e+38, %v1541
    %v1596 = vsel %vm1580, 3e+38, %v1542
    %v1597 = vsel %vm1581, 3e+38, %v1543
    %v1598 = vsel %vm1582, 3e+38, %v1544
    %v1599 = vsel %vm1583, 3e+38, %v1545
    %v1600 = vsel %vm1584, 3e+38, %v1546
    %v1601 = vsel %vm1585, 3e+38, %v1547
    %v1602 = vsel %vm1586, 3e+38, %v1548
    %v1603 = vsel %vm1587, 3e+38, %v1549
    %v1604 = vsel %vm1588, 3e+38, %v1550
    %v1605 = vsel %vm1589, 3e+38, %v1551
    %v1606 = vsel %vm1590, 3e+38, %v1552
    %v1607 = vsel %vm1591, 3e+38, %v1553
    %v1608 = vmin.f32 %v1595, 3e+38
    %v1609 = vmin.f32 %v1592, %v1596
    %v1610 = vmin.f32 %v1593, %v1597
    %v1611 = vmin.f32 %v1594, %v1598
    %v1612 = vmin.f32 %v1608, %v1599
    %v1613 = vmin.f32 %v1609, %v1600
    %v1614 = vmin.f32 %v1610, %v1601
    %v1615 = vmin.f32 %v1611, %v1602
    %v1616 = vmin.f32 %v1612, %v1603
    %v1617 = vmin.f32 %v1613, %v1604
    %v1618 = vmin.f32 %v1614, %v1605
    %v1619 = vmin.f32 %v1615, %v1606
    %v1620 = vmin.f32 %v1616, %v1607
    %v1621 = vmin.f32 %v1620, %v1617
    %v1622 = vmin.f32 %v1618, %v1619
    %v1623 = vmin.f32 %v1621, %v1622
    %v1624 = vrot.slane %v1623, 4
    %v1625 = vmin.f32 %v1623, %v1624
    %v1626 = vrot.slane %v1625, 2
    %v1627 = vmin.f32 %v1625, %v1626
    %v1628 = vrot.slane %v1627, 1
    %v1629 = vmin.f32 %v1627, %v1628
    %v1630 = vsel %vm831, %v1413, %v1467
    %v1631 = vsel %vm833, %v1630, %v1521
    %v1632 = vsel %vm835, %v1631, %v1575
    %v1633 = vsel %vm837, %v1632, %v1629
    %v1634 = vsel %vm839, %v1633, 3e+38
    %v1635 = vsel %vm839, %v1634, 0.0
    %v1636 = vrot.slane %v1635, 4
    %v1637 = vadd.f32 %v1635, %v1636
    %v1638 = vrot.slane %v1637, 2
    %v1639 = vadd.f32 %v1637, %v1638
    %v1640 = vrot.slane %v1639, 1
    %v1641 = vadd.f32 %v1639, %v1640
    %v1642 = vmul.f32 %v1641, 0.2
    %s1643 = scalar_lea.vmem [#allocation2], 1
    %1644 = vst [vmem:[%s1643] sm:$0x1] %v1642
    // Predicated region
    $region10: #{tpu_custom_call.1} parent=1 // pred_check
      _
    $region11: #{tpu_custom_call.1} parent=1 // pred_check_branch
      %1646 = sbr.rel (0) target = $region13
    $region12: #{tpu_custom_call.1} parent=1 // pred_region
      %s1648 = ssub.s32 32, 32
      %1649 = vsyncadd [#allocation3], %s1648
      %s1650 = sshll.u32 [#allocation2], 4
      %s1651 = int_to_ptr.vmem [resolvable:$true] %s1650
      %1656 = dma.vmem_to_hbm [thread:$0]  %s1651, 32, %s2, [#allocation3], 16, 16, 1
    $region13: #{tpu_custom_call.1} parent=1 // pred_fallthru
      _
    // Predicated region
    $region14: #{tpu_custom_call.1} parent=1 // pred_check
      _
    $region15: #{tpu_custom_call.1} parent=1 // pred_check_branch
      %1658 = sbr.rel (0) target = $region17
    $region16: #{tpu_custom_call.1} parent=1 // pred_region
      %1659 = dma.done [#allocation3], 32
    $region17: #{tpu_custom_call.1} parent=1 // pred_fallthru
      _
    %1660 = vsyncpa [#allocation3], 1

</llo_original>
